<compile_context>
chip_gen: v6e
topology: v6e:2x2x1
jax: 0.10.0
libtpu: 0.0.40
codegen_flags: <defaults>
</compile_context>

<pallas_src>
import math
import jax
import jax.numpy as jnp
from jax.experimental import pallas as pl
from jax.experimental.pallas import tpu as pltpu


def _round_up(x, m):
    return ((x + m - 1) // m) * m


def _choose_tile_m(batch):
    """Pick the per-grid-step batch tile.

    Small batches (<=256): single tile, rounded up to 16 rows (bf16 native
    sublane packing) -- this regime is weight-DMA bound anyway.
    Large batches: choose from {1024, 512, 256, 128}, minimizing zero-padding
    waste first, then preferring larger tiles (amortize per-step overhead),
    while keeping >= 2 grid steps so the batch axis can shard across the two
    TensorCores on v7x.
    """
    if batch <= 256:
        return _round_up(batch, 16)
    best_tile, best_key = None, None
    for t in (1024, 512, 256, 128):
        b_pad = _round_up(batch, t)
        if b_pad // t < 2:           # keep >= 2 grid steps (v7x megacore)
            continue
        key = (b_pad - batch, -t)    # minimize padding, then prefer larger tile
        if best_key is None or key < best_key:
            best_tile, best_key = t, key
    return best_tile if best_tile is not None else 256


def mlp_kernel(x_ref, w1_ref, b1_ref, w2_ref, b2_ref, w3_ref, b3_ref,
               w4_ref, b4_ref, o_ref):
    # 4 chained MXU matmuls: bf16 operands, f32 accumulation, f32 bias adds,
    # re-cast to bf16 between layers, lane-dense (128-wide) f32 output store.
    h = jnp.dot(x_ref[...], w1_ref[...],
                preferred_element_type=jnp.float32) + b1_ref[...]
    h = jnp.dot(h.astype(jnp.bfloat16), w2_ref[...],
                preferred_element_type=jnp.float32) + b2_ref[...]
    h = jnp.dot(h.astype(jnp.bfloat16), w3_ref[...],
                preferred_element_type=jnp.float32) + b3_ref[...]
    o_ref[...] = (jnp.dot(h.astype(jnp.bfloat16), w4_ref[...],
                          preferred_element_type=jnp.float32)
                  + b4_ref[...]).astype(o_ref.dtype)


def _prepare_padded_params(params, k_pad, h_pad, n_pad):
    """Zero-pad weights/biases to MXU-friendly dims; weights -> bf16, biases -> f32."""
    (w1, b1), (w2, b2), (w3, b3), (w4, b4) = params

    def pad_w(w, rows, cols):
        return jnp.pad(w.astype(jnp.bfloat16),
                       ((0, rows - w.shape[0]), (0, cols - w.shape[1])))

    def pad_b(b, cols):
        return jnp.pad(b.astype(jnp.float32), ((0, 0), (0, cols - b.shape[1])))

    return (
        pad_w(w1, k_pad, h_pad), pad_b(b1, h_pad),
        pad_w(w2, h_pad, h_pad), pad_b(b2, h_pad),
        pad_w(w3, h_pad, h_pad), pad_b(b3, h_pad),
        pad_w(w4, h_pad, n_pad), pad_b(b4, n_pad),
    )


def mlp_forward(x, params, image_size, num_classes):
    """x: (B, image_size, image_size) float32. Returns (B, num_classes) float32."""
    B = x.shape[0]
    k_in = image_size * image_size
    hidden = params[0][0].shape[1]

    k_pad = _round_up(k_in, 128)                   # 784 -> 896
    h_pad = _round_up(hidden, 128)                 # 500 -> 512
    n_pad = _round_up(max(num_classes, 128), 128)  # 10 -> 128 (lane-dense store)

    tile_m = _choose_tile_m(B)
    b_pad = _round_up(B, tile_m)

    # Flatten exactly like torch.reshape(x, (-1, image_size*image_size)).
    # Cast to bf16 BEFORE padding so the pre-kernel pass moves half the bytes.
    x2d = jnp.reshape(x, (B, k_in)).astype(jnp.bfloat16)
    x2d = jnp.pad(x2d, ((0, b_pad - B), (0, k_pad - k_in)))

    padded = _prepare_padded_params(params, k_pad, h_pad, n_pad)

    grid = (b_pad // tile_m,)
    const = lambda i: (0, 0)  # weights/biases: same block every step -> VMEM-resident

    flops = 2 * b_pad * (k_pad * h_pad + 2 * h_pad * h_pad + h_pad * n_pad)
    bytes_accessed = (x2d.size * 2 + b_pad * n_pad * 4
                      + sum(int(p.size) * p.dtype.itemsize for p in padded))
    cost = pl.CostEstimate(flops=flops, transcendentals=0,
                           bytes_accessed=bytes_accessed)

    out = pl.pallas_call(
        mlp_kernel,
        out_shape=jax.ShapeDtypeStruct((b_pad, n_pad), jnp.float32),
        grid_spec=pltpu.PrefetchScalarGridSpec(
            num_scalar_prefetch=0,
            grid=grid,
            in_specs=[
                pl.BlockSpec((tile_m, k_pad), lambda i: (i, 0)),  # x tile (pipelined)
                pl.BlockSpec((k_pad, h_pad), const),              # w1
                pl.BlockSpec((1, h_pad), const),                  # b1
                pl.BlockSpec((h_pad, h_pad), const),              # w2
                pl.BlockSpec((1, h_pad), const),                  # b2
                pl.BlockSpec((h_pad, h_pad), const),              # w3
                pl.BlockSpec((1, h_pad), const),                  # b3
                pl.BlockSpec((h_pad, n_pad), const),              # w4
                pl.BlockSpec((1, n_pad), const),                  # b4
            ],
            out_specs=pl.BlockSpec((tile_m, n_pad), lambda i: (i, 0)),
        ),
        compiler_params=pltpu.CompilerParams(
            dimension_semantics=("parallel",),
            vmem_limit_bytes=32 * 1024 * 1024,
        ),
        cost_estimate=cost,
    )(x2d, *padded)

    # Strip batch padding and the lane padding of the final layer.
    return out[:B, :num_classes]


def init_linear(key, in_features, out_features):
    """Mimics nn.Linear default init (uniform(-1/sqrt(fan_in), 1/sqrt(fan_in))).
    Weight returned transposed: (in_features, out_features); bias (1, out)."""
    kw, kb = jax.random.split(key)
    bound = 1.0 / math.sqrt(in_features)
    w = jax.random.uniform(kw, (in_features, out_features), jnp.float32, -bound, bound)
    b = jax.random.uniform(kb, (1, out_features), jnp.float32, -bound, bound)
    return w, b


if __name__ == "__main__":
    # Module hyperparameters (from the PyTorch script), small batch for the demo.
    image_size = 28
    hidden_size = 500
    num_classes = 10
    batch = 8

    key = jax.random.PRNGKey(0)
    kx, k1, k2, k3, k4 = jax.random.split(key, 5)

    params = (
        init_linear(k1, image_size * image_size, hidden_size),  # mlp1
        init_linear(k2, hidden_size, hidden_size),              # mlp2
        init_linear(k3, hidden_size, hidden_size),              # mlp3
        init_linear(k4, hidden_size, num_classes),              # mlp4
    )

    x = jax.random.normal(kx, (batch, image_size, image_size), jnp.float32)

    out = mlp_forward(x, params, image_size, num_classes)
    out = jax.block_until_ready(out)
    assert out.shape == (batch, num_classes)

    # Reference 1: same bf16/f32-acc math in plain JAX (tight check of kernel math).
    h = jnp.reshape(x, (batch, image_size * image_size)).astype(jnp.bfloat16)
    ref_bf16 = None
    for (w, b) in params:
        hf = jnp.dot(h, w.astype(jnp.bfloat16),
                     preferred_element_type=jnp.float32) + b
        ref_bf16 = hf
        h = hf.astype(jnp.bfloat16)
    assert jnp.allclose(out, ref_bf16, atol=2e-2, rtol=2e-2), "mismatch vs bf16 reference"

    # Reference 2: full-f32 semantics of the original module (loose, bf16 tolerance).
    ref_f32 = jnp.reshape(x, (batch, image_size * image_size))
    for (w, b) in params:
        ref_f32 = ref_f32 @ w + b
    assert jnp.allclose(out, ref_f32, atol=5e-2, rtol=5e-2), "mismatch vs f32 reference"

    print("KERNEL_OK")
</pallas_src>

<mosaic_0001>
module attributes {stable_mosaic.version = 11 : i64} {
  func.func @mlp_kernel(%arg0: i32, %arg1: memref<16x896xbf16, #tpu.memory_space<vmem>>, %arg2: memref<896x512xbf16, #tpu.memory_space<vmem>>, %arg3: memref<1x512xf32, #tpu.memory_space<vmem>>, %arg4: memref<512x512xbf16, #tpu.memory_space<vmem>>, %arg5: memref<1x512xf32, #tpu.memory_space<vmem>>, %arg6: memref<512x512xbf16, #tpu.memory_space<vmem>>, %arg7: memref<1x512xf32, #tpu.memory_space<vmem>>, %arg8: memref<512x128xbf16, #tpu.memory_space<vmem>>, %arg9: memref<1x128xf32, #tpu.memory_space<vmem>>, %arg10: memref<16x128xf32, #tpu.memory_space<vmem>>) attributes {dimension_semantics = [#tpu.dimension_semantics<parallel>], iteration_bounds = array<i64: 1>, scalar_prefetch = 0 : i64, scratch_operands = 0 : i64, tpu.core_type = #tpu.core_type<tc>, window_params = [{transform_indices = @transform_0, window_bounds = array<i64: 16, 896>}, {pipeline_mode = #tpu.pipeline_mode<synchronous>, transform_indices = @transform_1, window_bounds = array<i64: 896, 512>}, {pipeline_mode = #tpu.pipeline_mode<synchronous>, transform_indices = @transform_2, window_bounds = array<i64: 1, 512>}, {pipeline_mode = #tpu.pipeline_mode<synchronous>, transform_indices = @transform_3, window_bounds = array<i64: 512, 512>}, {pipeline_mode = #tpu.pipeline_mode<synchronous>, transform_indices = @transform_4, window_bounds = array<i64: 1, 512>}, {pipeline_mode = #tpu.pipeline_mode<synchronous>, transform_indices = @transform_5, window_bounds = array<i64: 512, 512>}, {pipeline_mode = #tpu.pipeline_mode<synchronous>, transform_indices = @transform_6, window_bounds = array<i64: 1, 512>}, {pipeline_mode = #tpu.pipeline_mode<synchronous>, transform_indices = @transform_7, window_bounds = array<i64: 512, 128>}, {pipeline_mode = #tpu.pipeline_mode<synchronous>, transform_indices = @transform_8, window_bounds = array<i64: 1, 128>}, {transform_indices = @transform_9, window_bounds = array<i64: 16, 128>}]} {
    %c0 = arith.constant 0 : index
    %c0_0 = arith.constant 0 : index
    %0 = vector.load %arg1[%c0, %c0_0] : memref<16x896xbf16, #tpu.memory_space<vmem>>, vector<16x896xbf16>
    %c0_1 = arith.constant 0 : index
    %c0_2 = arith.constant 0 : index
    %1 = vector.load %arg2[%c0_1, %c0_2] : memref<896x512xbf16, #tpu.memory_space<vmem>>, vector<896x512xbf16>
    %cst = arith.constant dense<0.000000e+00> : vector<16x512xf32>
    %2 = tpu.matmul %0, %1, %cst {dimension_numbers = #tpu.dot_dimension_numbers<[1], [0], [0], [1], [0, 0, 1, 1], [], []>} : vector<16x896xbf16>, vector<896x512xbf16>, vector<16x512xf32> -> vector<16x512xf32>
    %c0_3 = arith.constant 0 : index
    %c0_4 = arith.constant 0 : index
    %3 = vector.load %arg3[%c0_3, %c0_4] : memref<1x512xf32, #tpu.memory_space<vmem>>, vector<1x512xf32>
    %4 = vector.broadcast %3 : vector<1x512xf32> to vector<16x512xf32>
    %5 = arith.addf %2, %4 : vector<16x512xf32>
    %6 = arith.truncf %5 : vector<16x512xf32> to vector<16x512xbf16>
    %c0_5 = arith.constant 0 : index
    %c0_6 = arith.constant 0 : index
    %7 = vector.load %arg4[%c0_5, %c0_6] : memref<512x512xbf16, #tpu.memory_space<vmem>>, vector<512x512xbf16>
    %cst_7 = arith.constant dense<0.000000e+00> : vector<16x512xf32>
    %8 = tpu.matmul %6, %7, %cst_7 {dimension_numbers = #tpu.dot_dimension_numbers<[1], [0], [0], [1], [0, 0, 1, 1], [], []>} : vector<16x512xbf16>, vector<512x512xbf16>, vector<16x512xf32> -> vector<16x512xf32>
    %c0_8 = arith.constant 0 : index
    %c0_9 = arith.constant 0 : index
    %9 = vector.load %arg5[%c0_8, %c0_9] : memref<1x512xf32, #tpu.memory_space<vmem>>, vector<1x512xf32>
    %10 = vector.broadcast %9 : vector<1x512xf32> to vector<16x512xf32>
    %11 = arith.addf %8, %10 : vector<16x512xf32>
    %12 = arith.truncf %11 : vector<16x512xf32> to vector<16x512xbf16>
    %c0_10 = arith.constant 0 : index
    %c0_11 = arith.constant 0 : index
    %13 = vector.load %arg6[%c0_10, %c0_11] : memref<512x512xbf16, #tpu.memory_space<vmem>>, vector<512x512xbf16>
    %cst_12 = arith.constant dense<0.000000e+00> : vector<16x512xf32>
    %14 = tpu.matmul %12, %13, %cst_12 {dimension_numbers = #tpu.dot_dimension_numbers<[1], [0], [0], [1], [0, 0, 1, 1], [], []>} : vector<16x512xbf16>, vector<512x512xbf16>, vector<16x512xf32> -> vector<16x512xf32>
    %c0_13 = arith.constant 0 : index
    %c0_14 = arith.constant 0 : index
    %15 = vector.load %arg7[%c0_13, %c0_14] : memref<1x512xf32, #tpu.memory_space<vmem>>, vector<1x512xf32>
    %16 = vector.broadcast %15 : vector<1x512xf32> to vector<16x512xf32>
    %17 = arith.addf %14, %16 : vector<16x512xf32>
    %18 = arith.truncf %17 : vector<16x512xf32> to vector<16x512xbf16>
    %c0_15 = arith.constant 0 : index
    %c0_16 = arith.constant 0 : index
    %19 = vector.load %arg8[%c0_15, %c0_16] : memref<512x128xbf16, #tpu.memory_space<vmem>>, vector<512x128xbf16>
    %cst_17 = arith.constant dense<0.000000e+00> : vector<16x128xf32>
    %20 = tpu.matmul %18, %19, %cst_17 {dimension_numbers = #tpu.dot_dimension_numbers<[1], [0], [0], [1], [0, 0, 1, 1], [], []>} : vector<16x512xbf16>, vector<512x128xbf16>, vector<16x128xf32> -> vector<16x128xf32>
    %c0_18 = arith.constant 0 : index
    %c0_19 = arith.constant 0 : index
    %21 = vector.load %arg9[%c0_18, %c0_19] : memref<1x128xf32, #tpu.memory_space<vmem>>, vector<1x128xf32>
    %22 = vector.broadcast %21 : vector<1x128xf32> to vector<16x128xf32>
    %23 = arith.addf %20, %22 : vector<16x128xf32>
    %c0_20 = arith.constant 0 : index
    %c0_21 = arith.constant 0 : index
    %24 = vector.load %arg10[%c0_20, %c0_21] : memref<16x128xf32, #tpu.memory_space<vmem>>, vector<16x128xf32>
    tpu.vector_store %arg10[%c0_20, %c0_21], %23 {strides = array<i32>} : memref<16x128xf32, #tpu.memory_space<vmem>>, vector<16x128xf32>,
    return
  }
  func.func @transform_0(%arg0: i32) -> (i32, i32) {
    %c0_i32 = arith.constant 0 : i32
    %c0_i32_0 = arith.constant 0 : i32
    return %arg0, %c0_i32 : i32, i32
  }
  func.func @transform_1(%arg0: i32) -> (i32, i32) {
    %c0_i32 = arith.constant 0 : i32
    %c0_i32_0 = arith.constant 0 : i32
    %c0_i32_1 = arith.constant 0 : i32
    return %c0_i32, %c0_i32_0 : i32, i32
  }
  func.func @transform_2(%arg0: i32) -> (i32, i32) {
    %c0_i32 = arith.constant 0 : i32
    %c0_i32_0 = arith.constant 0 : i32
    %c0_i32_1 = arith.constant 0 : i32
    return %c0_i32, %c0_i32_0 : i32, i32
  }
  func.func @transform_3(%arg0: i32) -> (i32, i32) {
    %c0_i32 = arith.constant 0 : i32
    %c0_i32_0 = arith.constant 0 : i32
    %c0_i32_1 = arith.constant 0 : i32
    return %c0_i32, %c0_i32_0 : i32, i32
  }
  func.func @transform_4(%arg0: i32) -> (i32, i32) {
    %c0_i32 = arith.constant 0 : i32
    %c0_i32_0 = arith.constant 0 : i32
    %c0_i32_1 = arith.constant 0 : i32
    return %c0_i32, %c0_i32_0 : i32, i32
  }
  func.func @transform_5(%arg0: i32) -> (i32, i32) {
    %c0_i32 = arith.constant 0 : i32
    %c0_i32_0 = arith.constant 0 : i32
    %c0_i32_1 = arith.constant 0 : i32
    return %c0_i32, %c0_i32_0 : i32, i32
  }
  func.func @transform_6(%arg0: i32) -> (i32, i32) {
    %c0_i32 = arith.constant 0 : i32
    %c0_i32_0 = arith.constant 0 : i32
    %c0_i32_1 = arith.constant 0 : i32
    return %c0_i32, %c0_i32_0 : i32, i32
  }
  func.func @transform_7(%arg0: i32) -> (i32, i32) {
    %c0_i32 = arith.constant 0 : i32
    %c0_i32_0 = arith.constant 0 : i32
    %c0_i32_1 = arith.constant 0 : i32
    return %c0_i32, %c0_i32_0 : i32, i32
  }
  func.func @transform_8(%arg0: i32) -> (i32, i32) {
    %c0_i32 = arith.constant 0 : i32
    %c0_i32_0 = arith.constant 0 : i32
    %c0_i32_1 = arith.constant 0 : i32
    return %c0_i32, %c0_i32_0 : i32, i32
  }
  func.func @transform_9(%arg0: i32) -> (i32, i32) {
    %c0_i32 = arith.constant 0 : i32
    %c0_i32_0 = arith.constant 0 : i32
    return %arg0, %c0_i32 : i32, i32
  }
}

</mosaic_0001>

<llo_original>
// kernel: tpu_custom_call.1
$region0: #{tpu_custom_call.1}
  #allocation0 [shape = 'u32[]', space=smem, size = 0x4, offset = 0x4, fixed_abs, tag = 'smem constant byte address 0x4 - core index']
  #allocation1 [shape = 'u32[144,128]{1,0:T(1,128)}', space=vmem, size = 0x12000, scoped, tag = 'internal scratch']
  %s0 = inlined_call_operand.hbm [shape: bf16[16,896], index: 0, kind: input, shape index: {}]
  %s1 = inlined_call_operand.hbm [shape: bf16[896,512], index: 1, kind: input, shape index: {}]
  %s2 = inlined_call_operand.hbm [shape: f32[1,512], index: 2, kind: input, shape index: {}]
  %s3 = inlined_call_operand.hbm [shape: bf16[512,512], index: 3, kind: input, shape index: {}]
  %s4 = inlined_call_operand.vmem [shape: f32[1,512], index: 4, kind: input, shape index: {}]
  %s5 = inlined_call_operand.hbm [shape: bf16[512,512], index: 5, kind: input, shape index: {}]
  %s6 = inlined_call_operand.vmem [shape: f32[1,512], index: 6, kind: input, shape index: {}]
  %s7 = inlined_call_operand.hbm [shape: bf16[512,128], index: 7, kind: input, shape index: {}]
  %s8 = inlined_call_operand.vmem [shape: f32[1,128], index: 8, kind: input, shape index: {}]
  %s9 = inlined_call_operand.hbm [shape: f32[16,128], index: 9, kind: output, shape index: {}]
  %s10 = sld [smem:[#allocation0]]
  $region70: #{tpu_custom_call.1} parent=0
    _
  %s12 = ssub.s32 1, %s10
  %s13 = scalar_select 0, %s12, %s10
  $region1: #{tpu_custom_call.1} parent=0
    #allocation2 [shape = 'u8[28672]{0}', space=vmem, size = 0x7000, scoped, tag = 'input window, operand 0, single buffered']
    #allocation3 [shape = 's32[1]{0}', space=sflag, size = 0x4, scoped, tag = 'scoped memory for tpu_custom_call.1']
    #allocation4 [shape = 's32[1]{0}', space=sflag, size = 0x4, scoped, tag = 'scoped memory for tpu_custom_call.1']
    #allocation5 [shape = 'u8[917504]{0}', space=vmem, size = 0xe0000, scoped, tag = 'input window, operand 1, single buffered']
    #allocation6 [shape = 's32[1]{0}', space=sflag, size = 0x4, scoped, tag = 'scoped memory for tpu_custom_call.1']
    #allocation7 [shape = 'u8[2048]{0}', space=vmem, size = 0x800, scoped, tag = 'input window, operand 2, single buffered']
    #allocation8 [shape = 'u8[524288]{0}', space=vmem, size = 0x80000, scoped, tag = 'input window, operand 3, single buffered']
    #allocation9 [shape = 's32[1]{0}', space=sflag, size = 0x4, scoped, tag = 'scoped memory for tpu_custom_call.1']
    #allocation10 [shape = 'u8[524288]{0}', space=vmem, size = 0x80000, scoped, tag = 'input window, operand 5, single buffered']
    #allocation11 [shape = 'u8[131072]{0}', space=vmem, size = 0x20000, scoped, tag = 'input window, operand 7, single buffered']
    #allocation12 [shape = 's32[1]{0}', space=sflag, size = 0x4, scoped, tag = 'scoped memory for tpu_custom_call.1']
    #allocation13 [shape = 'u8[8192]{0}', space=vmem, size = 0x2000, scoped, tag = 'output window, operand 0, single buffered']
    %14 = vsyncpa [#allocation3], 0
    %15 = vsyncpa [#allocation6], 0
    %16 = vsyncpa [#allocation9], 0
    %17 = vsyncpa [#allocation12], 0
    %18 = vsyncpa [#allocation4], 0
    // Predicated region
    $region2: #{tpu_custom_call.1} parent=1 // pred_check
      _
    $region3: #{tpu_custom_call.1} parent=1 // pred_check_branch
      %20 = sbr.rel (0) target = $region5
    $region4: #{tpu_custom_call.1} parent=1 // pred_region
      %s22 = ssub.s32 896, 896
      %23 = vsyncadd [#allocation3], %s22
      %s24 = sshll.u32 [#allocation2], 4
      %s25 = int_to_ptr.vmem [resolvable:$true] %s24
      %30 = dma.hbm_to_vmem [thread:$0]  %s0, 896, %s25, [#allocation3], 448, 448, 28
    $region5: #{tpu_custom_call.1} parent=1 // pred_fallthru
      _
    // Predicated region
    $region6: #{tpu_custom_call.1} parent=1 // pred_check
      _
    $region7: #{tpu_custom_call.1} parent=1 // pred_check_branch
      %32 = sbr.rel (0) target = $region9
    $region8: #{tpu_custom_call.1} parent=1 // pred_region
      %s34 = ssub.s32 28672, 28672
      %35 = vsyncadd [#allocation6], %s34
      %s36 = sshll.u32 [#allocation5], 4
      %s37 = int_to_ptr.vmem [resolvable:$true] %s36
      %42 = dma.hbm_to_vmem [thread:$0]  %s1, 28672, %s37, [#allocation6], 256, 256, 16
    $region9: #{tpu_custom_call.1} parent=1 // pred_fallthru
      _
    // Predicated region
    $region10: #{tpu_custom_call.1} parent=1 // pred_check
      _
    $region11: #{tpu_custom_call.1} parent=1 // pred_check_branch
      %44 = sbr.rel (0) target = $region13
    $region12: #{tpu_custom_call.1} parent=1 // pred_region
      %s46 = ssub.s32 64, 64
      %47 = vsyncadd [#allocation6], %s46
      %s49 = sshll.u32 [#allocation7], 4
      %s50 = int_to_ptr.vmem [resolvable:$true] %s49
      %52 = dma.hbm_to_vmem [thread:$0]  %s2, 64, %s50, [#allocation6]
    $region13: #{tpu_custom_call.1} parent=1 // pred_fallthru
      _
    // Predicated region
    $region14: #{tpu_custom_call.1} parent=1 // pred_check
      _
    $region15: #{tpu_custom_call.1} parent=1 // pred_check_branch
      %54 = sbr.rel (0) target = $region17
    $region16: #{tpu_custom_call.1} parent=1 // pred_region
      %s56 = ssub.s32 16384, 16384
      %57 = vsyncadd [#allocation9], %s56
      %s58 = sshll.u32 [#allocation8], 4
      %s59 = int_to_ptr.vmem [resolvable:$true] %s58
      %64 = dma.hbm_to_vmem [thread:$0]  %s3, 16384, %s59, [#allocation9], 256, 256, 16
    $region17: #{tpu_custom_call.1} parent=1 // pred_fallthru
      _
    // Predicated region
    $region18: #{tpu_custom_call.1} parent=1 // pred_check
      _
    $region19: #{tpu_custom_call.1} parent=1 // pred_check_branch
      %66 = sbr.rel (0) target = $region21
    $region20: #{tpu_custom_call.1} parent=1 // pred_region
      _
    $region21: #{tpu_custom_call.1} parent=1 // pred_fallthru
      _
    // Predicated region
    $region22: #{tpu_custom_call.1} parent=1 // pred_check
      _
    $region23: #{tpu_custom_call.1} parent=1 // pred_check_branch
      %68 = sbr.rel (0) target = $region25
    $region24: #{tpu_custom_call.1} parent=1 // pred_region
      %s70 = ssub.s32 16384, 16384
      %71 = vsyncadd [#allocation9], %s70
      %s72 = sshll.u32 [#allocation10], 4
      %s73 = int_to_ptr.vmem [resolvable:$true] %s72
      %78 = dma.hbm_to_vmem [thread:$0]  %s5, 16384, %s73, [#allocation9], 256, 256, 16
    $region25: #{tpu_custom_call.1} parent=1 // pred_fallthru
      _
    // Predicated region
    $region26: #{tpu_custom_call.1} parent=1 // pred_check
      _
    $region27: #{tpu_custom_call.1} parent=1 // pred_check_branch
      %80 = sbr.rel (0) target = $region29
    $region28: #{tpu_custom_call.1} parent=1 // pred_region
      _
    $region29: #{tpu_custom_call.1} parent=1 // pred_fallthru
      _
    // Predicated region
    $region30: #{tpu_custom_call.1} parent=1 // pred_check
      _
    $region31: #{tpu_custom_call.1} parent=1 // pred_check_branch
      %82 = sbr.rel (0) target = $region33
    $region32: #{tpu_custom_call.1} parent=1 // pred_region
      %s84 = ssub.s32 4096, 4096
      %85 = vsyncadd [#allocation12], %s84
      %s86 = sshll.u32 [#allocation11], 4
      %s87 = int_to_ptr.vmem [resolvable:$true] %s86
      %92 = dma.hbm_to_vmem [thread:$0]  %s7, 4096, %s87, [#allocation12], 64, 64, 4
    $region33: #{tpu_custom_call.1} parent=1 // pred_fallthru
      _
    // Predicated region
    $region34: #{tpu_custom_call.1} parent=1 // pred_check
      _
    $region35: #{tpu_custom_call.1} parent=1 // pred_check_branch
      %94 = sbr.rel (0) target = $region37
    $region36: #{tpu_custom_call.1} parent=1 // pred_region
      _
    $region37: #{tpu_custom_call.1} parent=1 // pred_fallthru
      _
    // Predicated region
    $region38: #{tpu_custom_call.1} parent=1 // pred_check
      _
    $region39: #{tpu_custom_call.1} parent=1 // pred_check_branch
      %96 = sbr.rel (0) target = $region41
    $region40: #{tpu_custom_call.1} parent=1 // pred_region
      %97 = dma.done [#allocation3], 896
    $region41: #{tpu_custom_call.1} parent=1 // pred_fallthru
      _
    // Predicated region
    $region42: #{tpu_custom_call.1} parent=1 // pred_check
      _
    $region43: #{tpu_custom_call.1} parent=1 // pred_check_branch
      %99 = sbr.rel (0) target = $region45
    $region44: #{tpu_custom_call.1} parent=1 // pred_region
      %100 = dma.done [#allocation6], 28672
    $region45: #{tpu_custom_call.1} parent=1 // pred_fallthru
      _
    // Predicated region
    $region46: #{tpu_custom_call.1} parent=1 // pred_check
      _
    $region47: #{tpu_custom_call.1} parent=1 // pred_check_branch
      %102 = sbr.rel (0) target = $region49
    $region48: #{tpu_custom_call.1} parent=1 // pred_region
      %103 = dma.done [#allocation6], 64
    $region49: #{tpu_custom_call.1} parent=1 // pred_fallthru
      _
    // Predicated region
    $region50: #{tpu_custom_call.1} parent=1 // pred_check
      _
    $region51: #{tpu_custom_call.1} parent=1 // pred_check_branch
      %105 = sbr.rel (0) target = $region53
    $region52: #{tpu_custom_call.1} parent=1 // pred_region
      %106 = dma.done [#allocation9], 16384
    $region53: #{tpu_custom_call.1} parent=1 // pred_fallthru
      _
    // Predicated region
    $region54: #{tpu_custom_call.1} parent=1 // pred_check
      _
    $region55: #{tpu_custom_call.1} parent=1 // pred_check_branch
      %108 = sbr.rel (0) target = $region57
    $region56: #{tpu_custom_call.1} parent=1 // pred_region
      %109 = dma.done [#allocation9], 16384
    $region57: #{tpu_custom_call.1} parent=1 // pred_fallthru
      _
    // Predicated region
    $region58: #{tpu_custom_call.1} parent=1 // pred_check
      _
    $region59: #{tpu_custom_call.1} parent=1 // pred_check_branch
      %111 = sbr.rel (0) target = $region61
    $region60: #{tpu_custom_call.1} parent=1 // pred_region
      %112 = dma.done [#allocation12], 4096
    $region61: #{tpu_custom_call.1} parent=1 // pred_fallthru
      _
    %v114 = vld [vmem:[#allocation2] sm:$0xff]
    %v115 = vld [vmem:[#allocation2 + $0x8] sm:$0xff]
    %v116 = vld [vmem:[#allocation2 + $0x10] sm:$0xff]
    %v117 = vld [vmem:[#allocation2 + $0x18] sm:$0xf]
    %v118 = vld [vmem:[#allocation2 + $0x1c] sm:$0xff]
    %v119 = vld [vmem:[#allocation2 + $0x24] sm:$0xff]
    %v120 = vld [vmem:[#allocation2 + $0x2c] sm:$0xff]
    %v121 = vld [vmem:[#allocation2 + $0x34] sm:$0xf]
    %v122 = vld [vmem:[#allocation5] sm:$0xff]
    %v123 = vld [vmem:[#allocation5 + $0x8] sm:$0xff]
    %v124 = vld [vmem:[#allocation5 + $0x10] sm:$0xff]
    %v125 = vld [vmem:[#allocation5 + $0x18] sm:$0xff]
    %v126 = vld [vmem:[#allocation5 + $0x20] sm:$0xff]
    %v127 = vld [vmem:[#allocation5 + $0x28] sm:$0xff]
    %v128 = vld [vmem:[#allocation5 + $0x30] sm:$0xff]
    %v129 = vld [vmem:[#allocation5 + $0x38] sm:$0xff]
    %v130 = vld [vmem:[#allocation5 + $0x40] sm:$0xff]
    %v131 = vld [vmem:[#allocation5 + $0x48] sm:$0xff]
    %v132 = vld [vmem:[#allocation5 + $0x50] sm:$0xff]
    %v133 = vld [vmem:[#allocation5 + $0x58] sm:$0xff]
    %v134 = vld [vmem:[#allocation5 + $0x60] sm:$0xff]
    %v135 = vld [vmem:[#allocation5 + $0x68] sm:$0xff]
    %v136 = vld [vmem:[#allocation5 + $0x70] sm:$0xff]
    %v137 = vld [vmem:[#allocation5 + $0x78] sm:$0xff]
    %v138 = vld [vmem:[#allocation5 + $0x80] sm:$0xff]
    %v139 = vld [vmem:[#allocation5 + $0x88] sm:$0xff]
    %v140 = vld [vmem:[#allocation5 + $0x90] sm:$0xff]
    %v141 = vld [vmem:[#allocation5 + $0x98] sm:$0xff]
    %v142 = vld [vmem:[#allocation5 + $0xa0] sm:$0xff]
    %v143 = vld [vmem:[#allocation5 + $0xa8] sm:$0xff]
    %v144 = vld [vmem:[#allocation5 + $0xb0] sm:$0xff]
    %v145 = vld [vmem:[#allocation5 + $0xb8] sm:$0xff]
    %v146 = vld [vmem:[#allocation5 + $0xc0] sm:$0xff]
    %v147 = vld [vmem:[#allocation5 + $0xc8] sm:$0xff]
    %v148 = vld [vmem:[#allocation5 + $0xd0] sm:$0xff]
    %v149 = vld [vmem:[#allocation5 + $0xd8] sm:$0xff]
    %v150 = vld [vmem:[#allocation5 + $0xe0] sm:$0xff]
    %v151 = vld [vmem:[#allocation5 + $0xe8] sm:$0xff]
    %v152 = vld [vmem:[#allocation5 + $0xf0] sm:$0xff]
    %v153 = vld [vmem:[#allocation5 + $0xf8] sm:$0xff]
    %v154 = vld [vmem:[#allocation5 + $0x100] sm:$0xff]
    %v155 = vld [vmem:[#allocation5 + $0x108] sm:$0xff]
    %v156 = vld [vmem:[#allocation5 + $0x110] sm:$0xff]
    %v157 = vld [vmem:[#allocation5 + $0x118] sm:$0xff]
    %v158 = vld [vmem:[#allocation5 + $0x120] sm:$0xff]
    %v159 = vld [vmem:[#allocation5 + $0x128] sm:$0xff]
    %v160 = vld [vmem:[#allocation5 + $0x130] sm:$0xff]
    %v161 = vld [vmem:[#allocation5 + $0x138] sm:$0xff]
    %v162 = vld [vmem:[#allocation5 + $0x140] sm:$0xff]
    %v163 = vld [vmem:[#allocation5 + $0x148] sm:$0xff]
    %v164 = vld [vmem:[#allocation5 + $0x150] sm:$0xff]
    %v165 = vld [vmem:[#allocation5 + $0x158] sm:$0xff]
    %v166 = vld [vmem:[#allocation5 + $0x160] sm:$0xff]
    %v167 = vld [vmem:[#allocation5 + $0x168] sm:$0xff]
    %v168 = vld [vmem:[#allocation5 + $0x170] sm:$0xff]
    %v169 = vld [vmem:[#allocation5 + $0x178] sm:$0xff]
    %v170 = vld [vmem:[#allocation5 + $0x180] sm:$0xff]
    %v171 = vld [vmem:[#allocation5 + $0x188] sm:$0xff]
    %v172 = vld [vmem:[#allocation5 + $0x190] sm:$0xff]
    %v173 = vld [vmem:[#allocation5 + $0x198] sm:$0xff]
    %v174 = vld [vmem:[#allocation5 + $0x1a0] sm:$0xff]
    %v175 = vld [vmem:[#allocation5 + $0x1a8] sm:$0xff]
    %v176 = vld [vmem:[#allocation5 + $0x1b0] sm:$0xff]
    %v177 = vld [vmem:[#allocation5 + $0x1b8] sm:$0xff]
    %v178 = vld [vmem:[#allocation5 + $0x1c0] sm:$0xff]
    %v179 = vld [vmem:[#allocation5 + $0x1c8] sm:$0xff]
    %v180 = vld [vmem:[#allocation5 + $0x1d0] sm:$0xff]
    %v181 = vld [vmem:[#allocation5 + $0x1d8] sm:$0xff]
    %v182 = vld [vmem:[#allocation5 + $0x1e0] sm:$0xff]
    %v183 = vld [vmem:[#allocation5 + $0x1e8] sm:$0xff]
    %v184 = vld [vmem:[#allocation5 + $0x1f0] sm:$0xff]
    %v185 = vld [vmem:[#allocation5 + $0x1f8] sm:$0xff]
    %v186 = vld [vmem:[#allocation5 + $0x200] sm:$0xff]
    %v187 = vld [vmem:[#allocation5 + $0x208] sm:$0xff]
    %v188 = vld [vmem:[#allocation5 + $0x210] sm:$0xff]
    %v189 = vld [vmem:[#allocation5 + $0x218] sm:$0xff]
    %v190 = vld [vmem:[#allocation5 + $0x220] sm:$0xff]
    %v191 = vld [vmem:[#allocation5 + $0x228] sm:$0xff]
    %v192 = vld [vmem:[#allocation5 + $0x230] sm:$0xff]
    %v193 = vld [vmem:[#allocation5 + $0x238] sm:$0xff]
    %v194 = vld [vmem:[#allocation5 + $0x240] sm:$0xff]
    %v195 = vld [vmem:[#allocation5 + $0x248] sm:$0xff]
    %v196 = vld [vmem:[#allocation5 + $0x250] sm:$0xff]
    %v197 = vld [vmem:[#allocation5 + $0x258] sm:$0xff]
    %v198 = vld [vmem:[#allocation5 + $0x260] sm:$0xff]
    %v199 = vld [vmem:[#allocation5 + $0x268] sm:$0xff]
    %v200 = vld [vmem:[#allocation5 + $0x270] sm:$0xff]
    %v201 = vld [vmem:[#allocation5 + $0x278] sm:$0xff]
    %v202 = vld [vmem:[#allocation5 + $0x280] sm:$0xff]
    %v203 = vld [vmem:[#allocation5 + $0x288] sm:$0xff]
    %v204 = vld [vmem:[#allocation5 + $0x290] sm:$0xff]
    %v205 = vld [vmem:[#allocation5 + $0x298] sm:$0xff]
    %v206 = vld [vmem:[#allocation5 + $0x2a0] sm:$0xff]
    %v207 = vld [vmem:[#allocation5 + $0x2a8] sm:$0xff]
    %v208 = vld [vmem:[#allocation5 + $0x2b0] sm:$0xff]
    %v209 = vld [vmem:[#allocation5 + $0x2b8] sm:$0xff]
    %v210 = vld [vmem:[#allocation5 + $0x2c0] sm:$0xff]
    %v211 = vld [vmem:[#allocation5 + $0x2c8] sm:$0xff]
    %v212 = vld [vmem:[#allocation5 + $0x2d0] sm:$0xff]
    %v213 = vld [vmem:[#allocation5 + $0x2d8] sm:$0xff]
    %v214 = vld [vmem:[#allocation5 + $0x2e0] sm:$0xff]
    %v215 = vld [vmem:[#allocation5 + $0x2e8] sm:$0xff]
    %v216 = vld [vmem:[#allocation5 + $0x2f0] sm:$0xff]
    %v217 = vld [vmem:[#allocation5 + $0x2f8] sm:$0xff]
    %v218 = vld [vmem:[#allocation5 + $0x300] sm:$0xff]
    %v219 = vld [vmem:[#allocation5 + $0x308] sm:$0xff]
    %v220 = vld [vmem:[#allocation5 + $0x310] sm:$0xff]
    %v221 = vld [vmem:[#allocation5 + $0x318] sm:$0xff]
    %v222 = vld [vmem:[#allocation5 + $0x320] sm:$0xff]
    %v223 = vld [vmem:[#allocation5 + $0x328] sm:$0xff]
    %v224 = vld [vmem:[#allocation5 + $0x330] sm:$0xff]
    %v225 = vld [vmem:[#allocation5 + $0x338] sm:$0xff]
    %v226 = vld [vmem:[#allocation5 + $0x340] sm:$0xff]
    %v227 = vld [vmem:[#allocation5 + $0x348] sm:$0xff]
    %v228 = vld [vmem:[#allocation5 + $0x350] sm:$0xff]
    %v229 = vld [vmem:[#allocation5 + $0x358] sm:$0xff]
    %v230 = vld [vmem:[#allocation5 + $0x360] sm:$0xff]
    %v231 = vld [vmem:[#allocation5 + $0x368] sm:$0xff]
    %v232 = vld [vmem:[#allocation5 + $0x370] sm:$0xff]
    %v233 = vld [vmem:[#allocation5 + $0x378] sm:$0xff]
    %v234 = vld [vmem:[#allocation5 + $0x380] sm:$0xff]
    %v235 = vld [vmem:[#allocation5 + $0x388] sm:$0xff]
    %v236 = vld [vmem:[#allocation5 + $0x390] sm:$0xff]
    %v237 = vld [vmem:[#allocation5 + $0x398] sm:$0xff]
    %v238 = vld [vmem:[#allocation5 + $0x3a0] sm:$0xff]
    %v239 = vld [vmem:[#allocation5 + $0x3a8] sm:$0xff]
    %v240 = vld [vmem:[#allocation5 + $0x3b0] sm:$0xff]
    %v241 = vld [vmem:[#allocation5 + $0x3b8] sm:$0xff]
    %v242 = vld [vmem:[#allocation5 + $0x3c0] sm:$0xff]
    %v243 = vld [vmem:[#allocation5 + $0x3c8] sm:$0xff]
    %v244 = vld [vmem:[#allocation5 + $0x3d0] sm:$0xff]
    %v245 = vld [vmem:[#allocation5 + $0x3d8] sm:$0xff]
    %v246 = vld [vmem:[#allocation5 + $0x3e0] sm:$0xff]
    %v247 = vld [vmem:[#allocation5 + $0x3e8] sm:$0xff]
    %v248 = vld [vmem:[#allocation5 + $0x3f0] sm:$0xff]
    %v249 = vld [vmem:[#allocation5 + $0x3f8] sm:$0xff]
    %v250 = vld [vmem:[#allocation5 + $0x400] sm:$0xff]
    %v251 = vld [vmem:[#allocation5 + $0x408] sm:$0xff]
    %v252 = vld [vmem:[#allocation5 + $0x410] sm:$0xff]
    %v253 = vld [vmem:[#allocation5 + $0x418] sm:$0xff]
    %v254 = vld [vmem:[#allocation5 + $0x420] sm:$0xff]
    %v255 = vld [vmem:[#allocation5 + $0x428] sm:$0xff]
    %v256 = vld [vmem:[#allocation5 + $0x430] sm:$0xff]
    %v257 = vld [vmem:[#allocation5 + $0x438] sm:$0xff]
    %v258 = vld [vmem:[#allocation5 + $0x440] sm:$0xff]
    %v259 = vld [vmem:[#allocation5 + $0x448] sm:$0xff]
    %v260 = vld [vmem:[#allocation5 + $0x450] sm:$0xff]
    %v261 = vld [vmem:[#allocation5 + $0x458] sm:$0xff]
    %v262 = vld [vmem:[#allocation5 + $0x460] sm:$0xff]
    %v263 = vld [vmem:[#allocation5 + $0x468] sm:$0xff]
    %v264 = vld [vmem:[#allocation5 + $0x470] sm:$0xff]
    %v265 = vld [vmem:[#allocation5 + $0x478] sm:$0xff]
    %v266 = vld [vmem:[#allocation5 + $0x480] sm:$0xff]
    %v267 = vld [vmem:[#allocation5 + $0x488] sm:$0xff]
    %v268 = vld [vmem:[#allocation5 + $0x490] sm:$0xff]
    %v269 = vld [vmem:[#allocation5 + $0x498] sm:$0xff]
    %v270 = vld [vmem:[#allocation5 + $0x4a0] sm:$0xff]
    %v271 = vld [vmem:[#allocation5 + $0x4a8] sm:$0xff]
    %v272 = vld [vmem:[#allocation5 + $0x4b0] sm:$0xff]
    %v273 = vld [vmem:[#allocation5 + $0x4b8] sm:$0xff]
    %v274 = vld [vmem:[#allocation5 + $0x4c0] sm:$0xff]
    %v275 = vld [vmem:[#allocation5 + $0x4c8] sm:$0xff]
    %v276 = vld [vmem:[#allocation5 + $0x4d0] sm:$0xff]
    %v277 = vld [vmem:[#allocation5 + $0x4d8] sm:$0xff]
    %v278 = vld [vmem:[#allocation5 + $0x4e0] sm:$0xff]
    %v279 = vld [vmem:[#allocation5 + $0x4e8] sm:$0xff]
    %v280 = vld [vmem:[#allocation5 + $0x4f0] sm:$0xff]
    %v281 = vld [vmem:[#allocation5 + $0x4f8] sm:$0xff]
    %v282 = vld [vmem:[#allocation5 + $0x500] sm:$0xff]
    %v283 = vld [vmem:[#allocation5 + $0x508] sm:$0xff]
    %v284 = vld [vmem:[#allocation5 + $0x510] sm:$0xff]
    %v285 = vld [vmem:[#allocation5 + $0x518] sm:$0xff]
    %v286 = vld [vmem:[#allocation5 + $0x520] sm:$0xff]
    %v287 = vld [vmem:[#allocation5 + $0x528] sm:$0xff]
    %v288 = vld [vmem:[#allocation5 + $0x530] sm:$0xff]
    %v289 = vld [vmem:[#allocation5 + $0x538] sm:$0xff]
    %v290 = vld [vmem:[#allocation5 + $0x540] sm:$0xff]
    %v291 = vld [vmem:[#allocation5 + $0x548] sm:$0xff]
    %v292 = vld [vmem:[#allocation5 + $0x550] sm:$0xff]
    %v293 = vld [vmem:[#allocation5 + $0x558] sm:$0xff]
    %v294 = vld [vmem:[#allocation5 + $0x560] sm:$0xff]
    %v295 = vld [vmem:[#allocation5 + $0x568] sm:$0xff]
    %v296 = vld [vmem:[#allocation5 + $0x570] sm:$0xff]
    %v297 = vld [vmem:[#allocation5 + $0x578] sm:$0xff]
    %v298 = vld [vmem:[#allocation5 + $0x580] sm:$0xff]
    %v299 = vld [vmem:[#allocation5 + $0x588] sm:$0xff]
    %v300 = vld [vmem:[#allocation5 + $0x590] sm:$0xff]
    %v301 = vld [vmem:[#allocation5 + $0x598] sm:$0xff]
    %v302 = vld [vmem:[#allocation5 + $0x5a0] sm:$0xff]
    %v303 = vld [vmem:[#allocation5 + $0x5a8] sm:$0xff]
    %v304 = vld [vmem:[#allocation5 + $0x5b0] sm:$0xff]
    %v305 = vld [vmem:[#allocation5 + $0x5b8] sm:$0xff]
    %v306 = vld [vmem:[#allocation5 + $0x5c0] sm:$0xff]
    %v307 = vld [vmem:[#allocation5 + $0x5c8] sm:$0xff]
    %v308 = vld [vmem:[#allocation5 + $0x5d0] sm:$0xff]
    %v309 = vld [vmem:[#allocation5 + $0x5d8] sm:$0xff]
    %v310 = vld [vmem:[#allocation5 + $0x5e0] sm:$0xff]
    %v311 = vld [vmem:[#allocation5 + $0x5e8] sm:$0xff]
    %v312 = vld [vmem:[#allocation5 + $0x5f0] sm:$0xff]
    %v313 = vld [vmem:[#allocation5 + $0x5f8] sm:$0xff]
    %v314 = vld [vmem:[#allocation5 + $0x600] sm:$0xff]
    %v315 = vld [vmem:[#allocation5 + $0x608] sm:$0xff]
    %v316 = vld [vmem:[#allocation5 + $0x610] sm:$0xff]
    %v317 = vld [vmem:[#allocation5 + $0x618] sm:$0xff]
    %v318 = vld [vmem:[#allocation5 + $0x620] sm:$0xff]
    %v319 = vld [vmem:[#allocation5 + $0x628] sm:$0xff]
    %v320 = vld [vmem:[#allocation5 + $0x630] sm:$0xff]
    %v321 = vld [vmem:[#allocation5 + $0x638] sm:$0xff]
    %v322 = vld [vmem:[#allocation5 + $0x640] sm:$0xff]
    %v323 = vld [vmem:[#allocation5 + $0x648] sm:$0xff]
    %v324 = vld [vmem:[#allocation5 + $0x650] sm:$0xff]
    %v325 = vld [vmem:[#allocation5 + $0x658] sm:$0xff]
    %v326 = vld [vmem:[#allocation5 + $0x660] sm:$0xff]
    %v327 = vld [vmem:[#allocation5 + $0x668] sm:$0xff]
    %v328 = vld [vmem:[#allocation5 + $0x670] sm:$0xff]
    %v329 = vld [vmem:[#allocation5 + $0x678] sm:$0xff]
    %v330 = vld [vmem:[#allocation5 + $0x680] sm:$0xff]
    %v331 = vld [vmem:[#allocation5 + $0x688] sm:$0xff]
    %v332 = vld [vmem:[#allocation5 + $0x690] sm:$0xff]
    %v333 = vld [vmem:[#allocation5 + $0x698] sm:$0xff]
    %v334 = vld [vmem:[#allocation5 + $0x6a0] sm:$0xff]
    %v335 = vld [vmem:[#allocation5 + $0x6a8] sm:$0xff]
    %v336 = vld [vmem:[#allocation5 + $0x6b0] sm:$0xff]
    %v337 = vld [vmem:[#allocation5 + $0x6b8] sm:$0xff]
    %v338 = vld [vmem:[#allocation5 + $0x6c0] sm:$0xff]
    %v339 = vld [vmem:[#allocation5 + $0x6c8] sm:$0xff]
    %v340 = vld [vmem:[#allocation5 + $0x6d0] sm:$0xff]
    %v341 = vld [vmem:[#allocation5 + $0x6d8] sm:$0xff]
    %v342 = vld [vmem:[#allocation5 + $0x6e0] sm:$0xff]
    %v343 = vld [vmem:[#allocation5 + $0x6e8] sm:$0xff]
    %v344 = vld [vmem:[#allocation5 + $0x6f0] sm:$0xff]
    %v345 = vld [vmem:[#allocation5 + $0x6f8] sm:$0xff]
    %v346 = vld [vmem:[#allocation7] sm:$0xf]
    %v348 = vlaneseq
    %v349 = vshrl.u32 %v348, 7
    %v350 = vsub.s32 0, %v349
    %v351 = vrot.slane %v346, %v350
    %v352 = vlaneseq
    %v353 = vshrl.u32 %v352, 7
    %v354 = vsub.s32 1, %v353
    %v355 = vrot.slane %v346, %v354
    %v356 = vlaneseq
    %v357 = vshrl.u32 %v356, 7
    %v358 = vsub.s32 2, %v357
    %v359 = vrot.slane %v346, %v358
    %v360 = vlaneseq
    %v361 = vshrl.u32 %v360, 7
    %v362 = vsub.s32 3, %v361
    %v363 = vrot.slane %v346, %v362
    %v376 = vunpack.c.l.b16 %v114
    %v377 = vunpack.c.h.b16 %v114
    %v378 = vunpack.c.l.b16 %v115
    %v379 = vunpack.c.h.b16 %v115
    %v380 = vunpack.c.l.b16 %v116
    %v381 = vunpack.c.h.b16 %v116
    %v382 = vunpack.c.l.b16 %v117
    %v383 = vunpack.c.l.b16 %v118
    %v384 = vunpack.c.h.b16 %v118
    %v385 = vunpack.c.l.b16 %v119
    %v386 = vunpack.c.h.b16 %v119
    %v387 = vunpack.c.l.b16 %v120
    %v388 = vunpack.c.h.b16 %v120
    %v389 = vunpack.c.l.b16 %v121
    %v390 = vpack.c.b16 %v383, %v376
    %v391 = vpack.c.b16 %v384, %v377
    %v392 = vpack.c.b16 %v385, %v378
    %v393 = vpack.c.b16 %v386, %v379
    %v394 = vpack.c.b16 %v387, %v380
    %v395 = vpack.c.b16 %v388, %v381
    %v396 = vpack.c.b16 %v389, %v382
    %v628 = vunpack.c.l.b16 %v122
    %v629 = vunpack.c.h.b16 %v122
    %v630 = vunpack.c.l.b16 %v123
    %v631 = vunpack.c.h.b16 %v123
    %v632 = vunpack.c.l.b16 %v124
    %v633 = vunpack.c.h.b16 %v124
    %v634 = vunpack.c.l.b16 %v125
    %v635 = vunpack.c.h.b16 %v125
    %v636 = vunpack.c.l.b16 %v126
    %v637 = vunpack.c.h.b16 %v126
    %v638 = vunpack.c.l.b16 %v127
    %v639 = vunpack.c.h.b16 %v127
    %v640 = vunpack.c.l.b16 %v128
    %v641 = vunpack.c.h.b16 %v128
    %v642 = vunpack.c.l.b16 %v129
    %v643 = vunpack.c.h.b16 %v129
    %v644 = vunpack.c.l.b16 %v130
    %v645 = vunpack.c.h.b16 %v130
    %v646 = vunpack.c.l.b16 %v131
    %v647 = vunpack.c.h.b16 %v131
    %v648 = vunpack.c.l.b16 %v132
    %v649 = vunpack.c.h.b16 %v132
    %v650 = vunpack.c.l.b16 %v133
    %v651 = vunpack.c.h.b16 %v133
    %v652 = vunpack.c.l.b16 %v134
    %v653 = vunpack.c.h.b16 %v134
    %v654 = vunpack.c.l.b16 %v135
    %v655 = vunpack.c.h.b16 %v135
    %v656 = vunpack.c.l.b16 %v136
    %v657 = vunpack.c.h.b16 %v136
    %v658 = vunpack.c.l.b16 %v137
    %v659 = vunpack.c.h.b16 %v137
    %v660 = vunpack.c.l.b16 %v138
    %v661 = vunpack.c.h.b16 %v138
    %v662 = vunpack.c.l.b16 %v139
    %v663 = vunpack.c.h.b16 %v139
    %v664 = vunpack.c.l.b16 %v140
    %v665 = vunpack.c.h.b16 %v140
    %v666 = vunpack.c.l.b16 %v141
    %v667 = vunpack.c.h.b16 %v141
    %v668 = vunpack.c.l.b16 %v142
    %v669 = vunpack.c.h.b16 %v142
    %v670 = vunpack.c.l.b16 %v143
    %v671 = vunpack.c.h.b16 %v143
    %v672 = vunpack.c.l.b16 %v144
    %v673 = vunpack.c.h.b16 %v144
    %v674 = vunpack.c.l.b16 %v145
    %v675 = vunpack.c.h.b16 %v145
    %v676 = vunpack.c.l.b16 %v146
    %v677 = vunpack.c.h.b16 %v146
    %v678 = vunpack.c.l.b16 %v147
    %v679 = vunpack.c.h.b16 %v147
    %v680 = vunpack.c.l.b16 %v148
    %v681 = vunpack.c.h.b16 %v148
    %v682 = vunpack.c.l.b16 %v149
    %v683 = vunpack.c.h.b16 %v149
    %v684 = vunpack.c.l.b16 %v150
    %v685 = vunpack.c.h.b16 %v150
    %v686 = vunpack.c.l.b16 %v151
    %v687 = vunpack.c.h.b16 %v151
    %v688 = vunpack.c.l.b16 %v152
    %v689 = vunpack.c.h.b16 %v152
    %v690 = vunpack.c.l.b16 %v153
    %v691 = vunpack.c.h.b16 %v153
    %v692 = vunpack.c.l.b16 %v154
    %v693 = vunpack.c.h.b16 %v154
    %v694 = vunpack.c.l.b16 %v155
    %v695 = vunpack.c.h.b16 %v155
    %v696 = vunpack.c.l.b16 %v156
    %v697 = vunpack.c.h.b16 %v156
    %v698 = vunpack.c.l.b16 %v157
    %v699 = vunpack.c.h.b16 %v157
    %v700 = vunpack.c.l.b16 %v158
    %v701 = vunpack.c.h.b16 %v158
    %v702 = vunpack.c.l.b16 %v159
    %v703 = vunpack.c.h.b16 %v159
    %v704 = vunpack.c.l.b16 %v160
    %v705 = vunpack.c.h.b16 %v160
    %v706 = vunpack.c.l.b16 %v161
    %v707 = vunpack.c.h.b16 %v161
    %v708 = vunpack.c.l.b16 %v162
    %v709 = vunpack.c.h.b16 %v162
    %v710 = vunpack.c.l.b16 %v163
    %v711 = vunpack.c.h.b16 %v163
    %v712 = vunpack.c.l.b16 %v164
    %v713 = vunpack.c.h.b16 %v164
    %v714 = vunpack.c.l.b16 %v165
    %v715 = vunpack.c.h.b16 %v165
    %v716 = vunpack.c.l.b16 %v166
    %v717 = vunpack.c.h.b16 %v166
    %v718 = vunpack.c.l.b16 %v167
    %v719 = vunpack.c.h.b16 %v167
    %v720 = vunpack.c.l.b16 %v168
    %v721 = vunpack.c.h.b16 %v168
    %v722 = vunpack.c.l.b16 %v169
    %v723 = vunpack.c.h.b16 %v169
    %v724 = vunpack.c.l.b16 %v170
    %v725 = vunpack.c.h.b16 %v170
    %v726 = vunpack.c.l.b16 %v171
    %v727 = vunpack.c.h.b16 %v171
    %v728 = vunpack.c.l.b16 %v172
    %v729 = vunpack.c.h.b16 %v172
    %v730 = vunpack.c.l.b16 %v173
    %v731 = vunpack.c.h.b16 %v173
    %v732 = vunpack.c.l.b16 %v174
    %v733 = vunpack.c.h.b16 %v174
    %v734 = vunpack.c.l.b16 %v175
    %v735 = vunpack.c.h.b16 %v175
    %v736 = vunpack.c.l.b16 %v176
    %v737 = vunpack.c.h.b16 %v176
    %v738 = vunpack.c.l.b16 %v177
    %v739 = vunpack.c.h.b16 %v177
    %v740 = vunpack.c.l.b16 %v178
    %v741 = vunpack.c.h.b16 %v178
    %v742 = vunpack.c.l.b16 %v179
    %v743 = vunpack.c.h.b16 %v179
    %v744 = vunpack.c.l.b16 %v180
    %v745 = vunpack.c.h.b16 %v180
    %v746 = vunpack.c.l.b16 %v181
    %v747 = vunpack.c.h.b16 %v181
    %v748 = vunpack.c.l.b16 %v182
    %v749 = vunpack.c.h.b16 %v182
    %v750 = vunpack.c.l.b16 %v183
    %v751 = vunpack.c.h.b16 %v183
    %v752 = vunpack.c.l.b16 %v184
    %v753 = vunpack.c.h.b16 %v184
    %v754 = vunpack.c.l.b16 %v185
    %v755 = vunpack.c.h.b16 %v185
    %v756 = vunpack.c.l.b16 %v186
    %v757 = vunpack.c.h.b16 %v186
    %v758 = vunpack.c.l.b16 %v187
    %v759 = vunpack.c.h.b16 %v187
    %v760 = vunpack.c.l.b16 %v188
    %v761 = vunpack.c.h.b16 %v188
    %v762 = vunpack.c.l.b16 %v189
    %v763 = vunpack.c.h.b16 %v189
    %v764 = vunpack.c.l.b16 %v190
    %v765 = vunpack.c.h.b16 %v190
    %v766 = vunpack.c.l.b16 %v191
    %v767 = vunpack.c.h.b16 %v191
    %v768 = vunpack.c.l.b16 %v192
    %v769 = vunpack.c.h.b16 %v192
    %v770 = vunpack.c.l.b16 %v193
    %v771 = vunpack.c.h.b16 %v193
    %v772 = vunpack.c.l.b16 %v194
    %v773 = vunpack.c.h.b16 %v194
    %v774 = vunpack.c.l.b16 %v195
    %v775 = vunpack.c.h.b16 %v195
    %v776 = vunpack.c.l.b16 %v196
    %v777 = vunpack.c.h.b16 %v196
    %v778 = vunpack.c.l.b16 %v197
    %v779 = vunpack.c.h.b16 %v197
    %v780 = vunpack.c.l.b16 %v198
    %v781 = vunpack.c.h.b16 %v198
    %v782 = vunpack.c.l.b16 %v199
    %v783 = vunpack.c.h.b16 %v199
    %v784 = vunpack.c.l.b16 %v200
    %v785 = vunpack.c.h.b16 %v200
    %v786 = vunpack.c.l.b16 %v201
    %v787 = vunpack.c.h.b16 %v201
    %v788 = vunpack.c.l.b16 %v202
    %v789 = vunpack.c.h.b16 %v202
    %v790 = vunpack.c.l.b16 %v203
    %v791 = vunpack.c.h.b16 %v203
    %v792 = vunpack.c.l.b16 %v204
    %v793 = vunpack.c.h.b16 %v204
    %v794 = vunpack.c.l.b16 %v205
    %v795 = vunpack.c.h.b16 %v205
    %v796 = vunpack.c.l.b16 %v206
    %v797 = vunpack.c.h.b16 %v206
    %v798 = vunpack.c.l.b16 %v207
    %v799 = vunpack.c.h.b16 %v207
    %v800 = vunpack.c.l.b16 %v208
    %v801 = vunpack.c.h.b16 %v208
    %v802 = vunpack.c.l.b16 %v209
    %v803 = vunpack.c.h.b16 %v209
    %v804 = vunpack.c.l.b16 %v210
    %v805 = vunpack.c.h.b16 %v210
    %v806 = vunpack.c.l.b16 %v211
    %v807 = vunpack.c.h.b16 %v211
    %v808 = vunpack.c.l.b16 %v212
    %v809 = vunpack.c.h.b16 %v212
    %v810 = vunpack.c.l.b16 %v213
    %v811 = vunpack.c.h.b16 %v213
    %v812 = vunpack.c.l.b16 %v214
    %v813 = vunpack.c.h.b16 %v214
    %v814 = vunpack.c.l.b16 %v215
    %v815 = vunpack.c.h.b16 %v215
    %v816 = vunpack.c.l.b16 %v216
    %v817 = vunpack.c.h.b16 %v216
    %v818 = vunpack.c.l.b16 %v217
    %v819 = vunpack.c.h.b16 %v217
    %v820 = vunpack.c.l.b16 %v218
    %v821 = vunpack.c.h.b16 %v218
    %v822 = vunpack.c.l.b16 %v219
    %v823 = vunpack.c.h.b16 %v219
    %v824 = vunpack.c.l.b16 %v220
    %v825 = vunpack.c.h.b16 %v220
    %v826 = vunpack.c.l.b16 %v221
    %v827 = vunpack.c.h.b16 %v221
    %v828 = vunpack.c.l.b16 %v222
    %v829 = vunpack.c.h.b16 %v222
    %v830 = vunpack.c.l.b16 %v223
    %v831 = vunpack.c.h.b16 %v223
    %v832 = vunpack.c.l.b16 %v224
    %v833 = vunpack.c.h.b16 %v224
    %v834 = vunpack.c.l.b16 %v225
    %v835 = vunpack.c.h.b16 %v225
    %v836 = vunpack.c.l.b16 %v226
    %v837 = vunpack.c.h.b16 %v226
    %v838 = vunpack.c.l.b16 %v227
    %v839 = vunpack.c.h.b16 %v227
    %v840 = vunpack.c.l.b16 %v228
    %v841 = vunpack.c.h.b16 %v228
    %v842 = vunpack.c.l.b16 %v229
    %v843 = vunpack.c.h.b16 %v229
    %v844 = vunpack.c.l.b16 %v230
    %v845 = vunpack.c.h.b16 %v230
    %v846 = vunpack.c.l.b16 %v231
    %v847 = vunpack.c.h.b16 %v231
    %v848 = vunpack.c.l.b16 %v232
    %v849 = vunpack.c.h.b16 %v232
    %v850 = vunpack.c.l.b16 %v233
    %v851 = vunpack.c.h.b16 %v233
    %v852 = vunpack.c.l.b16 %v234
    %v853 = vunpack.c.h.b16 %v234
    %v854 = vunpack.c.l.b16 %v235
    %v855 = vunpack.c.h.b16 %v235
    %v856 = vunpack.c.l.b16 %v236
    %v857 = vunpack.c.h.b16 %v236
    %v858 = vunpack.c.l.b16 %v237
    %v859 = vunpack.c.h.b16 %v237
    %v860 = vunpack.c.l.b16 %v238
    %v861 = vunpack.c.h.b16 %v238
    %v862 = vunpack.c.l.b16 %v239
    %v863 = vunpack.c.h.b16 %v239
    %v864 = vunpack.c.l.b16 %v240
    %v865 = vunpack.c.h.b16 %v240
    %v866 = vunpack.c.l.b16 %v241
    %v867 = vunpack.c.h.b16 %v241
    %v868 = vunpack.c.l.b16 %v242
    %v869 = vunpack.c.h.b16 %v242
    %v870 = vunpack.c.l.b16 %v243
    %v871 = vunpack.c.h.b16 %v243
    %v872 = vunpack.c.l.b16 %v244
    %v873 = vunpack.c.h.b16 %v244
    %v874 = vunpack.c.l.b16 %v245
    %v875 = vunpack.c.h.b16 %v245
    %v876 = vunpack.c.l.b16 %v246
    %v877 = vunpack.c.h.b16 %v246
    %v878 = vunpack.c.l.b16 %v247
    %v879 = vunpack.c.h.b16 %v247
    %v880 = vunpack.c.l.b16 %v248
    %v881 = vunpack.c.h.b16 %v248
    %v882 = vunpack.c.l.b16 %v249
    %v883 = vunpack.c.h.b16 %v249
    %v884 = vunpack.c.l.b16 %v250
    %v885 = vunpack.c.h.b16 %v250
    %v886 = vunpack.c.l.b16 %v251
    %v887 = vunpack.c.h.b16 %v251
    %v888 = vunpack.c.l.b16 %v252
    %v889 = vunpack.c.h.b16 %v252
    %v890 = vunpack.c.l.b16 %v253
    %v891 = vunpack.c.h.b16 %v253
    %v892 = vunpack.c.l.b16 %v254
    %v893 = vunpack.c.h.b16 %v254
    %v894 = vunpack.c.l.b16 %v255
    %v895 = vunpack.c.h.b16 %v255
    %v896 = vunpack.c.l.b16 %v256
    %v897 = vunpack.c.h.b16 %v256
    %v898 = vunpack.c.l.b16 %v257
    %v899 = vunpack.c.h.b16 %v257
    %v900 = vunpack.c.l.b16 %v258
    %v901 = vunpack.c.h.b16 %v258
    %v902 = vunpack.c.l.b16 %v259
    %v903 = vunpack.c.h.b16 %v259
    %v904 = vunpack.c.l.b16 %v260
    %v905 = vunpack.c.h.b16 %v260
    %v906 = vunpack.c.l.b16 %v261
    %v907 = vunpack.c.h.b16 %v261
    %v908 = vunpack.c.l.b16 %v262
    %v909 = vunpack.c.h.b16 %v262
    %v910 = vunpack.c.l.b16 %v263
    %v911 = vunpack.c.h.b16 %v263
    %v912 = vunpack.c.l.b16 %v264
    %v913 = vunpack.c.h.b16 %v264
    %v914 = vunpack.c.l.b16 %v265
    %v915 = vunpack.c.h.b16 %v265
    %v916 = vunpack.c.l.b16 %v266
    %v917 = vunpack.c.h.b16 %v266
    %v918 = vunpack.c.l.b16 %v267
    %v919 = vunpack.c.h.b16 %v267
    %v920 = vunpack.c.l.b16 %v268
    %v921 = vunpack.c.h.b16 %v268
    %v922 = vunpack.c.l.b16 %v269
    %v923 = vunpack.c.h.b16 %v269
    %v924 = vunpack.c.l.b16 %v270
    %v925 = vunpack.c.h.b16 %v270
    %v926 = vunpack.c.l.b16 %v271
    %v927 = vunpack.c.h.b16 %v271
    %v928 = vunpack.c.l.b16 %v272
    %v929 = vunpack.c.h.b16 %v272
    %v930 = vunpack.c.l.b16 %v273
    %v931 = vunpack.c.h.b16 %v273
    %v932 = vunpack.c.l.b16 %v274
    %v933 = vunpack.c.h.b16 %v274
    %v934 = vunpack.c.l.b16 %v275
    %v935 = vunpack.c.h.b16 %v275
    %v936 = vunpack.c.l.b16 %v276
    %v937 = vunpack.c.h.b16 %v276
    %v938 = vunpack.c.l.b16 %v277
    %v939 = vunpack.c.h.b16 %v277
    %v940 = vunpack.c.l.b16 %v278
    %v941 = vunpack.c.h.b16 %v278
    %v942 = vunpack.c.l.b16 %v279
    %v943 = vunpack.c.h.b16 %v279
    %v944 = vunpack.c.l.b16 %v280
    %v945 = vunpack.c.h.b16 %v280
    %v946 = vunpack.c.l.b16 %v281
    %v947 = vunpack.c.h.b16 %v281
    %v948 = vunpack.c.l.b16 %v282
    %v949 = vunpack.c.h.b16 %v282
    %v950 = vunpack.c.l.b16 %v283
    %v951 = vunpack.c.h.b16 %v283
    %v952 = vunpack.c.l.b16 %v284
    %v953 = vunpack.c.h.b16 %v284
    %v954 = vunpack.c.l.b16 %v285
    %v955 = vunpack.c.h.b16 %v285
    %v956 = vunpack.c.l.b16 %v286
    %v957 = vunpack.c.h.b16 %v286
    %v958 = vunpack.c.l.b16 %v287
    %v959 = vunpack.c.h.b16 %v287
    %v960 = vunpack.c.l.b16 %v288
    %v961 = vunpack.c.h.b16 %v288
    %v962 = vunpack.c.l.b16 %v289
    %v963 = vunpack.c.h.b16 %v289
    %v964 = vunpack.c.l.b16 %v290
    %v965 = vunpack.c.h.b16 %v290
    %v966 = vunpack.c.l.b16 %v291
    %v967 = vunpack.c.h.b16 %v291
    %v968 = vunpack.c.l.b16 %v292
    %v969 = vunpack.c.h.b16 %v292
    %v970 = vunpack.c.l.b16 %v293
    %v971 = vunpack.c.h.b16 %v293
    %v972 = vunpack.c.l.b16 %v294
    %v973 = vunpack.c.h.b16 %v294
    %v974 = vunpack.c.l.b16 %v295
    %v975 = vunpack.c.h.b16 %v295
    %v976 = vunpack.c.l.b16 %v296
    %v977 = vunpack.c.h.b16 %v296
    %v978 = vunpack.c.l.b16 %v297
    %v979 = vunpack.c.h.b16 %v297
    %v980 = vunpack.c.l.b16 %v298
    %v981 = vunpack.c.h.b16 %v298
    %v982 = vunpack.c.l.b16 %v299
    %v983 = vunpack.c.h.b16 %v299
    %v984 = vunpack.c.l.b16 %v300
    %v985 = vunpack.c.h.b16 %v300
    %v986 = vunpack.c.l.b16 %v301
    %v987 = vunpack.c.h.b16 %v301
    %v988 = vunpack.c.l.b16 %v302
    %v989 = vunpack.c.h.b16 %v302
    %v990 = vunpack.c.l.b16 %v303
    %v991 = vunpack.c.h.b16 %v303
    %v992 = vunpack.c.l.b16 %v304
    %v993 = vunpack.c.h.b16 %v304
    %v994 = vunpack.c.l.b16 %v305
    %v995 = vunpack.c.h.b16 %v305
    %v996 = vunpack.c.l.b16 %v306
    %v997 = vunpack.c.h.b16 %v306
    %v998 = vunpack.c.l.b16 %v307
    %v999 = vunpack.c.h.b16 %v307
    %v1000 = vunpack.c.l.b16 %v308
    %v1001 = vunpack.c.h.b16 %v308
    %v1002 = vunpack.c.l.b16 %v309
    %v1003 = vunpack.c.h.b16 %v309
    %v1004 = vunpack.c.l.b16 %v310
    %v1005 = vunpack.c.h.b16 %v310
    %v1006 = vunpack.c.l.b16 %v311
    %v1007 = vunpack.c.h.b16 %v311
    %v1008 = vunpack.c.l.b16 %v312
    %v1009 = vunpack.c.h.b16 %v312
    %v1010 = vunpack.c.l.b16 %v313
    %v1011 = vunpack.c.h.b16 %v313
    %v1012 = vunpack.c.l.b16 %v314
    %v1013 = vunpack.c.h.b16 %v314
    %v1014 = vunpack.c.l.b16 %v315
    %v1015 = vunpack.c.h.b16 %v315
    %v1016 = vunpack.c.l.b16 %v316
    %v1017 = vunpack.c.h.b16 %v316
    %v1018 = vunpack.c.l.b16 %v317
    %v1019 = vunpack.c.h.b16 %v317
    %v1020 = vunpack.c.l.b16 %v318
    %v1021 = vunpack.c.h.b16 %v318
    %v1022 = vunpack.c.l.b16 %v319
    %v1023 = vunpack.c.h.b16 %v319
    %v1024 = vunpack.c.l.b16 %v320
    %v1025 = vunpack.c.h.b16 %v320
    %v1026 = vunpack.c.l.b16 %v321
    %v1027 = vunpack.c.h.b16 %v321
    %v1028 = vunpack.c.l.b16 %v322
    %v1029 = vunpack.c.h.b16 %v322
    %v1030 = vunpack.c.l.b16 %v323
    %v1031 = vunpack.c.h.b16 %v323
    %v1032 = vunpack.c.l.b16 %v324
    %v1033 = vunpack.c.h.b16 %v324
    %v1034 = vunpack.c.l.b16 %v325
    %v1035 = vunpack.c.h.b16 %v325
    %v1036 = vunpack.c.l.b16 %v326
    %v1037 = vunpack.c.h.b16 %v326
    %v1038 = vunpack.c.l.b16 %v327
    %v1039 = vunpack.c.h.b16 %v327
    %v1040 = vunpack.c.l.b16 %v328
    %v1041 = vunpack.c.h.b16 %v328
    %v1042 = vunpack.c.l.b16 %v329
    %v1043 = vunpack.c.h.b16 %v329
    %v1044 = vunpack.c.l.b16 %v330
    %v1045 = vunpack.c.h.b16 %v330
    %v1046 = vunpack.c.l.b16 %v331
    %v1047 = vunpack.c.h.b16 %v331
    %v1048 = vunpack.c.l.b16 %v332
    %v1049 = vunpack.c.h.b16 %v332
    %v1050 = vunpack.c.l.b16 %v333
    %v1051 = vunpack.c.h.b16 %v333
    %v1052 = vunpack.c.l.b16 %v334
    %v1053 = vunpack.c.h.b16 %v334
    %v1054 = vunpack.c.l.b16 %v335
    %v1055 = vunpack.c.h.b16 %v335
    %v1056 = vunpack.c.l.b16 %v336
    %v1057 = vunpack.c.h.b16 %v336
    %v1058 = vunpack.c.l.b16 %v337
    %v1059 = vunpack.c.h.b16 %v337
    %v1060 = vunpack.c.l.b16 %v338
    %v1061 = vunpack.c.h.b16 %v338
    %v1062 = vunpack.c.l.b16 %v339
    %v1063 = vunpack.c.h.b16 %v339
    %v1064 = vunpack.c.l.b16 %v340
    %v1065 = vunpack.c.h.b16 %v340
    %v1066 = vunpack.c.l.b16 %v341
    %v1067 = vunpack.c.h.b16 %v341
    %v1068 = vunpack.c.l.b16 %v342
    %v1069 = vunpack.c.h.b16 %v342
    %v1070 = vunpack.c.l.b16 %v343
    %v1071 = vunpack.c.h.b16 %v343
    %v1072 = vunpack.c.l.b16 %v344
    %v1073 = vunpack.c.h.b16 %v344
    %v1074 = vunpack.c.l.b16 %v345
    %v1075 = vunpack.c.h.b16 %v345
    %v1076 = vpack.c.b16 %v632, %v628
    %v1077 = vpack.c.b16 %v633, %v629
    %v1078 = vpack.c.b16 %v634, %v630
    %v1079 = vpack.c.b16 %v635, %v631
    %v1080 = vpack.c.b16 %v640, %v636
    %v1081 = vpack.c.b16 %v641, %v637
    %v1082 = vpack.c.b16 %v642, %v638
    %v1083 = vpack.c.b16 %v643, %v639
    %v1084 = vpack.c.b16 %v648, %v644
    %v1085 = vpack.c.b16 %v649, %v645
    %v1086 = vpack.c.b16 %v650, %v646
    %v1087 = vpack.c.b16 %v651, %v647
    %v1088 = vpack.c.b16 %v656, %v652
    %v1089 = vpack.c.b16 %v657, %v653
    %v1090 = vpack.c.b16 %v658, %v654
    %v1091 = vpack.c.b16 %v659, %v655
    %v1092 = vpack.c.b16 %v664, %v660
    %v1093 = vpack.c.b16 %v665, %v661
    %v1094 = vpack.c.b16 %v666, %v662
    %v1095 = vpack.c.b16 %v667, %v663
    %v1096 = vpack.c.b16 %v672, %v668
    %v1097 = vpack.c.b16 %v673, %v669
    %v1098 = vpack.c.b16 %v674, %v670
    %v1099 = vpack.c.b16 %v675, %v671
    %v1100 = vpack.c.b16 %v680, %v676
    %v1101 = vpack.c.b16 %v681, %v677
    %v1102 = vpack.c.b16 %v682, %v678
    %v1103 = vpack.c.b16 %v683, %v679
    %v1104 = vpack.c.b16 %v688, %v684
    %v1105 = vpack.c.b16 %v689, %v685
    %v1106 = vpack.c.b16 %v690, %v686
    %v1107 = vpack.c.b16 %v691, %v687
    %v1108 = vpack.c.b16 %v696, %v692
    %v1109 = vpack.c.b16 %v697, %v693
    %v1110 = vpack.c.b16 %v698, %v694
    %v1111 = vpack.c.b16 %v699, %v695
    %v1112 = vpack.c.b16 %v704, %v700
    %v1113 = vpack.c.b16 %v705, %v701
    %v1114 = vpack.c.b16 %v706, %v702
    %v1115 = vpack.c.b16 %v707, %v703
    %v1116 = vpack.c.b16 %v712, %v708
    %v1117 = vpack.c.b16 %v713, %v709
    %v1118 = vpack.c.b16 %v714, %v710
    %v1119 = vpack.c.b16 %v715, %v711
    %v1120 = vpack.c.b16 %v720, %v716
    %v1121 = vpack.c.b16 %v721, %v717
    %v1122 = vpack.c.b16 %v722, %v718
    %v1123 = vpack.c.b16 %v723, %v719
    %v1124 = vpack.c.b16 %v728, %v724
    %v1125 = vpack.c.b16 %v729, %v725
    %v1126 = vpack.c.b16 %v730, %v726
    %v1127 = vpack.c.b16 %v731, %v727
    %v1128 = vpack.c.b16 %v736, %v732
    %v1129 = vpack.c.b16 %v737, %v733
    %v1130 = vpack.c.b16 %v738, %v734
    %v1131 = vpack.c.b16 %v739, %v735
    %v1132 = vpack.c.b16 %v744, %v740
    %v1133 = vpack.c.b16 %v745, %v741
    %v1134 = vpack.c.b16 %v746, %v742
    %v1135 = vpack.c.b16 %v747, %v743
    %v1136 = vpack.c.b16 %v752, %v748
    %v1137 = vpack.c.b16 %v753, %v749
    %v1138 = vpack.c.b16 %v754, %v750
    %v1139 = vpack.c.b16 %v755, %v751
    %v1140 = vpack.c.b16 %v760, %v756
    %v1141 = vpack.c.b16 %v761, %v757
    %v1142 = vpack.c.b16 %v762, %v758
    %v1143 = vpack.c.b16 %v763, %v759
    %v1144 = vpack.c.b16 %v768, %v764
    %v1145 = vpack.c.b16 %v769, %v765
    %v1146 = vpack.c.b16 %v770, %v766
    %v1147 = vpack.c.b16 %v771, %v767
    %v1148 = vpack.c.b16 %v776, %v772
    %v1149 = vpack.c.b16 %v777, %v773
    %v1150 = vpack.c.b16 %v778, %v774
    %v1151 = vpack.c.b16 %v779, %v775
    %v1152 = vpack.c.b16 %v784, %v780
    %v1153 = vpack.c.b16 %v785, %v781
    %v1154 = vpack.c.b16 %v786, %v782
    %v1155 = vpack.c.b16 %v787, %v783
    %v1156 = vpack.c.b16 %v792, %v788
    %v1157 = vpack.c.b16 %v793, %v789
    %v1158 = vpack.c.b16 %v794, %v790
    %v1159 = vpack.c.b16 %v795, %v791
    %v1160 = vpack.c.b16 %v800, %v796
    %v1161 = vpack.c.b16 %v801, %v797
    %v1162 = vpack.c.b16 %v802, %v798
    %v1163 = vpack.c.b16 %v803, %v799
    %v1164 = vpack.c.b16 %v808, %v804
    %v1165 = vpack.c.b16 %v809, %v805
    %v1166 = vpack.c.b16 %v810, %v806
    %v1167 = vpack.c.b16 %v811, %v807
    %v1168 = vpack.c.b16 %v816, %v812
    %v1169 = vpack.c.b16 %v817, %v813
    %v1170 = vpack.c.b16 %v818, %v814
    %v1171 = vpack.c.b16 %v819, %v815
    %v1172 = vpack.c.b16 %v824, %v820
    %v1173 = vpack.c.b16 %v825, %v821
    %v1174 = vpack.c.b16 %v826, %v822
    %v1175 = vpack.c.b16 %v827, %v823
    %v1176 = vpack.c.b16 %v832, %v828
    %v1177 = vpack.c.b16 %v833, %v829
    %v1178 = vpack.c.b16 %v834, %v830
    %v1179 = vpack.c.b16 %v835, %v831
    %v1180 = vpack.c.b16 %v840, %v836
    %v1181 = vpack.c.b16 %v841, %v837
    %v1182 = vpack.c.b16 %v842, %v838
    %v1183 = vpack.c.b16 %v843, %v839
    %v1184 = vpack.c.b16 %v848, %v844
    %v1185 = vpack.c.b16 %v849, %v845
    %v1186 = vpack.c.b16 %v850, %v846
    %v1187 = vpack.c.b16 %v851, %v847
    %v1188 = vpack.c.b16 %v856, %v852
    %v1189 = vpack.c.b16 %v857, %v853
    %v1190 = vpack.c.b16 %v858, %v854
    %v1191 = vpack.c.b16 %v859, %v855
    %v1192 = vpack.c.b16 %v864, %v860
    %v1193 = vpack.c.b16 %v865, %v861
    %v1194 = vpack.c.b16 %v866, %v862
    %v1195 = vpack.c.b16 %v867, %v863
    %v1196 = vpack.c.b16 %v872, %v868
    %v1197 = vpack.c.b16 %v873, %v869
    %v1198 = vpack.c.b16 %v874, %v870
    %v1199 = vpack.c.b16 %v875, %v871
    %v1200 = vpack.c.b16 %v880, %v876
    %v1201 = vpack.c.b16 %v881, %v877
    %v1202 = vpack.c.b16 %v882, %v878
    %v1203 = vpack.c.b16 %v883, %v879
    %v1204 = vpack.c.b16 %v888, %v884
    %v1205 = vpack.c.b16 %v889, %v885
    %v1206 = vpack.c.b16 %v890, %v886
    %v1207 = vpack.c.b16 %v891, %v887
    %v1208 = vpack.c.b16 %v896, %v892
    %v1209 = vpack.c.b16 %v897, %v893
    %v1210 = vpack.c.b16 %v898, %v894
    %v1211 = vpack.c.b16 %v899, %v895
    %v1212 = vpack.c.b16 %v904, %v900
    %v1213 = vpack.c.b16 %v905, %v901
    %v1214 = vpack.c.b16 %v906, %v902
    %v1215 = vpack.c.b16 %v907, %v903
    %v1216 = vpack.c.b16 %v912, %v908
    %v1217 = vpack.c.b16 %v913, %v909
    %v1218 = vpack.c.b16 %v914, %v910
    %v1219 = vpack.c.b16 %v915, %v911
    %v1220 = vpack.c.b16 %v920, %v916
    %v1221 = vpack.c.b16 %v921, %v917
    %v1222 = vpack.c.b16 %v922, %v918
    %v1223 = vpack.c.b16 %v923, %v919
    %v1224 = vpack.c.b16 %v928, %v924
    %v1225 = vpack.c.b16 %v929, %v925
    %v1226 = vpack.c.b16 %v930, %v926
    %v1227 = vpack.c.b16 %v931, %v927
    %v1228 = vpack.c.b16 %v936, %v932
    %v1229 = vpack.c.b16 %v937, %v933
    %v1230 = vpack.c.b16 %v938, %v934
    %v1231 = vpack.c.b16 %v939, %v935
    %v1232 = vpack.c.b16 %v944, %v940
    %v1233 = vpack.c.b16 %v945, %v941
    %v1234 = vpack.c.b16 %v946, %v942
    %v1235 = vpack.c.b16 %v947, %v943
    %v1236 = vpack.c.b16 %v952, %v948
    %v1237 = vpack.c.b16 %v953, %v949
    %v1238 = vpack.c.b16 %v954, %v950
    %v1239 = vpack.c.b16 %v955, %v951
    %v1240 = vpack.c.b16 %v960, %v956
    %v1241 = vpack.c.b16 %v961, %v957
    %v1242 = vpack.c.b16 %v962, %v958
    %v1243 = vpack.c.b16 %v963, %v959
    %v1244 = vpack.c.b16 %v968, %v964
    %v1245 = vpack.c.b16 %v969, %v965
    %v1246 = vpack.c.b16 %v970, %v966
    %v1247 = vpack.c.b16 %v971, %v967
    %v1248 = vpack.c.b16 %v976, %v972
    %v1249 = vpack.c.b16 %v977, %v973
    %v1250 = vpack.c.b16 %v978, %v974
    %v1251 = vpack.c.b16 %v979, %v975
    %v1252 = vpack.c.b16 %v984, %v980
    %v1253 = vpack.c.b16 %v985, %v981
    %v1254 = vpack.c.b16 %v986, %v982
    %v1255 = vpack.c.b16 %v987, %v983
    %v1256 = vpack.c.b16 %v992, %v988
    %v1257 = vpack.c.b16 %v993, %v989
    %v1258 = vpack.c.b16 %v994, %v990
    %v1259 = vpack.c.b16 %v995, %v991
    %v1260 = vpack.c.b16 %v1000, %v996
    %v1261 = vpack.c.b16 %v1001, %v997
    %v1262 = vpack.c.b16 %v1002, %v998
    %v1263 = vpack.c.b16 %v1003, %v999
    %v1264 = vpack.c.b16 %v1008, %v1004
    %v1265 = vpack.c.b16 %v1009, %v1005
    %v1266 = vpack.c.b16 %v1010, %v1006
    %v1267 = vpack.c.b16 %v1011, %v1007
    %v1268 = vpack.c.b16 %v1016, %v1012
    %v1269 = vpack.c.b16 %v1017, %v1013
    %v1270 = vpack.c.b16 %v1018, %v1014
    %v1271 = vpack.c.b16 %v1019, %v1015
    %v1272 = vpack.c.b16 %v1024, %v1020
    %v1273 = vpack.c.b16 %v1025, %v1021
    %v1274 = vpack.c.b16 %v1026, %v1022
    %v1275 = vpack.c.b16 %v1027, %v1023
    %v1276 = vpack.c.b16 %v1032, %v1028
    %v1277 = vpack.c.b16 %v1033, %v1029
    %v1278 = vpack.c.b16 %v1034, %v1030
    %v1279 = vpack.c.b16 %v1035, %v1031
    %v1280 = vpack.c.b16 %v1040, %v1036
    %v1281 = vpack.c.b16 %v1041, %v1037
    %v1282 = vpack.c.b16 %v1042, %v1038
    %v1283 = vpack.c.b16 %v1043, %v1039
    %v1284 = vpack.c.b16 %v1048, %v1044
    %v1285 = vpack.c.b16 %v1049, %v1045
    %v1286 = vpack.c.b16 %v1050, %v1046
    %v1287 = vpack.c.b16 %v1051, %v1047
    %v1288 = vpack.c.b16 %v1056, %v1052
    %v1289 = vpack.c.b16 %v1057, %v1053
    %v1290 = vpack.c.b16 %v1058, %v1054
    %v1291 = vpack.c.b16 %v1059, %v1055
    %v1292 = vpack.c.b16 %v1064, %v1060
    %v1293 = vpack.c.b16 %v1065, %v1061
    %v1294 = vpack.c.b16 %v1066, %v1062
    %v1295 = vpack.c.b16 %v1067, %v1063
    %v1296 = vpack.c.b16 %v1072, %v1068
    %v1297 = vpack.c.b16 %v1073, %v1069
    %v1298 = vpack.c.b16 %v1074, %v1070
    %v1299 = vpack.c.b16 %v1075, %v1071
    %1524 = vmatprep.subr.bf16.mxu0 %v1105
    %1525 = vmatpush1.bf16.msra.mxu0 %v1104
    %1526 = vmatprep.subr.bf16.mxu0 %v1101
    %1527 = vmatpush1.bf16.msra.mxu0 %v1100
    %1528 = vmatprep.subr.bf16.mxu0 %v1097
    %1529 = vmatpush1.bf16.msra.mxu0 %v1096
    %1530 = vmatprep.subr.bf16.mxu0 %v1093
    %1531 = vmatpush1.bf16.msra.mxu0 %v1092
    %1532 = vmatprep.subr.bf16.mxu0 %v1089
    %1533 = vmatpush1.bf16.msra.mxu0 %v1088
    %1534 = vmatprep.subr.bf16.mxu0 %v1085
    %1535 = vmatpush1.bf16.msra.mxu0 %v1084
    %1536 = vmatprep.subr.bf16.mxu0 %v1081
    %1537 = vmatpush1.bf16.msra.mxu0 %v1080
    %1538 = vmatprep.subr.bf16.mxu0 %v1077
    %1539 = vmatpush1.bf16.msra.mxu0 %v1076
    %1540 = vmatprep.subr.bf16.mxu0 %v1137
    %1541 = vmatpush2.bf16.msra.mxu0 %v1136
    %1542 = vmatprep.subr.bf16.mxu0 %v1133
    %1543 = vmatpush2.bf16.msra.mxu0 %v1132
    %1544 = vmatprep.subr.bf16.mxu0 %v1129
    %1545 = vmatpush2.bf16.msra.mxu0 %v1128
    %1546 = vmatprep.subr.bf16.mxu0 %v1125
    %1547 = vmatpush2.bf16.msra.mxu0 %v1124
    %1548 = vmatprep.subr.bf16.mxu0 %v1121
    %1549 = vmatpush2.bf16.msra.mxu0 %v1120
    %1550 = vmatprep.subr.bf16.mxu0 %v1117
    %1551 = vmatpush2.bf16.msra.mxu0 %v1116
    %1552 = vmatprep.subr.bf16.mxu0 %v1113
    %1553 = vmatpush2.bf16.msra.mxu0 %v1112
    %1554 = vmatprep.subr.bf16.mxu0 %v1109
    %1555 = vmatpush2.bf16.msra.mxu0 %v1108
    %1556 = vmatprep.mubr.bf16.mxu0 %v391
    %1557 = vmatmul.mubr.bf16.gmra.mxu0 %v390
    %v1558 = vpop.f32.mrf.mxu0
    %v1559 = vadd.f32 %v351, %v1558
    %v1560 = vpop.f32.mrf.mxu0
    %v1561 = vadd.f32 %v355, %v1560
    %v1562 = vpop.f32.mrf.mxu0
    %v1563 = vadd.f32 %v351, %v1562
    %v1564 = vpop.f32.mrf.mxu0
    %v1565 = vadd.f32 %v355, %v1564
    %1566 = vdwg.mxu0
    %1567 = vmatprep.subr.bf16.mxu0 %v1169
    %1568 = vmatpush1.bf16.msra.mxu0 %v1168
    %1569 = vmatprep.subr.bf16.mxu0 %v1165
    %1570 = vmatpush1.bf16.msra.mxu0 %v1164
    %1571 = vmatprep.subr.bf16.mxu0 %v1161
    %1572 = vmatpush1.bf16.msra.mxu0 %v1160
    %1573 = vmatprep.subr.bf16.mxu0 %v1157
    %1574 = vmatpush1.bf16.msra.mxu0 %v1156
    %1575 = vmatprep.subr.bf16.mxu0 %v1153
    %1576 = vmatpush1.bf16.msra.mxu0 %v1152
    %1577 = vmatprep.subr.bf16.mxu0 %v1149
    %1578 = vmatpush1.bf16.msra.mxu0 %v1148
    %1579 = vmatprep.subr.bf16.mxu0 %v1145
    %1580 = vmatpush1.bf16.msra.mxu0 %v1144
    %1581 = vmatprep.subr.bf16.mxu0 %v1141
    %1582 = vmatpush1.bf16.msra.mxu0 %v1140
    %1583 = vmatprep.subr.bf16.mxu0 %v1201
    %1584 = vmatpush2.bf16.msra.mxu0 %v1200
    %1585 = vmatprep.subr.bf16.mxu0 %v1197
    %1586 = vmatpush2.bf16.msra.mxu0 %v1196
    %1587 = vmatprep.subr.bf16.mxu0 %v1193
    %1588 = vmatpush2.bf16.msra.mxu0 %v1192
    %1589 = vmatprep.subr.bf16.mxu0 %v1189
    %1590 = vmatpush2.bf16.msra.mxu0 %v1188
    %1591 = vmatprep.subr.bf16.mxu0 %v1185
    %1592 = vmatpush2.bf16.msra.mxu0 %v1184
    %1593 = vmatprep.subr.bf16.mxu0 %v1181
    %1594 = vmatpush2.bf16.msra.mxu0 %v1180
    %1595 = vmatprep.subr.bf16.mxu0 %v1177
    %1596 = vmatpush2.bf16.msra.mxu0 %v1176
    %1597 = vmatprep.subr.bf16.mxu0 %v1173
    %1598 = vmatpush2.bf16.msra.mxu0 %v1172
    %1599 = vmatprep.mubr.bf16.mxu0 %v393
    %1600 = vmatmul.mubr.bf16.gmra.mxu0 %v392
    %v1601 = vpop.f32.mrf.mxu0
    %v1602 = vadd.f32 %v1559, %v1601
    %v1603 = vpop.f32.mrf.mxu0
    %v1604 = vadd.f32 %v1561, %v1603
    %v1605 = vpop.f32.mrf.mxu0
    %v1606 = vadd.f32 %v1563, %v1605
    %v1607 = vpop.f32.mrf.mxu0
    %v1608 = vadd.f32 %v1565, %v1607
    %1609 = vdwg.mxu0
    %1610 = vmatprep.subr.bf16.mxu0 %v1233
    %1611 = vmatpush1.bf16.msra.mxu0 %v1232
    %1612 = vmatprep.subr.bf16.mxu0 %v1229
    %1613 = vmatpush1.bf16.msra.mxu0 %v1228
    %1614 = vmatprep.subr.bf16.mxu0 %v1225
    %1615 = vmatpush1.bf16.msra.mxu0 %v1224
    %1616 = vmatprep.subr.bf16.mxu0 %v1221
    %1617 = vmatpush1.bf16.msra.mxu0 %v1220
    %1618 = vmatprep.subr.bf16.mxu0 %v1217
    %1619 = vmatpush1.bf16.msra.mxu0 %v1216
    %1620 = vmatprep.subr.bf16.mxu0 %v1213
    %1621 = vmatpush1.bf16.msra.mxu0 %v1212
    %1622 = vmatprep.subr.bf16.mxu0 %v1209
    %1623 = vmatpush1.bf16.msra.mxu0 %v1208
    %1624 = vmatprep.subr.bf16.mxu0 %v1205
    %1625 = vmatpush1.bf16.msra.mxu0 %v1204
    %1626 = vmatprep.subr.bf16.mxu0 %v1265
    %1627 = vmatpush2.bf16.msra.mxu0 %v1264
    %1628 = vmatprep.subr.bf16.mxu0 %v1261
    %1629 = vmatpush2.bf16.msra.mxu0 %v1260
    %1630 = vmatprep.subr.bf16.mxu0 %v1257
    %1631 = vmatpush2.bf16.msra.mxu0 %v1256
    %1632 = vmatprep.subr.bf16.mxu0 %v1253
    %1633 = vmatpush2.bf16.msra.mxu0 %v1252
    %1634 = vmatprep.subr.bf16.mxu0 %v1249
    %1635 = vmatpush2.bf16.msra.mxu0 %v1248
    %1636 = vmatprep.subr.bf16.mxu0 %v1245
    %1637 = vmatpush2.bf16.msra.mxu0 %v1244
    %1638 = vmatprep.subr.bf16.mxu0 %v1241
    %1639 = vmatpush2.bf16.msra.mxu0 %v1240
    %1640 = vmatprep.subr.bf16.mxu0 %v1237
    %1641 = vmatpush2.bf16.msra.mxu0 %v1236
    %1642 = vmatprep.mubr.bf16.mxu0 %v395
    %1643 = vmatmul.mubr.bf16.gmra.mxu0 %v394
    %v1644 = vpop.f32.mrf.mxu0
    %v1645 = vadd.f32 %v1602, %v1644
    %v1646 = vpop.f32.mrf.mxu0
    %v1647 = vadd.f32 %v1604, %v1646
    %v1648 = vpop.f32.mrf.mxu0
    %v1649 = vadd.f32 %v1606, %v1648
    %v1650 = vpop.f32.mrf.mxu0
    %v1651 = vadd.f32 %v1608, %v1650
    %1652 = vdwg.mxu0
    %1653 = vmatprep.subr.bf16.mxu0 %v1297
    %1654 = vmatpush1.bf16.msra.mxu0 %v1296
    %1655 = vmatprep.subr.bf16.mxu0 %v1293
    %1656 = vmatpush1.bf16.msra.mxu0 %v1292
    %1657 = vmatprep.subr.bf16.mxu0 %v1289
    %1658 = vmatpush1.bf16.msra.mxu0 %v1288
    %1659 = vmatprep.subr.bf16.mxu0 %v1285
    %1660 = vmatpush1.bf16.msra.mxu0 %v1284
    %1661 = vmatprep.subr.bf16.mxu0 %v1281
    %1662 = vmatpush1.bf16.msra.mxu0 %v1280
    %1663 = vmatprep.subr.bf16.mxu0 %v1277
    %1664 = vmatpush1.bf16.msra.mxu0 %v1276
    %1665 = vmatprep.subr.bf16.mxu0 %v1273
    %1666 = vmatpush1.bf16.msra.mxu0 %v1272
    %1667 = vmatprep.subr.bf16.mxu0 %v1269
    %1668 = vmatpush1.bf16.msra.mxu0 %v1268
    %1669 = vmatprep.subr.bf16.mxu0 0
    %1670 = vmatpush2.bf16.msra.mxu0 0
    %1671 = vmatprep.subr.bf16.mxu0 0
    %1672 = vmatpush2.bf16.msra.mxu0 0
    %1673 = vmatprep.subr.bf16.mxu0 0
    %1674 = vmatpush2.bf16.msra.mxu0 0
    %1675 = vmatprep.subr.bf16.mxu0 0
    %1676 = vmatpush2.bf16.msra.mxu0 0
    %1677 = vmatprep.subr.bf16.mxu0 0
    %1678 = vmatpush2.bf16.msra.mxu0 0
    %1679 = vmatprep.subr.bf16.mxu0 0
    %1680 = vmatpush2.bf16.msra.mxu0 0
    %1681 = vmatprep.subr.bf16.mxu0 0
    %1682 = vmatpush2.bf16.msra.mxu0 0
    %1683 = vmatprep.subr.bf16.mxu0 0
    %1684 = vmatpush2.bf16.msra.mxu0 0
    %1685 = vmatprep.mubr.bf16.mxu0 0
    %1686 = vmatmul.mubr.bf16.gmra.mxu0 %v396
    %v1687 = vpop.f32.mrf.mxu0
    %v1688 = vadd.f32 %v1645, %v1687
    %v1689 = vpop.f32.mrf.mxu0
    %v1690 = vadd.f32 %v1647, %v1689
    %v1691 = vpop.f32.mrf.mxu0
    %v1692 = vadd.f32 %v1649, %v1691
    %v1693 = vpop.f32.mrf.mxu0
    %v1694 = vadd.f32 %v1651, %v1693
    %1695 = vdwg.mxu0
    %1696 = vmatprep.subr.bf16.mxu0 %v1107
    %1697 = vmatpush1.bf16.msra.mxu0 %v1106
    %1698 = vmatprep.subr.bf16.mxu0 %v1103
    %1699 = vmatpush1.bf16.msra.mxu0 %v1102
    %1700 = vmatprep.subr.bf16.mxu0 %v1099
    %1701 = vmatpush1.bf16.msra.mxu0 %v1098
    %1702 = vmatprep.subr.bf16.mxu0 %v1095
    %1703 = vmatpush1.bf16.msra.mxu0 %v1094
    %1704 = vmatprep.subr.bf16.mxu0 %v1091
    %1705 = vmatpush1.bf16.msra.mxu0 %v1090
    %1706 = vmatprep.subr.bf16.mxu0 %v1087
    %1707 = vmatpush1.bf16.msra.mxu0 %v1086
    %1708 = vmatprep.subr.bf16.mxu0 %v1083
    %1709 = vmatpush1.bf16.msra.mxu0 %v1082
    %1710 = vmatprep.subr.bf16.mxu0 %v1079
    %1711 = vmatpush1.bf16.msra.mxu0 %v1078
    %1712 = vmatprep.subr.bf16.mxu0 %v1139
    %1713 = vmatpush2.bf16.msra.mxu0 %v1138
    %1714 = vmatprep.subr.bf16.mxu0 %v1135
    %1715 = vmatpush2.bf16.msra.mxu0 %v1134
    %1716 = vmatprep.subr.bf16.mxu0 %v1131
    %1717 = vmatpush2.bf16.msra.mxu0 %v1130
    %1718 = vmatprep.subr.bf16.mxu0 %v1127
    %1719 = vmatpush2.bf16.msra.mxu0 %v1126
    %1720 = vmatprep.subr.bf16.mxu0 %v1123
    %1721 = vmatpush2.bf16.msra.mxu0 %v1122
    %1722 = vmatprep.subr.bf16.mxu0 %v1119
    %1723 = vmatpush2.bf16.msra.mxu0 %v1118
    %1724 = vmatprep.subr.bf16.mxu0 %v1115
    %1725 = vmatpush2.bf16.msra.mxu0 %v1114
    %1726 = vmatprep.subr.bf16.mxu0 %v1111
    %1727 = vmatpush2.bf16.msra.mxu0 %v1110
    %1728 = vmatprep.mubr.bf16.mxu0 %v391
    %1729 = vmatmul.mubr.bf16.gmra.mxu0 %v390
    %v1730 = vpop.f32.mrf.mxu0
    %v1731 = vadd.f32 %v359, %v1730
    %v1732 = vpop.f32.mrf.mxu0
    %v1733 = vadd.f32 %v363, %v1732
    %v1734 = vpop.f32.mrf.mxu0
    %v1735 = vadd.f32 %v359, %v1734
    %v1736 = vpop.f32.mrf.mxu0
    %v1737 = vadd.f32 %v363, %v1736
    %1738 = vdwg.mxu0
    %1739 = vmatprep.subr.bf16.mxu0 %v1171
    %1740 = vmatpush1.bf16.msra.mxu0 %v1170
    %1741 = vmatprep.subr.bf16.mxu0 %v1167
    %1742 = vmatpush1.bf16.msra.mxu0 %v1166
    %1743 = vmatprep.subr.bf16.mxu0 %v1163
    %1744 = vmatpush1.bf16.msra.mxu0 %v1162
    %1745 = vmatprep.subr.bf16.mxu0 %v1159
    %1746 = vmatpush1.bf16.msra.mxu0 %v1158
    %1747 = vmatprep.subr.bf16.mxu0 %v1155
    %1748 = vmatpush1.bf16.msra.mxu0 %v1154
    %1749 = vmatprep.subr.bf16.mxu0 %v1151
    %1750 = vmatpush1.bf16.msra.mxu0 %v1150
    %1751 = vmatprep.subr.bf16.mxu0 %v1147
    %1752 = vmatpush1.bf16.msra.mxu0 %v1146
    %1753 = vmatprep.subr.bf16.mxu0 %v1143
    %1754 = vmatpush1.bf16.msra.mxu0 %v1142
    %1755 = vmatprep.subr.bf16.mxu0 %v1203
    %1756 = vmatpush2.bf16.msra.mxu0 %v1202
    %1757 = vmatprep.subr.bf16.mxu0 %v1199
    %1758 = vmatpush2.bf16.msra.mxu0 %v1198
    %1759 = vmatprep.subr.bf16.mxu0 %v1195
    %1760 = vmatpush2.bf16.msra.mxu0 %v1194
    %1761 = vmatprep.subr.bf16.mxu0 %v1191
    %1762 = vmatpush2.bf16.msra.mxu0 %v1190
    %1763 = vmatprep.subr.bf16.mxu0 %v1187
    %1764 = vmatpush2.bf16.msra.mxu0 %v1186
    %1765 = vmatprep.subr.bf16.mxu0 %v1183
    %1766 = vmatpush2.bf16.msra.mxu0 %v1182
    %1767 = vmatprep.subr.bf16.mxu0 %v1179
    %1768 = vmatpush2.bf16.msra.mxu0 %v1178
    %1769 = vmatprep.subr.bf16.mxu0 %v1175
    %1770 = vmatpush2.bf16.msra.mxu0 %v1174
    %1771 = vmatprep.mubr.bf16.mxu0 %v393
    %1772 = vmatmul.mubr.bf16.gmra.mxu0 %v392
    %v1773 = vpop.f32.mrf.mxu0
    %v1774 = vadd.f32 %v1731, %v1773
    %v1775 = vpop.f32.mrf.mxu0
    %v1776 = vadd.f32 %v1733, %v1775
    %v1777 = vpop.f32.mrf.mxu0
    %v1778 = vadd.f32 %v1735, %v1777
    %v1779 = vpop.f32.mrf.mxu0
    %v1780 = vadd.f32 %v1737, %v1779
    %1781 = vdwg.mxu0
    %1782 = vmatprep.subr.bf16.mxu0 %v1235
    %1783 = vmatpush1.bf16.msra.mxu0 %v1234
    %1784 = vmatprep.subr.bf16.mxu0 %v1231
    %1785 = vmatpush1.bf16.msra.mxu0 %v1230
    %1786 = vmatprep.subr.bf16.mxu0 %v1227
    %1787 = vmatpush1.bf16.msra.mxu0 %v1226
    %1788 = vmatprep.subr.bf16.mxu0 %v1223
    %1789 = vmatpush1.bf16.msra.mxu0 %v1222
    %1790 = vmatprep.subr.bf16.mxu0 %v1219
    %1791 = vmatpush1.bf16.msra.mxu0 %v1218
    %1792 = vmatprep.subr.bf16.mxu0 %v1215
    %1793 = vmatpush1.bf16.msra.mxu0 %v1214
    %1794 = vmatprep.subr.bf16.mxu0 %v1211
    %1795 = vmatpush1.bf16.msra.mxu0 %v1210
    %1796 = vmatprep.subr.bf16.mxu0 %v1207
    %1797 = vmatpush1.bf16.msra.mxu0 %v1206
    %1798 = vmatprep.subr.bf16.mxu0 %v1267
    %1799 = vmatpush2.bf16.msra.mxu0 %v1266
    %1800 = vmatprep.subr.bf16.mxu0 %v1263
    %1801 = vmatpush2.bf16.msra.mxu0 %v1262
    %1802 = vmatprep.subr.bf16.mxu0 %v1259
    %1803 = vmatpush2.bf16.msra.mxu0 %v1258
    %1804 = vmatprep.subr.bf16.mxu0 %v1255
    %1805 = vmatpush2.bf16.msra.mxu0 %v1254
    %1806 = vmatprep.subr.bf16.mxu0 %v1251
    %1807 = vmatpush2.bf16.msra.mxu0 %v1250
    %1808 = vmatprep.subr.bf16.mxu0 %v1247
    %1809 = vmatpush2.bf16.msra.mxu0 %v1246
    %1810 = vmatprep.subr.bf16.mxu0 %v1243
    %1811 = vmatpush2.bf16.msra.mxu0 %v1242
    %1812 = vmatprep.subr.bf16.mxu0 %v1239
    %1813 = vmatpush2.bf16.msra.mxu0 %v1238
    %1814 = vmatprep.mubr.bf16.mxu0 %v395
    %1815 = vmatmul.mubr.bf16.gmra.mxu0 %v394
    %v1816 = vpop.f32.mrf.mxu0
    %v1817 = vadd.f32 %v1774, %v1816
    %v1818 = vpop.f32.mrf.mxu0
    %v1819 = vadd.f32 %v1776, %v1818
    %v1820 = vpop.f32.mrf.mxu0
    %v1821 = vadd.f32 %v1778, %v1820
    %v1822 = vpop.f32.mrf.mxu0
    %v1823 = vadd.f32 %v1780, %v1822
    %1824 = vdwg.mxu0
    %1825 = vmatprep.subr.bf16.mxu0 %v1299
    %1826 = vmatpush1.bf16.msra.mxu0 %v1298
    %1827 = vmatprep.subr.bf16.mxu0 %v1295
    %1828 = vmatpush1.bf16.msra.mxu0 %v1294
    %1829 = vmatprep.subr.bf16.mxu0 %v1291
    %1830 = vmatpush1.bf16.msra.mxu0 %v1290
    %1831 = vmatprep.subr.bf16.mxu0 %v1287
    %1832 = vmatpush1.bf16.msra.mxu0 %v1286
    %1833 = vmatprep.subr.bf16.mxu0 %v1283
    %1834 = vmatpush1.bf16.msra.mxu0 %v1282
    %1835 = vmatprep.subr.bf16.mxu0 %v1279
    %1836 = vmatpush1.bf16.msra.mxu0 %v1278
    %1837 = vmatprep.subr.bf16.mxu0 %v1275
    %1838 = vmatpush1.bf16.msra.mxu0 %v1274
    %1839 = vmatprep.subr.bf16.mxu0 %v1271
    %1840 = vmatpush1.bf16.msra.mxu0 %v1270
    %1841 = vmatprep.subr.bf16.mxu0 0
    %1842 = vmatpush2.bf16.msra.mxu0 0
    %1843 = vmatprep.subr.bf16.mxu0 0
    %1844 = vmatpush2.bf16.msra.mxu0 0
    %1845 = vmatprep.subr.bf16.mxu0 0
    %1846 = vmatpush2.bf16.msra.mxu0 0
    %1847 = vmatprep.subr.bf16.mxu0 0
    %1848 = vmatpush2.bf16.msra.mxu0 0
    %1849 = vmatprep.subr.bf16.mxu0 0
    %1850 = vmatpush2.bf16.msra.mxu0 0
    %1851 = vmatprep.subr.bf16.mxu0 0
    %1852 = vmatpush2.bf16.msra.mxu0 0
    %1853 = vmatprep.subr.bf16.mxu0 0
    %1854 = vmatpush2.bf16.msra.mxu0 0
    %1855 = vmatprep.subr.bf16.mxu0 0
    %1856 = vmatpush2.bf16.msra.mxu0 0
    %1857 = vmatprep.mubr.bf16.mxu0 0
    %1858 = vmatmul.mubr.bf16.gmra.mxu0 %v396
    %v1859 = vpop.f32.mrf.mxu0
    %v1860 = vadd.f32 %v1817, %v1859
    %v1861 = vpop.f32.mrf.mxu0
    %v1862 = vadd.f32 %v1819, %v1861
    %v1863 = vpop.f32.mrf.mxu0
    %v1864 = vadd.f32 %v1821, %v1863
    %v1865 = vpop.f32.mrf.mxu0
    %v1866 = vadd.f32 %v1823, %v1865
    %1867 = vdwg.mxu0
    %v1868 = vpack.c.bf16 %v1692, %v1688
    %v1869 = vpack.c.bf16 %v1694, %v1690
    %v1870 = vpack.c.bf16 %v1864, %v1860
    %v1871 = vpack.c.bf16 %v1866, %v1862
    %v1872 = vld [vmem:[#allocation8] sm:$0xff]
    %v1873 = vld [vmem:[#allocation8 + $0x8] sm:$0xff]
    %v1874 = vld [vmem:[#allocation8 + $0x10] sm:$0xff]
    %v1875 = vld [vmem:[#allocation8 + $0x18] sm:$0xff]
    %v1876 = vld [vmem:[#allocation8 + $0x20] sm:$0xff]
    %v1877 = vld [vmem:[#allocation8 + $0x28] sm:$0xff]
    %v1878 = vld [vmem:[#allocation8 + $0x30] sm:$0xff]
    %v1879 = vld [vmem:[#allocation8 + $0x38] sm:$0xff]
    %v1880 = vld [vmem:[#allocation8 + $0x40] sm:$0xff]
    %v1881 = vld [vmem:[#allocation8 + $0x48] sm:$0xff]
    %v1882 = vld [vmem:[#allocation8 + $0x50] sm:$0xff]
    %v1883 = vld [vmem:[#allocation8 + $0x58] sm:$0xff]
    %v1884 = vld [vmem:[#allocation8 + $0x60] sm:$0xff]
    %v1885 = vld [vmem:[#allocation8 + $0x68] sm:$0xff]
    %v1886 = vld [vmem:[#allocation8 + $0x70] sm:$0xff]
    %v1887 = vld [vmem:[#allocation8 + $0x78] sm:$0xff]
    %v1888 = vld [vmem:[#allocation8 + $0x80] sm:$0xff]
    %v1889 = vld [vmem:[#allocation8 + $0x88] sm:$0xff]
    %v1890 = vld [vmem:[#allocation8 + $0x90] sm:$0xff]
    %v1891 = vld [vmem:[#allocation8 + $0x98] sm:$0xff]
    %v1892 = vld [vmem:[#allocation8 + $0xa0] sm:$0xff]
    %v1893 = vld [vmem:[#allocation8 + $0xa8] sm:$0xff]
    %v1894 = vld [vmem:[#allocation8 + $0xb0] sm:$0xff]
    %v1895 = vld [vmem:[#allocation8 + $0xb8] sm:$0xff]
    %v1896 = vld [vmem:[#allocation8 + $0xc0] sm:$0xff]
    %v1897 = vld [vmem:[#allocation8 + $0xc8] sm:$0xff]
    %v1898 = vld [vmem:[#allocation8 + $0xd0] sm:$0xff]
    %v1899 = vld [vmem:[#allocation8 + $0xd8] sm:$0xff]
    %v1900 = vld [vmem:[#allocation8 + $0xe0] sm:$0xff]
    %v1901 = vld [vmem:[#allocation8 + $0xe8] sm:$0xff]
    %v1902 = vld [vmem:[#allocation8 + $0xf0] sm:$0xff]
    %v1903 = vld [vmem:[#allocation8 + $0xf8] sm:$0xff]
    %v1904 = vld [vmem:[#allocation8 + $0x100] sm:$0xff]
    %v1905 = vld [vmem:[#allocation8 + $0x108] sm:$0xff]
    %v1906 = vld [vmem:[#allocation8 + $0x110] sm:$0xff]
    %v1907 = vld [vmem:[#allocation8 + $0x118] sm:$0xff]
    %v1908 = vld [vmem:[#allocation8 + $0x120] sm:$0xff]
    %v1909 = vld [vmem:[#allocation8 + $0x128] sm:$0xff]
    %v1910 = vld [vmem:[#allocation8 + $0x130] sm:$0xff]
    %v1911 = vld [vmem:[#allocation8 + $0x138] sm:$0xff]
    %v1912 = vld [vmem:[#allocation8 + $0x140] sm:$0xff]
    %v1913 = vld [vmem:[#allocation8 + $0x148] sm:$0xff]
    %v1914 = vld [vmem:[#allocation8 + $0x150] sm:$0xff]
    %v1915 = vld [vmem:[#allocation8 + $0x158] sm:$0xff]
    %v1916 = vld [vmem:[#allocation8 + $0x160] sm:$0xff]
    %v1917 = vld [vmem:[#allocation8 + $0x168] sm:$0xff]
    %v1918 = vld [vmem:[#allocation8 + $0x170] sm:$0xff]
    %v1919 = vld [vmem:[#allocation8 + $0x178] sm:$0xff]
    %v1920 = vld [vmem:[#allocation8 + $0x180] sm:$0xff]
    %v1921 = vld [vmem:[#allocation8 + $0x188] sm:$0xff]
    %v1922 = vld [vmem:[#allocation8 + $0x190] sm:$0xff]
    %v1923 = vld [vmem:[#allocation8 + $0x198] sm:$0xff]
    %v1924 = vld [vmem:[#allocation8 + $0x1a0] sm:$0xff]
    %v1925 = vld [vmem:[#allocation8 + $0x1a8] sm:$0xff]
    %v1926 = vld [vmem:[#allocation8 + $0x1b0] sm:$0xff]
    %v1927 = vld [vmem:[#allocation8 + $0x1b8] sm:$0xff]
    %v1928 = vld [vmem:[#allocation8 + $0x1c0] sm:$0xff]
    %v1929 = vld [vmem:[#allocation8 + $0x1c8] sm:$0xff]
    %v1930 = vld [vmem:[#allocation8 + $0x1d0] sm:$0xff]
    %v1931 = vld [vmem:[#allocation8 + $0x1d8] sm:$0xff]
    %v1932 = vld [vmem:[#allocation8 + $0x1e0] sm:$0xff]
    %v1933 = vld [vmem:[#allocation8 + $0x1e8] sm:$0xff]
    %v1934 = vld [vmem:[#allocation8 + $0x1f0] sm:$0xff]
    %v1935 = vld [vmem:[#allocation8 + $0x1f8] sm:$0xff]
    %v1936 = vld [vmem:[#allocation8 + $0x200] sm:$0xff]
    %v1937 = vld [vmem:[#allocation8 + $0x208] sm:$0xff]
    %v1938 = vld [vmem:[#allocation8 + $0x210] sm:$0xff]
    %v1939 = vld [vmem:[#allocation8 + $0x218] sm:$0xff]
    %v1940 = vld [vmem:[#allocation8 + $0x220] sm:$0xff]
    %v1941 = vld [vmem:[#allocation8 + $0x228] sm:$0xff]
    %v1942 = vld [vmem:[#allocation8 + $0x230] sm:$0xff]
    %v1943 = vld [vmem:[#allocation8 + $0x238] sm:$0xff]
    %v1944 = vld [vmem:[#allocation8 + $0x240] sm:$0xff]
    %v1945 = vld [vmem:[#allocation8 + $0x248] sm:$0xff]
    %v1946 = vld [vmem:[#allocation8 + $0x250] sm:$0xff]
    %v1947 = vld [vmem:[#allocation8 + $0x258] sm:$0xff]
    %v1948 = vld [vmem:[#allocation8 + $0x260] sm:$0xff]
    %v1949 = vld [vmem:[#allocation8 + $0x268] sm:$0xff]
    %v1950 = vld [vmem:[#allocation8 + $0x270] sm:$0xff]
    %v1951 = vld [vmem:[#allocation8 + $0x278] sm:$0xff]
    %v1952 = vld [vmem:[#allocation8 + $0x280] sm:$0xff]
    %v1953 = vld [vmem:[#allocation8 + $0x288] sm:$0xff]
    %v1954 = vld [vmem:[#allocation8 + $0x290] sm:$0xff]
    %v1955 = vld [vmem:[#allocation8 + $0x298] sm:$0xff]
    %v1956 = vld [vmem:[#allocation8 + $0x2a0] sm:$0xff]
    %v1957 = vld [vmem:[#allocation8 + $0x2a8] sm:$0xff]
    %v1958 = vld [vmem:[#allocation8 + $0x2b0] sm:$0xff]
    %v1959 = vld [vmem:[#allocation8 + $0x2b8] sm:$0xff]
    %v1960 = vld [vmem:[#allocation8 + $0x2c0] sm:$0xff]
    %v1961 = vld [vmem:[#allocation8 + $0x2c8] sm:$0xff]
    %v1962 = vld [vmem:[#allocation8 + $0x2d0] sm:$0xff]
    %v1963 = vld [vmem:[#allocation8 + $0x2d8] sm:$0xff]
    %v1964 = vld [vmem:[#allocation8 + $0x2e0] sm:$0xff]
    %v1965 = vld [vmem:[#allocation8 + $0x2e8] sm:$0xff]
    %v1966 = vld [vmem:[#allocation8 + $0x2f0] sm:$0xff]
    %v1967 = vld [vmem:[#allocation8 + $0x2f8] sm:$0xff]
    %v1968 = vld [vmem:[#allocation8 + $0x300] sm:$0xff]
    %v1969 = vld [vmem:[#allocation8 + $0x308] sm:$0xff]
    %v1970 = vld [vmem:[#allocation8 + $0x310] sm:$0xff]
    %v1971 = vld [vmem:[#allocation8 + $0x318] sm:$0xff]
    %v1972 = vld [vmem:[#allocation8 + $0x320] sm:$0xff]
    %v1973 = vld [vmem:[#allocation8 + $0x328] sm:$0xff]
    %v1974 = vld [vmem:[#allocation8 + $0x330] sm:$0xff]
    %v1975 = vld [vmem:[#allocation8 + $0x338] sm:$0xff]
    %v1976 = vld [vmem:[#allocation8 + $0x340] sm:$0xff]
    %v1977 = vld [vmem:[#allocation8 + $0x348] sm:$0xff]
    %v1978 = vld [vmem:[#allocation8 + $0x350] sm:$0xff]
    %v1979 = vld [vmem:[#allocation8 + $0x358] sm:$0xff]
    %v1980 = vld [vmem:[#allocation8 + $0x360] sm:$0xff]
    %v1981 = vld [vmem:[#allocation8 + $0x368] sm:$0xff]
    %v1982 = vld [vmem:[#allocation8 + $0x370] sm:$0xff]
    %v1983 = vld [vmem:[#allocation8 + $0x378] sm:$0xff]
    %v1984 = vld [vmem:[#allocation8 + $0x380] sm:$0xff]
    %v1985 = vld [vmem:[#allocation8 + $0x388] sm:$0xff]
    %v1986 = vld [vmem:[#allocation8 + $0x390] sm:$0xff]
    %v1987 = vld [vmem:[#allocation8 + $0x398] sm:$0xff]
    %v1988 = vld [vmem:[#allocation8 + $0x3a0] sm:$0xff]
    %v1989 = vld [vmem:[#allocation8 + $0x3a8] sm:$0xff]
    %v1990 = vld [vmem:[#allocation8 + $0x3b0] sm:$0xff]
    %v1991 = vld [vmem:[#allocation8 + $0x3b8] sm:$0xff]
    %v1992 = vld [vmem:[#allocation8 + $0x3c0] sm:$0xff]
    %v1993 = vld [vmem:[#allocation8 + $0x3c8] sm:$0xff]
    %v1994 = vld [vmem:[#allocation8 + $0x3d0] sm:$0xff]
    %v1995 = vld [vmem:[#allocation8 + $0x3d8] sm:$0xff]
    %v1996 = vld [vmem:[#allocation8 + $0x3e0] sm:$0xff]
    %v1997 = vld [vmem:[#allocation8 + $0x3e8] sm:$0xff]
    %v1998 = vld [vmem:[#allocation8 + $0x3f0] sm:$0xff]
    %v1999 = vld [vmem:[#allocation8 + $0x3f8] sm:$0xff]
    %v2000 = vld [vmem:[%s4] sm:$0xf]
    %v2002 = vlaneseq
    %v2003 = vshrl.u32 %v2002, 7
    %v2004 = vsub.s32 0, %v2003
    %v2005 = vrot.slane %v2000, %v2004
    %v2006 = vlaneseq
    %v2007 = vshrl.u32 %v2006, 7
    %v2008 = vsub.s32 1, %v2007
    %v2009 = vrot.slane %v2000, %v2008
    %v2010 = vlaneseq
    %v2011 = vshrl.u32 %v2010, 7
    %v2012 = vsub.s32 2, %v2011
    %v2013 = vrot.slane %v2000, %v2012
    %v2014 = vlaneseq
    %v2015 = vshrl.u32 %v2014, 7
    %v2016 = vsub.s32 3, %v2015
    %v2017 = vrot.slane %v2000, %v2016
    %v2150 = vunpack.c.l.b16 %v1872
    %v2151 = vunpack.c.h.b16 %v1872
    %v2152 = vunpack.c.l.b16 %v1873
    %v2153 = vunpack.c.h.b16 %v1873
    %v2154 = vunpack.c.l.b16 %v1874
    %v2155 = vunpack.c.h.b16 %v1874
    %v2156 = vunpack.c.l.b16 %v1875
    %v2157 = vunpack.c.h.b16 %v1875
    %v2158 = vunpack.c.l.b16 %v1876
    %v2159 = vunpack.c.h.b16 %v1876
    %v2160 = vunpack.c.l.b16 %v1877
    %v2161 = vunpack.c.h.b16 %v1877
    %v2162 = vunpack.c.l.b16 %v1878
    %v2163 = vunpack.c.h.b16 %v1878
    %v2164 = vunpack.c.l.b16 %v1879
    %v2165 = vunpack.c.h.b16 %v1879
    %v2166 = vunpack.c.l.b16 %v1880
    %v2167 = vunpack.c.h.b16 %v1880
    %v2168 = vunpack.c.l.b16 %v1881
    %v2169 = vunpack.c.h.b16 %v1881
    %v2170 = vunpack.c.l.b16 %v1882
    %v2171 = vunpack.c.h.b16 %v1882
    %v2172 = vunpack.c.l.b16 %v1883
    %v2173 = vunpack.c.h.b16 %v1883
    %v2174 = vunpack.c.l.b16 %v1884
    %v2175 = vunpack.c.h.b16 %v1884
    %v2176 = vunpack.c.l.b16 %v1885
    %v2177 = vunpack.c.h.b16 %v1885
    %v2178 = vunpack.c.l.b16 %v1886
    %v2179 = vunpack.c.h.b16 %v1886
    %v2180 = vunpack.c.l.b16 %v1887
    %v2181 = vunpack.c.h.b16 %v1887
    %v2182 = vunpack.c.l.b16 %v1888
    %v2183 = vunpack.c.h.b16 %v1888
    %v2184 = vunpack.c.l.b16 %v1889
    %v2185 = vunpack.c.h.b16 %v1889
    %v2186 = vunpack.c.l.b16 %v1890
    %v2187 = vunpack.c.h.b16 %v1890
    %v2188 = vunpack.c.l.b16 %v1891
    %v2189 = vunpack.c.h.b16 %v1891
    %v2190 = vunpack.c.l.b16 %v1892
    %v2191 = vunpack.c.h.b16 %v1892
    %v2192 = vunpack.c.l.b16 %v1893
    %v2193 = vunpack.c.h.b16 %v1893
    %v2194 = vunpack.c.l.b16 %v1894
    %v2195 = vunpack.c.h.b16 %v1894
    %v2196 = vunpack.c.l.b16 %v1895
    %v2197 = vunpack.c.h.b16 %v1895
    %v2198 = vunpack.c.l.b16 %v1896
    %v2199 = vunpack.c.h.b16 %v1896
    %v2200 = vunpack.c.l.b16 %v1897
    %v2201 = vunpack.c.h.b16 %v1897
    %v2202 = vunpack.c.l.b16 %v1898
    %v2203 = vunpack.c.h.b16 %v1898
    %v2204 = vunpack.c.l.b16 %v1899
    %v2205 = vunpack.c.h.b16 %v1899
    %v2206 = vunpack.c.l.b16 %v1900
    %v2207 = vunpack.c.h.b16 %v1900
    %v2208 = vunpack.c.l.b16 %v1901
    %v2209 = vunpack.c.h.b16 %v1901
    %v2210 = vunpack.c.l.b16 %v1902
    %v2211 = vunpack.c.h.b16 %v1902
    %v2212 = vunpack.c.l.b16 %v1903
    %v2213 = vunpack.c.h.b16 %v1903
    %v2214 = vunpack.c.l.b16 %v1904
    %v2215 = vunpack.c.h.b16 %v1904
    %v2216 = vunpack.c.l.b16 %v1905
    %v2217 = vunpack.c.h.b16 %v1905
    %v2218 = vunpack.c.l.b16 %v1906
    %v2219 = vunpack.c.h.b16 %v1906
    %v2220 = vunpack.c.l.b16 %v1907
    %v2221 = vunpack.c.h.b16 %v1907
    %v2222 = vunpack.c.l.b16 %v1908
    %v2223 = vunpack.c.h.b16 %v1908
    %v2224 = vunpack.c.l.b16 %v1909
    %v2225 = vunpack.c.h.b16 %v1909
    %v2226 = vunpack.c.l.b16 %v1910
    %v2227 = vunpack.c.h.b16 %v1910
    %v2228 = vunpack.c.l.b16 %v1911
    %v2229 = vunpack.c.h.b16 %v1911
    %v2230 = vunpack.c.l.b16 %v1912
    %v2231 = vunpack.c.h.b16 %v1912
    %v2232 = vunpack.c.l.b16 %v1913
    %v2233 = vunpack.c.h.b16 %v1913
    %v2234 = vunpack.c.l.b16 %v1914
    %v2235 = vunpack.c.h.b16 %v1914
    %v2236 = vunpack.c.l.b16 %v1915
    %v2237 = vunpack.c.h.b16 %v1915
    %v2238 = vunpack.c.l.b16 %v1916
    %v2239 = vunpack.c.h.b16 %v1916
    %v2240 = vunpack.c.l.b16 %v1917
    %v2241 = vunpack.c.h.b16 %v1917
    %v2242 = vunpack.c.l.b16 %v1918
    %v2243 = vunpack.c.h.b16 %v1918
    %v2244 = vunpack.c.l.b16 %v1919
    %v2245 = vunpack.c.h.b16 %v1919
    %v2246 = vunpack.c.l.b16 %v1920
    %v2247 = vunpack.c.h.b16 %v1920
    %v2248 = vunpack.c.l.b16 %v1921
    %v2249 = vunpack.c.h.b16 %v1921
    %v2250 = vunpack.c.l.b16 %v1922
    %v2251 = vunpack.c.h.b16 %v1922
    %v2252 = vunpack.c.l.b16 %v1923
    %v2253 = vunpack.c.h.b16 %v1923
    %v2254 = vunpack.c.l.b16 %v1924
    %v2255 = vunpack.c.h.b16 %v1924
    %v2256 = vunpack.c.l.b16 %v1925
    %v2257 = vunpack.c.h.b16 %v1925
    %v2258 = vunpack.c.l.b16 %v1926
    %v2259 = vunpack.c.h.b16 %v1926
    %v2260 = vunpack.c.l.b16 %v1927
    %v2261 = vunpack.c.h.b16 %v1927
    %v2262 = vunpack.c.l.b16 %v1928
    %v2263 = vunpack.c.h.b16 %v1928
    %v2264 = vunpack.c.l.b16 %v1929
    %v2265 = vunpack.c.h.b16 %v1929
    %v2266 = vunpack.c.l.b16 %v1930
    %v2267 = vunpack.c.h.b16 %v1930
    %v2268 = vunpack.c.l.b16 %v1931
    %v2269 = vunpack.c.h.b16 %v1931
    %v2270 = vunpack.c.l.b16 %v1932
    %v2271 = vunpack.c.h.b16 %v1932
    %v2272 = vunpack.c.l.b16 %v1933
    %v2273 = vunpack.c.h.b16 %v1933
    %v2274 = vunpack.c.l.b16 %v1934
    %v2275 = vunpack.c.h.b16 %v1934
    %v2276 = vunpack.c.l.b16 %v1935
    %v2277 = vunpack.c.h.b16 %v1935
    %v2278 = vunpack.c.l.b16 %v1936
    %v2279 = vunpack.c.h.b16 %v1936
    %v2280 = vunpack.c.l.b16 %v1937
    %v2281 = vunpack.c.h.b16 %v1937
    %v2282 = vunpack.c.l.b16 %v1938
    %v2283 = vunpack.c.h.b16 %v1938
    %v2284 = vunpack.c.l.b16 %v1939
    %v2285 = vunpack.c.h.b16 %v1939
    %v2286 = vunpack.c.l.b16 %v1940
    %v2287 = vunpack.c.h.b16 %v1940
    %v2288 = vunpack.c.l.b16 %v1941
    %v2289 = vunpack.c.h.b16 %v1941
    %v2290 = vunpack.c.l.b16 %v1942
    %v2291 = vunpack.c.h.b16 %v1942
    %v2292 = vunpack.c.l.b16 %v1943
    %v2293 = vunpack.c.h.b16 %v1943
    %v2294 = vunpack.c.l.b16 %v1944
    %v2295 = vunpack.c.h.b16 %v1944
    %v2296 = vunpack.c.l.b16 %v1945
    %v2297 = vunpack.c.h.b16 %v1945
    %v2298 = vunpack.c.l.b16 %v1946
    %v2299 = vunpack.c.h.b16 %v1946
    %v2300 = vunpack.c.l.b16 %v1947
    %v2301 = vunpack.c.h.b16 %v1947
    %v2302 = vunpack.c.l.b16 %v1948
    %v2303 = vunpack.c.h.b16 %v1948
    %v2304 = vunpack.c.l.b16 %v1949
    %v2305 = vunpack.c.h.b16 %v1949
    %v2306 = vunpack.c.l.b16 %v1950
    %v2307 = vunpack.c.h.b16 %v1950
    %v2308 = vunpack.c.l.b16 %v1951
    %v2309 = vunpack.c.h.b16 %v1951
    %v2310 = vunpack.c.l.b16 %v1952
    %v2311 = vunpack.c.h.b16 %v1952
    %v2312 = vunpack.c.l.b16 %v1953
    %v2313 = vunpack.c.h.b16 %v1953
    %v2314 = vunpack.c.l.b16 %v1954
    %v2315 = vunpack.c.h.b16 %v1954
    %v2316 = vunpack.c.l.b16 %v1955
    %v2317 = vunpack.c.h.b16 %v1955
    %v2318 = vunpack.c.l.b16 %v1956
    %v2319 = vunpack.c.h.b16 %v1956
    %v2320 = vunpack.c.l.b16 %v1957
    %v2321 = vunpack.c.h.b16 %v1957
    %v2322 = vunpack.c.l.b16 %v1958
    %v2323 = vunpack.c.h.b16 %v1958
    %v2324 = vunpack.c.l.b16 %v1959
    %v2325 = vunpack.c.h.b16 %v1959
    %v2326 = vunpack.c.l.b16 %v1960
    %v2327 = vunpack.c.h.b16 %v1960
    %v2328 = vunpack.c.l.b16 %v1961
    %v2329 = vunpack.c.h.b16 %v1961
    %v2330 = vunpack.c.l.b16 %v1962
    %v2331 = vunpack.c.h.b16 %v1962
    %v2332 = vunpack.c.l.b16 %v1963
    %v2333 = vunpack.c.h.b16 %v1963
    %v2334 = vunpack.c.l.b16 %v1964
    %v2335 = vunpack.c.h.b16 %v1964
    %v2336 = vunpack.c.l.b16 %v1965
    %v2337 = vunpack.c.h.b16 %v1965
    %v2338 = vunpack.c.l.b16 %v1966
    %v2339 = vunpack.c.h.b16 %v1966
    %v2340 = vunpack.c.l.b16 %v1967
    %v2341 = vunpack.c.h.b16 %v1967
    %v2342 = vunpack.c.l.b16 %v1968
    %v2343 = vunpack.c.h.b16 %v1968
    %v2344 = vunpack.c.l.b16 %v1969
    %v2345 = vunpack.c.h.b16 %v1969
    %v2346 = vunpack.c.l.b16 %v1970
    %v2347 = vunpack.c.h.b16 %v1970
    %v2348 = vunpack.c.l.b16 %v1971
    %v2349 = vunpack.c.h.b16 %v1971
    %v2350 = vunpack.c.l.b16 %v1972
    %v2351 = vunpack.c.h.b16 %v1972
    %v2352 = vunpack.c.l.b16 %v1973
    %v2353 = vunpack.c.h.b16 %v1973
    %v2354 = vunpack.c.l.b16 %v1974
    %v2355 = vunpack.c.h.b16 %v1974
    %v2356 = vunpack.c.l.b16 %v1975
    %v2357 = vunpack.c.h.b16 %v1975
    %v2358 = vunpack.c.l.b16 %v1976
    %v2359 = vunpack.c.h.b16 %v1976
    %v2360 = vunpack.c.l.b16 %v1977
    %v2361 = vunpack.c.h.b16 %v1977
    %v2362 = vunpack.c.l.b16 %v1978
    %v2363 = vunpack.c.h.b16 %v1978
    %v2364 = vunpack.c.l.b16 %v1979
    %v2365 = vunpack.c.h.b16 %v1979
    %v2366 = vunpack.c.l.b16 %v1980
    %v2367 = vunpack.c.h.b16 %v1980
    %v2368 = vunpack.c.l.b16 %v1981
    %v2369 = vunpack.c.h.b16 %v1981
    %v2370 = vunpack.c.l.b16 %v1982
    %v2371 = vunpack.c.h.b16 %v1982
    %v2372 = vunpack.c.l.b16 %v1983
    %v2373 = vunpack.c.h.b16 %v1983
    %v2374 = vunpack.c.l.b16 %v1984
    %v2375 = vunpack.c.h.b16 %v1984
    %v2376 = vunpack.c.l.b16 %v1985
    %v2377 = vunpack.c.h.b16 %v1985
    %v2378 = vunpack.c.l.b16 %v1986
    %v2379 = vunpack.c.h.b16 %v1986
    %v2380 = vunpack.c.l.b16 %v1987
    %v2381 = vunpack.c.h.b16 %v1987
    %v2382 = vunpack.c.l.b16 %v1988
    %v2383 = vunpack.c.h.b16 %v1988
    %v2384 = vunpack.c.l.b16 %v1989
    %v2385 = vunpack.c.h.b16 %v1989
    %v2386 = vunpack.c.l.b16 %v1990
    %v2387 = vunpack.c.h.b16 %v1990
    %v2388 = vunpack.c.l.b16 %v1991
    %v2389 = vunpack.c.h.b16 %v1991
    %v2390 = vunpack.c.l.b16 %v1992
    %v2391 = vunpack.c.h.b16 %v1992
    %v2392 = vunpack.c.l.b16 %v1993
    %v2393 = vunpack.c.h.b16 %v1993
    %v2394 = vunpack.c.l.b16 %v1994
    %v2395 = vunpack.c.h.b16 %v1994
    %v2396 = vunpack.c.l.b16 %v1995
    %v2397 = vunpack.c.h.b16 %v1995
    %v2398 = vunpack.c.l.b16 %v1996
    %v2399 = vunpack.c.h.b16 %v1996
    %v2400 = vunpack.c.l.b16 %v1997
    %v2401 = vunpack.c.h.b16 %v1997
    %v2402 = vunpack.c.l.b16 %v1998
    %v2403 = vunpack.c.h.b16 %v1998
    %v2404 = vunpack.c.l.b16 %v1999
    %v2405 = vunpack.c.h.b16 %v1999
    %v2406 = vpack.c.b16 %v2154, %v2150
    %v2407 = vpack.c.b16 %v2155, %v2151
    %v2408 = vpack.c.b16 %v2156, %v2152
    %v2409 = vpack.c.b16 %v2157, %v2153
    %v2410 = vpack.c.b16 %v2162, %v2158
    %v2411 = vpack.c.b16 %v2163, %v2159
    %v2412 = vpack.c.b16 %v2164, %v2160
    %v2413 = vpack.c.b16 %v2165, %v2161
    %v2414 = vpack.c.b16 %v2170, %v2166
    %v2415 = vpack.c.b16 %v2171, %v2167
    %v2416 = vpack.c.b16 %v2172, %v2168
    %v2417 = vpack.c.b16 %v2173, %v2169
    %v2418 = vpack.c.b16 %v2178, %v2174
    %v2419 = vpack.c.b16 %v2179, %v2175
    %v2420 = vpack.c.b16 %v2180, %v2176
    %v2421 = vpack.c.b16 %v2181, %v2177
    %v2422 = vpack.c.b16 %v2186, %v2182
    %v2423 = vpack.c.b16 %v2187, %v2183
    %v2424 = vpack.c.b16 %v2188, %v2184
    %v2425 = vpack.c.b16 %v2189, %v2185
    %v2426 = vpack.c.b16 %v2194, %v2190
    %v2427 = vpack.c.b16 %v2195, %v2191
    %v2428 = vpack.c.b16 %v2196, %v2192
    %v2429 = vpack.c.b16 %v2197, %v2193
    %v2430 = vpack.c.b16 %v2202, %v2198
    %v2431 = vpack.c.b16 %v2203, %v2199
    %v2432 = vpack.c.b16 %v2204, %v2200
    %v2433 = vpack.c.b16 %v2205, %v2201
    %v2434 = vpack.c.b16 %v2210, %v2206
    %v2435 = vpack.c.b16 %v2211, %v2207
    %v2436 = vpack.c.b16 %v2212, %v2208
    %v2437 = vpack.c.b16 %v2213, %v2209
    %v2438 = vpack.c.b16 %v2218, %v2214
    %v2439 = vpack.c.b16 %v2219, %v2215
    %v2440 = vpack.c.b16 %v2220, %v2216
    %v2441 = vpack.c.b16 %v2221, %v2217
    %v2442 = vpack.c.b16 %v2226, %v2222
    %v2443 = vpack.c.b16 %v2227, %v2223
    %v2444 = vpack.c.b16 %v2228, %v2224
    %v2445 = vpack.c.b16 %v2229, %v2225
    %v2446 = vpack.c.b16 %v2234, %v2230
    %v2447 = vpack.c.b16 %v2235, %v2231
    %v2448 = vpack.c.b16 %v2236, %v2232
    %v2449 = vpack.c.b16 %v2237, %v2233
    %v2450 = vpack.c.b16 %v2242, %v2238
    %v2451 = vpack.c.b16 %v2243, %v2239
    %v2452 = vpack.c.b16 %v2244, %v2240
    %v2453 = vpack.c.b16 %v2245, %v2241
    %v2454 = vpack.c.b16 %v2250, %v2246
    %v2455 = vpack.c.b16 %v2251, %v2247
    %v2456 = vpack.c.b16 %v2252, %v2248
    %v2457 = vpack.c.b16 %v2253, %v2249
    %v2458 = vpack.c.b16 %v2258, %v2254
    %v2459 = vpack.c.b16 %v2259, %v2255
    %v2460 = vpack.c.b16 %v2260, %v2256
    %v2461 = vpack.c.b16 %v2261, %v2257
    %v2462 = vpack.c.b16 %v2266, %v2262
    %v2463 = vpack.c.b16 %v2267, %v2263
    %v2464 = vpack.c.b16 %v2268, %v2264
    %v2465 = vpack.c.b16 %v2269, %v2265
    %v2466 = vpack.c.b16 %v2274, %v2270
    %v2467 = vpack.c.b16 %v2275, %v2271
    %v2468 = vpack.c.b16 %v2276, %v2272
    %v2469 = vpack.c.b16 %v2277, %v2273
    %v2470 = vpack.c.b16 %v2282, %v2278
    %v2471 = vpack.c.b16 %v2283, %v2279
    %v2472 = vpack.c.b16 %v2284, %v2280
    %v2473 = vpack.c.b16 %v2285, %v2281
    %v2474 = vpack.c.b16 %v2290, %v2286
    %v2475 = vpack.c.b16 %v2291, %v2287
    %v2476 = vpack.c.b16 %v2292, %v2288
    %v2477 = vpack.c.b16 %v2293, %v2289
    %v2478 = vpack.c.b16 %v2298, %v2294
    %v2479 = vpack.c.b16 %v2299, %v2295
    %v2480 = vpack.c.b16 %v2300, %v2296
    %v2481 = vpack.c.b16 %v2301, %v2297
    %v2482 = vpack.c.b16 %v2306, %v2302
    %v2483 = vpack.c.b16 %v2307, %v2303
    %v2484 = vpack.c.b16 %v2308, %v2304
    %v2485 = vpack.c.b16 %v2309, %v2305
    %v2486 = vpack.c.b16 %v2314, %v2310
    %v2487 = vpack.c.b16 %v2315, %v2311
    %v2488 = vpack.c.b16 %v2316, %v2312
    %v2489 = vpack.c.b16 %v2317, %v2313
    %v2490 = vpack.c.b16 %v2322, %v2318
    %v2491 = vpack.c.b16 %v2323, %v2319
    %v2492 = vpack.c.b16 %v2324, %v2320
    %v2493 = vpack.c.b16 %v2325, %v2321
    %v2494 = vpack.c.b16 %v2330, %v2326
    %v2495 = vpack.c.b16 %v2331, %v2327
    %v2496 = vpack.c.b16 %v2332, %v2328
    %v2497 = vpack.c.b16 %v2333, %v2329
    %v2498 = vpack.c.b16 %v2338, %v2334
    %v2499 = vpack.c.b16 %v2339, %v2335
    %v2500 = vpack.c.b16 %v2340, %v2336
    %v2501 = vpack.c.b16 %v2341, %v2337
    %v2502 = vpack.c.b16 %v2346, %v2342
    %v2503 = vpack.c.b16 %v2347, %v2343
    %v2504 = vpack.c.b16 %v2348, %v2344
    %v2505 = vpack.c.b16 %v2349, %v2345
    %v2506 = vpack.c.b16 %v2354, %v2350
    %v2507 = vpack.c.b16 %v2355, %v2351
    %v2508 = vpack.c.b16 %v2356, %v2352
    %v2509 = vpack.c.b16 %v2357, %v2353
    %v2510 = vpack.c.b16 %v2362, %v2358
    %v2511 = vpack.c.b16 %v2363, %v2359
    %v2512 = vpack.c.b16 %v2364, %v2360
    %v2513 = vpack.c.b16 %v2365, %v2361
    %v2514 = vpack.c.b16 %v2370, %v2366
    %v2515 = vpack.c.b16 %v2371, %v2367
    %v2516 = vpack.c.b16 %v2372, %v2368
    %v2517 = vpack.c.b16 %v2373, %v2369
    %v2518 = vpack.c.b16 %v2378, %v2374
    %v2519 = vpack.c.b16 %v2379, %v2375
    %v2520 = vpack.c.b16 %v2380, %v2376
    %v2521 = vpack.c.b16 %v2381, %v2377
    %v2522 = vpack.c.b16 %v2386, %v2382
    %v2523 = vpack.c.b16 %v2387, %v2383
    %v2524 = vpack.c.b16 %v2388, %v2384
    %v2525 = vpack.c.b16 %v2389, %v2385
    %v2526 = vpack.c.b16 %v2394, %v2390
    %v2527 = vpack.c.b16 %v2395, %v2391
    %v2528 = vpack.c.b16 %v2396, %v2392
    %v2529 = vpack.c.b16 %v2397, %v2393
    %v2530 = vpack.c.b16 %v2402, %v2398
    %v2531 = vpack.c.b16 %v2403, %v2399
    %v2532 = vpack.c.b16 %v2404, %v2400
    %v2533 = vpack.c.b16 %v2405, %v2401
    %2662 = vmatprep.subr.bf16.mxu0 %v2435
    %2663 = vmatpush1.bf16.msra.mxu0 %v2434
    %2664 = vmatprep.subr.bf16.mxu0 %v2431
    %2665 = vmatpush1.bf16.msra.mxu0 %v2430
    %2666 = vmatprep.subr.bf16.mxu0 %v2427
    %2667 = vmatpush1.bf16.msra.mxu0 %v2426
    %2668 = vmatprep.subr.bf16.mxu0 %v2423
    %2669 = vmatpush1.bf16.msra.mxu0 %v2422
    %2670 = vmatprep.subr.bf16.mxu0 %v2419
    %2671 = vmatpush1.bf16.msra.mxu0 %v2418
    %2672 = vmatprep.subr.bf16.mxu0 %v2415
    %2673 = vmatpush1.bf16.msra.mxu0 %v2414
    %2674 = vmatprep.subr.bf16.mxu0 %v2411
    %2675 = vmatpush1.bf16.msra.mxu0 %v2410
    %2676 = vmatprep.subr.bf16.mxu0 %v2407
    %2677 = vmatpush1.bf16.msra.mxu0 %v2406
    %2678 = vmatprep.subr.bf16.mxu0 %v2467
    %2679 = vmatpush2.bf16.msra.mxu0 %v2466
    %2680 = vmatprep.subr.bf16.mxu0 %v2463
    %2681 = vmatpush2.bf16.msra.mxu0 %v2462
    %2682 = vmatprep.subr.bf16.mxu0 %v2459
    %2683 = vmatpush2.bf16.msra.mxu0 %v2458
    %2684 = vmatprep.subr.bf16.mxu0 %v2455
    %2685 = vmatpush2.bf16.msra.mxu0 %v2454
    %2686 = vmatprep.subr.bf16.mxu0 %v2451
    %2687 = vmatpush2.bf16.msra.mxu0 %v2450
    %2688 = vmatprep.subr.bf16.mxu0 %v2447
    %2689 = vmatpush2.bf16.msra.mxu0 %v2446
    %2690 = vmatprep.subr.bf16.mxu0 %v2443
    %2691 = vmatpush2.bf16.msra.mxu0 %v2442
    %2692 = vmatprep.subr.bf16.mxu0 %v2439
    %2693 = vmatpush2.bf16.msra.mxu0 %v2438
    %2694 = vmatprep.mubr.bf16.mxu0 %v1869
    %2695 = vmatmul.mubr.bf16.gmra.mxu0 %v1868
    %v2696 = vpop.f32.mrf.mxu0
    %v2697 = vadd.f32 %v2005, %v2696
    %v2698 = vpop.f32.mrf.mxu0
    %v2699 = vadd.f32 %v2009, %v2698
    %v2700 = vpop.f32.mrf.mxu0
    %v2701 = vadd.f32 %v2005, %v2700
    %v2702 = vpop.f32.mrf.mxu0
    %v2703 = vadd.f32 %v2009, %v2702
    %2704 = vdwg.mxu0
    %2705 = vmatprep.subr.bf16.mxu0 %v2499
    %2706 = vmatpush1.bf16.msra.mxu0 %v2498
    %2707 = vmatprep.subr.bf16.mxu0 %v2495
    %2708 = vmatpush1.bf16.msra.mxu0 %v2494
    %2709 = vmatprep.subr.bf16.mxu0 %v2491
    %2710 = vmatpush1.bf16.msra.mxu0 %v2490
    %2711 = vmatprep.subr.bf16.mxu0 %v2487
    %2712 = vmatpush1.bf16.msra.mxu0 %v2486
    %2713 = vmatprep.subr.bf16.mxu0 %v2483
    %2714 = vmatpush1.bf16.msra.mxu0 %v2482
    %2715 = vmatprep.subr.bf16.mxu0 %v2479
    %2716 = vmatpush1.bf16.msra.mxu0 %v2478
    %2717 = vmatprep.subr.bf16.mxu0 %v2475
    %2718 = vmatpush1.bf16.msra.mxu0 %v2474
    %2719 = vmatprep.subr.bf16.mxu0 %v2471
    %2720 = vmatpush1.bf16.msra.mxu0 %v2470
    %2721 = vmatprep.subr.bf16.mxu0 %v2531
    %2722 = vmatpush2.bf16.msra.mxu0 %v2530
    %2723 = vmatprep.subr.bf16.mxu0 %v2527
    %2724 = vmatpush2.bf16.msra.mxu0 %v2526
    %2725 = vmatprep.subr.bf16.mxu0 %v2523
    %2726 = vmatpush2.bf16.msra.mxu0 %v2522
    %2727 = vmatprep.subr.bf16.mxu0 %v2519
    %2728 = vmatpush2.bf16.msra.mxu0 %v2518
    %2729 = vmatprep.subr.bf16.mxu0 %v2515
    %2730 = vmatpush2.bf16.msra.mxu0 %v2514
    %2731 = vmatprep.subr.bf16.mxu0 %v2511
    %2732 = vmatpush2.bf16.msra.mxu0 %v2510
    %2733 = vmatprep.subr.bf16.mxu0 %v2507
    %2734 = vmatpush2.bf16.msra.mxu0 %v2506
    %2735 = vmatprep.subr.bf16.mxu0 %v2503
    %2736 = vmatpush2.bf16.msra.mxu0 %v2502
    %2737 = vmatprep.mubr.bf16.mxu0 %v1871
    %2738 = vmatmul.mubr.bf16.gmra.mxu0 %v1870
    %v2739 = vpop.f32.mrf.mxu0
    %v2740 = vadd.f32 %v2697, %v2739
    %v2741 = vpop.f32.mrf.mxu0
    %v2742 = vadd.f32 %v2699, %v2741
    %v2743 = vpop.f32.mrf.mxu0
    %v2744 = vadd.f32 %v2701, %v2743
    %v2745 = vpop.f32.mrf.mxu0
    %v2746 = vadd.f32 %v2703, %v2745
    %2747 = vdwg.mxu0
    %2748 = vmatprep.subr.bf16.mxu0 %v2437
    %2749 = vmatpush1.bf16.msra.mxu0 %v2436
    %2750 = vmatprep.subr.bf16.mxu0 %v2433
    %2751 = vmatpush1.bf16.msra.mxu0 %v2432
    %2752 = vmatprep.subr.bf16.mxu0 %v2429
    %2753 = vmatpush1.bf16.msra.mxu0 %v2428
    %2754 = vmatprep.subr.bf16.mxu0 %v2425
    %2755 = vmatpush1.bf16.msra.mxu0 %v2424
    %2756 = vmatprep.subr.bf16.mxu0 %v2421
    %2757 = vmatpush1.bf16.msra.mxu0 %v2420
    %2758 = vmatprep.subr.bf16.mxu0 %v2417
    %2759 = vmatpush1.bf16.msra.mxu0 %v2416
    %2760 = vmatprep.subr.bf16.mxu0 %v2413
    %2761 = vmatpush1.bf16.msra.mxu0 %v2412
    %2762 = vmatprep.subr.bf16.mxu0 %v2409
    %2763 = vmatpush1.bf16.msra.mxu0 %v2408
    %2764 = vmatprep.subr.bf16.mxu0 %v2469
    %2765 = vmatpush2.bf16.msra.mxu0 %v2468
    %2766 = vmatprep.subr.bf16.mxu0 %v2465
    %2767 = vmatpush2.bf16.msra.mxu0 %v2464
    %2768 = vmatprep.subr.bf16.mxu0 %v2461
    %2769 = vmatpush2.bf16.msra.mxu0 %v2460
    %2770 = vmatprep.subr.bf16.mxu0 %v2457
    %2771 = vmatpush2.bf16.msra.mxu0 %v2456
    %2772 = vmatprep.subr.bf16.mxu0 %v2453
    %2773 = vmatpush2.bf16.msra.mxu0 %v2452
    %2774 = vmatprep.subr.bf16.mxu0 %v2449
    %2775 = vmatpush2.bf16.msra.mxu0 %v2448
    %2776 = vmatprep.subr.bf16.mxu0 %v2445
    %2777 = vmatpush2.bf16.msra.mxu0 %v2444
    %2778 = vmatprep.subr.bf16.mxu0 %v2441
    %2779 = vmatpush2.bf16.msra.mxu0 %v2440
    %2780 = vmatprep.mubr.bf16.mxu0 %v1869
    %2781 = vmatmul.mubr.bf16.gmra.mxu0 %v1868
    %v2782 = vpop.f32.mrf.mxu0
    %v2783 = vadd.f32 %v2013, %v2782
    %v2784 = vpop.f32.mrf.mxu0
    %v2785 = vadd.f32 %v2017, %v2784
    %v2786 = vpop.f32.mrf.mxu0
    %v2787 = vadd.f32 %v2013, %v2786
    %v2788 = vpop.f32.mrf.mxu0
    %v2789 = vadd.f32 %v2017, %v2788
    %2790 = vdwg.mxu0
    %2791 = vmatprep.subr.bf16.mxu0 %v2501
    %2792 = vmatpush1.bf16.msra.mxu0 %v2500
    %2793 = vmatprep.subr.bf16.mxu0 %v2497
    %2794 = vmatpush1.bf16.msra.mxu0 %v2496
    %2795 = vmatprep.subr.bf16.mxu0 %v2493
    %2796 = vmatpush1.bf16.msra.mxu0 %v2492
    %2797 = vmatprep.subr.bf16.mxu0 %v2489
    %2798 = vmatpush1.bf16.msra.mxu0 %v2488
    %2799 = vmatprep.subr.bf16.mxu0 %v2485
    %2800 = vmatpush1.bf16.msra.mxu0 %v2484
    %2801 = vmatprep.subr.bf16.mxu0 %v2481
    %2802 = vmatpush1.bf16.msra.mxu0 %v2480
    %2803 = vmatprep.subr.bf16.mxu0 %v2477
    %2804 = vmatpush1.bf16.msra.mxu0 %v2476
    %2805 = vmatprep.subr.bf16.mxu0 %v2473
    %2806 = vmatpush1.bf16.msra.mxu0 %v2472
    %2807 = vmatprep.subr.bf16.mxu0 %v2533
    %2808 = vmatpush2.bf16.msra.mxu0 %v2532
    %2809 = vmatprep.subr.bf16.mxu0 %v2529
    %2810 = vmatpush2.bf16.msra.mxu0 %v2528
    %2811 = vmatprep.subr.bf16.mxu0 %v2525
    %2812 = vmatpush2.bf16.msra.mxu0 %v2524
    %2813 = vmatprep.subr.bf16.mxu0 %v2521
    %2814 = vmatpush2.bf16.msra.mxu0 %v2520
    %2815 = vmatprep.subr.bf16.mxu0 %v2517
    %2816 = vmatpush2.bf16.msra.mxu0 %v2516
    %2817 = vmatprep.subr.bf16.mxu0 %v2513
    %2818 = vmatpush2.bf16.msra.mxu0 %v2512
    %2819 = vmatprep.subr.bf16.mxu0 %v2509
    %2820 = vmatpush2.bf16.msra.mxu0 %v2508
    %2821 = vmatprep.subr.bf16.mxu0 %v2505
    %2822 = vmatpush2.bf16.msra.mxu0 %v2504
    %2823 = vmatprep.mubr.bf16.mxu0 %v1871
    %2824 = vmatmul.mubr.bf16.gmra.mxu0 %v1870
    %v2825 = vpop.f32.mrf.mxu0
    %v2826 = vadd.f32 %v2783, %v2825
    %v2827 = vpop.f32.mrf.mxu0
    %v2828 = vadd.f32 %v2785, %v2827
    %v2829 = vpop.f32.mrf.mxu0
    %v2830 = vadd.f32 %v2787, %v2829
    %v2831 = vpop.f32.mrf.mxu0
    %v2832 = vadd.f32 %v2789, %v2831
    %2833 = vdwg.mxu0
    %v2834 = vpack.c.bf16 %v2744, %v2740
    %v2835 = vpack.c.bf16 %v2746, %v2742
    %v2836 = vpack.c.bf16 %v2830, %v2826
    %v2837 = vpack.c.bf16 %v2832, %v2828
    %v2838 = vld [vmem:[#allocation10] sm:$0xff]
    %v2839 = vld [vmem:[#allocation10 + $0x8] sm:$0xff]
    %v2840 = vld [vmem:[#allocation10 + $0x10] sm:$0xff]
    %v2841 = vld [vmem:[#allocation10 + $0x18] sm:$0xff]
    %v2842 = vld [vmem:[#allocation10 + $0x20] sm:$0xff]
    %v2843 = vld [vmem:[#allocation10 + $0x28] sm:$0xff]
    %v2844 = vld [vmem:[#allocation10 + $0x30] sm:$0xff]
    %v2845 = vld [vmem:[#allocation10 + $0x38] sm:$0xff]
    %v2846 = vld [vmem:[#allocation10 + $0x40] sm:$0xff]
    %v2847 = vld [vmem:[#allocation10 + $0x48] sm:$0xff]
    %v2848 = vld [vmem:[#allocation10 + $0x50] sm:$0xff]
    %v2849 = vld [vmem:[#allocation10 + $0x58] sm:$0xff]
    %v2850 = vld [vmem:[#allocation10 + $0x60] sm:$0xff]
    %v2851 = vld [vmem:[#allocation10 + $0x68] sm:$0xff]
    %v2852 = vld [vmem:[#allocation10 + $0x70] sm:$0xff]
    %v2853 = vld [vmem:[#allocation10 + $0x78] sm:$0xff]
    %v2854 = vld [vmem:[#allocation10 + $0x80] sm:$0xff]
    %v2855 = vld [vmem:[#allocation10 + $0x88] sm:$0xff]
    %v2856 = vld [vmem:[#allocation10 + $0x90] sm:$0xff]
    %v2857 = vld [vmem:[#allocation10 + $0x98] sm:$0xff]
    %v2858 = vld [vmem:[#allocation10 + $0xa0] sm:$0xff]
    %v2859 = vld [vmem:[#allocation10 + $0xa8] sm:$0xff]
    %v2860 = vld [vmem:[#allocation10 + $0xb0] sm:$0xff]
    %v2861 = vld [vmem:[#allocation10 + $0xb8] sm:$0xff]
    %v2862 = vld [vmem:[#allocation10 + $0xc0] sm:$0xff]
    %v2863 = vld [vmem:[#allocation10 + $0xc8] sm:$0xff]
    %v2864 = vld [vmem:[#allocation10 + $0xd0] sm:$0xff]
    %v2865 = vld [vmem:[#allocation10 + $0xd8] sm:$0xff]
    %v2866 = vld [vmem:[#allocation10 + $0xe0] sm:$0xff]
    %v2867 = vld [vmem:[#allocation10 + $0xe8] sm:$0xff]
    %v2868 = vld [vmem:[#allocation10 + $0xf0] sm:$0xff]
    %v2869 = vld [vmem:[#allocation10 + $0xf8] sm:$0xff]
    %v2870 = vld [vmem:[#allocation10 + $0x100] sm:$0xff]
    %v2871 = vld [vmem:[#allocation10 + $0x108] sm:$0xff]
    %v2872 = vld [vmem:[#allocation10 + $0x110] sm:$0xff]
    %v2873 = vld [vmem:[#allocation10 + $0x118] sm:$0xff]
    %v2874 = vld [vmem:[#allocation10 + $0x120] sm:$0xff]
    %v2875 = vld [vmem:[#allocation10 + $0x128] sm:$0xff]
    %v2876 = vld [vmem:[#allocation10 + $0x130] sm:$0xff]
    %v2877 = vld [vmem:[#allocation10 + $0x138] sm:$0xff]
    %v2878 = vld [vmem:[#allocation10 + $0x140] sm:$0xff]
    %v2879 = vld [vmem:[#allocation10 + $0x148] sm:$0xff]
    %v2880 = vld [vmem:[#allocation10 + $0x150] sm:$0xff]
    %v2881 = vld [vmem:[#allocation10 + $0x158] sm:$0xff]
    %v2882 = vld [vmem:[#allocation10 + $0x160] sm:$0xff]
    %v2883 = vld [vmem:[#allocation10 + $0x168] sm:$0xff]
    %v2884 = vld [vmem:[#allocation10 + $0x170] sm:$0xff]
    %v2885 = vld [vmem:[#allocation10 + $0x178] sm:$0xff]
    %v2886 = vld [vmem:[#allocation10 + $0x180] sm:$0xff]
    %v2887 = vld [vmem:[#allocation10 + $0x188] sm:$0xff]
    %v2888 = vld [vmem:[#allocation10 + $0x190] sm:$0xff]
    %v2889 = vld [vmem:[#allocation10 + $0x198] sm:$0xff]
    %v2890 = vld [vmem:[#allocation10 + $0x1a0] sm:$0xff]
    %v2891 = vld [vmem:[#allocation10 + $0x1a8] sm:$0xff]
    %v2892 = vld [vmem:[#allocation10 + $0x1b0] sm:$0xff]
    %v2893 = vld [vmem:[#allocation10 + $0x1b8] sm:$0xff]
    %v2894 = vld [vmem:[#allocation10 + $0x1c0] sm:$0xff]
    %v2895 = vld [vmem:[#allocation10 + $0x1c8] sm:$0xff]
    %v2896 = vld [vmem:[#allocation10 + $0x1d0] sm:$0xff]
    %v2897 = vld [vmem:[#allocation10 + $0x1d8] sm:$0xff]
    %v2898 = vld [vmem:[#allocation10 + $0x1e0] sm:$0xff]
    %v2899 = vld [vmem:[#allocation10 + $0x1e8] sm:$0xff]
    %v2900 = vld [vmem:[#allocation10 + $0x1f0] sm:$0xff]
    %v2901 = vld [vmem:[#allocation10 + $0x1f8] sm:$0xff]
    %v2902 = vld [vmem:[#allocation10 + $0x200] sm:$0xff]
    %v2903 = vld [vmem:[#allocation10 + $0x208] sm:$0xff]
    %v2904 = vld [vmem:[#allocation10 + $0x210] sm:$0xff]
    %v2905 = vld [vmem:[#allocation10 + $0x218] sm:$0xff]
    %v2906 = vld [vmem:[#allocation10 + $0x220] sm:$0xff]
    %v2907 = vld [vmem:[#allocation10 + $0x228] sm:$0xff]
    %v2908 = vld [vmem:[#allocation10 + $0x230] sm:$0xff]
    %v2909 = vld [vmem:[#allocation10 + $0x238] sm:$0xff]
    %v2910 = vld [vmem:[#allocation10 + $0x240] sm:$0xff]
    %v2911 = vld [vmem:[#allocation10 + $0x248] sm:$0xff]
    %v2912 = vld [vmem:[#allocation10 + $0x250] sm:$0xff]
    %v2913 = vld [vmem:[#allocation10 + $0x258] sm:$0xff]
    %v2914 = vld [vmem:[#allocation10 + $0x260] sm:$0xff]
    %v2915 = vld [vmem:[#allocation10 + $0x268] sm:$0xff]
    %v2916 = vld [vmem:[#allocation10 + $0x270] sm:$0xff]
    %v2917 = vld [vmem:[#allocation10 + $0x278] sm:$0xff]
    %v2918 = vld [vmem:[#allocation10 + $0x280] sm:$0xff]
    %v2919 = vld [vmem:[#allocation10 + $0x288] sm:$0xff]
    %v2920 = vld [vmem:[#allocation10 + $0x290] sm:$0xff]
    %v2921 = vld [vmem:[#allocation10 + $0x298] sm:$0xff]
    %v2922 = vld [vmem:[#allocation10 + $0x2a0] sm:$0xff]
    %v2923 = vld [vmem:[#allocation10 + $0x2a8] sm:$0xff]
    %v2924 = vld [vmem:[#allocation10 + $0x2b0] sm:$0xff]
    %v2925 = vld [vmem:[#allocation10 + $0x2b8] sm:$0xff]
    %v2926 = vld [vmem:[#allocation10 + $0x2c0] sm:$0xff]
    %v2927 = vld [vmem:[#allocation10 + $0x2c8] sm:$0xff]
    %v2928 = vld [vmem:[#allocation10 + $0x2d0] sm:$0xff]
    %v2929 = vld [vmem:[#allocation10 + $0x2d8] sm:$0xff]
    %v2930 = vld [vmem:[#allocation10 + $0x2e0] sm:$0xff]
    %v2931 = vld [vmem:[#allocation10 + $0x2e8] sm:$0xff]
    %v2932 = vld [vmem:[#allocation10 + $0x2f0] sm:$0xff]
    %v2933 = vld [vmem:[#allocation10 + $0x2f8] sm:$0xff]
    %v2934 = vld [vmem:[#allocation10 + $0x300] sm:$0xff]
    %v2935 = vld [vmem:[#allocation10 + $0x308] sm:$0xff]
    %v2936 = vld [vmem:[#allocation10 + $0x310] sm:$0xff]
    %v2937 = vld [vmem:[#allocation10 + $0x318] sm:$0xff]
    %v2938 = vld [vmem:[#allocation10 + $0x320] sm:$0xff]
    %v2939 = vld [vmem:[#allocation10 + $0x328] sm:$0xff]
    %v2940 = vld [vmem:[#allocation10 + $0x330] sm:$0xff]
    %v2941 = vld [vmem:[#allocation10 + $0x338] sm:$0xff]
    %v2942 = vld [vmem:[#allocation10 + $0x340] sm:$0xff]
    %v2943 = vld [vmem:[#allocation10 + $0x348] sm:$0xff]
    %v2944 = vld [vmem:[#allocation10 + $0x350] sm:$0xff]
    %v2945 = vld [vmem:[#allocation10 + $0x358] sm:$0xff]
    %v2946 = vld [vmem:[#allocation10 + $0x360] sm:$0xff]
    %v2947 = vld [vmem:[#allocation10 + $0x368] sm:$0xff]
    %v2948 = vld [vmem:[#allocation10 + $0x370] sm:$0xff]
    %v2949 = vld [vmem:[#allocation10 + $0x378] sm:$0xff]
    %v2950 = vld [vmem:[#allocation10 + $0x380] sm:$0xff]
    %v2951 = vld [vmem:[#allocation10 + $0x388] sm:$0xff]
    %v2952 = vld [vmem:[#allocation10 + $0x390] sm:$0xff]
    %v2953 = vld [vmem:[#allocation10 + $0x398] sm:$0xff]
    %v2954 = vld [vmem:[#allocation10 + $0x3a0] sm:$0xff]
    %v2955 = vld [vmem:[#allocation10 + $0x3a8] sm:$0xff]
    %v2956 = vld [vmem:[#allocation10 + $0x3b0] sm:$0xff]
    %v2957 = vld [vmem:[#allocation10 + $0x3b8] sm:$0xff]
    %v2958 = vld [vmem:[#allocation10 + $0x3c0] sm:$0xff]
    %v2959 = vld [vmem:[#allocation10 + $0x3c8] sm:$0xff]
    %v2960 = vld [vmem:[#allocation10 + $0x3d0] sm:$0xff]
    %v2961 = vld [vmem:[#allocation10 + $0x3d8] sm:$0xff]
    %v2962 = vld [vmem:[#allocation10 + $0x3e0] sm:$0xff]
    %v2963 = vld [vmem:[#allocation10 + $0x3e8] sm:$0xff]
    %v2964 = vld [vmem:[#allocation10 + $0x3f0] sm:$0xff]
    %v2965 = vld [vmem:[#allocation10 + $0x3f8] sm:$0xff]
    %v2966 = vld [vmem:[%s6] sm:$0xf]
    %v2968 = vlaneseq
    %v2969 = vshrl.u32 %v2968, 7
    %v2970 = vsub.s32 0, %v2969
    %v2971 = vrot.slane %v2966, %v2970
    %v2972 = vlaneseq
    %v2973 = vshrl.u32 %v2972, 7
    %v2974 = vsub.s32 1, %v2973
    %v2975 = vrot.slane %v2966, %v2974
    %v2976 = vlaneseq
    %v2977 = vshrl.u32 %v2976, 7
    %v2978 = vsub.s32 2, %v2977
    %v2979 = vrot.slane %v2966, %v2978
    %v2980 = vlaneseq
    %v2981 = vshrl.u32 %v2980, 7
    %v2982 = vsub.s32 3, %v2981
    %v2983 = vrot.slane %v2966, %v2982
    %v3116 = vunpack.c.l.b16 %v2838
    %v3117 = vunpack.c.h.b16 %v2838
    %v3118 = vunpack.c.l.b16 %v2839
    %v3119 = vunpack.c.h.b16 %v2839
    %v3120 = vunpack.c.l.b16 %v2840
    %v3121 = vunpack.c.h.b16 %v2840
    %v3122 = vunpack.c.l.b16 %v2841
    %v3123 = vunpack.c.h.b16 %v2841
    %v3124 = vunpack.c.l.b16 %v2842
    %v3125 = vunpack.c.h.b16 %v2842
    %v3126 = vunpack.c.l.b16 %v2843
    %v3127 = vunpack.c.h.b16 %v2843
    %v3128 = vunpack.c.l.b16 %v2844
    %v3129 = vunpack.c.h.b16 %v2844
    %v3130 = vunpack.c.l.b16 %v2845
    %v3131 = vunpack.c.h.b16 %v2845
    %v3132 = vunpack.c.l.b16 %v2846
    %v3133 = vunpack.c.h.b16 %v2846
    %v3134 = vunpack.c.l.b16 %v2847
    %v3135 = vunpack.c.h.b16 %v2847
    %v3136 = vunpack.c.l.b16 %v2848
    %v3137 = vunpack.c.h.b16 %v2848
    %v3138 = vunpack.c.l.b16 %v2849
    %v3139 = vunpack.c.h.b16 %v2849
    %v3140 = vunpack.c.l.b16 %v2850
    %v3141 = vunpack.c.h.b16 %v2850
    %v3142 = vunpack.c.l.b16 %v2851
    %v3143 = vunpack.c.h.b16 %v2851
    %v3144 = vunpack.c.l.b16 %v2852
    %v3145 = vunpack.c.h.b16 %v2852
    %v3146 = vunpack.c.l.b16 %v2853
    %v3147 = vunpack.c.h.b16 %v2853
    %v3148 = vunpack.c.l.b16 %v2854
    %v3149 = vunpack.c.h.b16 %v2854
    %v3150 = vunpack.c.l.b16 %v2855
    %v3151 = vunpack.c.h.b16 %v2855
    %v3152 = vunpack.c.l.b16 %v2856
    %v3153 = vunpack.c.h.b16 %v2856
    %v3154 = vunpack.c.l.b16 %v2857
    %v3155 = vunpack.c.h.b16 %v2857
    %v3156 = vunpack.c.l.b16 %v2858
    %v3157 = vunpack.c.h.b16 %v2858
    %v3158 = vunpack.c.l.b16 %v2859
    %v3159 = vunpack.c.h.b16 %v2859
    %v3160 = vunpack.c.l.b16 %v2860
    %v3161 = vunpack.c.h.b16 %v2860
    %v3162 = vunpack.c.l.b16 %v2861
    %v3163 = vunpack.c.h.b16 %v2861
    %v3164 = vunpack.c.l.b16 %v2862
    %v3165 = vunpack.c.h.b16 %v2862
    %v3166 = vunpack.c.l.b16 %v2863
    %v3167 = vunpack.c.h.b16 %v2863
    %v3168 = vunpack.c.l.b16 %v2864
    %v3169 = vunpack.c.h.b16 %v2864
    %v3170 = vunpack.c.l.b16 %v2865
    %v3171 = vunpack.c.h.b16 %v2865
    %v3172 = vunpack.c.l.b16 %v2866
    %v3173 = vunpack.c.h.b16 %v2866
    %v3174 = vunpack.c.l.b16 %v2867
    %v3175 = vunpack.c.h.b16 %v2867
    %v3176 = vunpack.c.l.b16 %v2868
    %v3177 = vunpack.c.h.b16 %v2868
    %v3178 = vunpack.c.l.b16 %v2869
    %v3179 = vunpack.c.h.b16 %v2869
    %v3180 = vunpack.c.l.b16 %v2870
    %v3181 = vunpack.c.h.b16 %v2870
    %v3182 = vunpack.c.l.b16 %v2871
    %v3183 = vunpack.c.h.b16 %v2871
    %v3184 = vunpack.c.l.b16 %v2872
    %v3185 = vunpack.c.h.b16 %v2872
    %v3186 = vunpack.c.l.b16 %v2873
    %v3187 = vunpack.c.h.b16 %v2873
    %v3188 = vunpack.c.l.b16 %v2874
    %v3189 = vunpack.c.h.b16 %v2874
    %v3190 = vunpack.c.l.b16 %v2875
    %v3191 = vunpack.c.h.b16 %v2875
    %v3192 = vunpack.c.l.b16 %v2876
    %v3193 = vunpack.c.h.b16 %v2876
    %v3194 = vunpack.c.l.b16 %v2877
    %v3195 = vunpack.c.h.b16 %v2877
    %v3196 = vunpack.c.l.b16 %v2878
    %v3197 = vunpack.c.h.b16 %v2878
    %v3198 = vunpack.c.l.b16 %v2879
    %v3199 = vunpack.c.h.b16 %v2879
    %v3200 = vunpack.c.l.b16 %v2880
    %v3201 = vunpack.c.h.b16 %v2880
    %v3202 = vunpack.c.l.b16 %v2881
    %v3203 = vunpack.c.h.b16 %v2881
    %v3204 = vunpack.c.l.b16 %v2882
    %v3205 = vunpack.c.h.b16 %v2882
    %v3206 = vunpack.c.l.b16 %v2883
    %v3207 = vunpack.c.h.b16 %v2883
    %v3208 = vunpack.c.l.b16 %v2884
    %v3209 = vunpack.c.h.b16 %v2884
    %v3210 = vunpack.c.l.b16 %v2885
    %v3211 = vunpack.c.h.b16 %v2885
    %v3212 = vunpack.c.l.b16 %v2886
    %v3213 = vunpack.c.h.b16 %v2886
    %v3214 = vunpack.c.l.b16 %v2887
    %v3215 = vunpack.c.h.b16 %v2887
    %v3216 = vunpack.c.l.b16 %v2888
    %v3217 = vunpack.c.h.b16 %v2888
    %v3218 = vunpack.c.l.b16 %v2889
    %v3219 = vunpack.c.h.b16 %v2889
    %v3220 = vunpack.c.l.b16 %v2890
    %v3221 = vunpack.c.h.b16 %v2890
    %v3222 = vunpack.c.l.b16 %v2891
    %v3223 = vunpack.c.h.b16 %v2891
    %v3224 = vunpack.c.l.b16 %v2892
    %v3225 = vunpack.c.h.b16 %v2892
    %v3226 = vunpack.c.l.b16 %v2893
    %v3227 = vunpack.c.h.b16 %v2893
    %v3228 = vunpack.c.l.b16 %v2894
    %v3229 = vunpack.c.h.b16 %v2894
    %v3230 = vunpack.c.l.b16 %v2895
    %v3231 = vunpack.c.h.b16 %v2895
    %v3232 = vunpack.c.l.b16 %v2896
    %v3233 = vunpack.c.h.b16 %v2896
    %v3234 = vunpack.c.l.b16 %v2897
    %v3235 = vunpack.c.h.b16 %v2897
    %v3236 = vunpack.c.l.b16 %v2898
    %v3237 = vunpack.c.h.b16 %v2898
    %v3238 = vunpack.c.l.b16 %v2899
    %v3239 = vunpack.c.h.b16 %v2899
    %v3240 = vunpack.c.l.b16 %v2900
    %v3241 = vunpack.c.h.b16 %v2900
    %v3242 = vunpack.c.l.b16 %v2901
    %v3243 = vunpack.c.h.b16 %v2901
    %v3244 = vunpack.c.l.b16 %v2902
    %v3245 = vunpack.c.h.b16 %v2902
    %v3246 = vunpack.c.l.b16 %v2903
    %v3247 = vunpack.c.h.b16 %v2903
    %v3248 = vunpack.c.l.b16 %v2904
    %v3249 = vunpack.c.h.b16 %v2904
    %v3250 = vunpack.c.l.b16 %v2905
    %v3251 = vunpack.c.h.b16 %v2905
    %v3252 = vunpack.c.l.b16 %v2906
    %v3253 = vunpack.c.h.b16 %v2906
    %v3254 = vunpack.c.l.b16 %v2907
    %v3255 = vunpack.c.h.b16 %v2907
    %v3256 = vunpack.c.l.b16 %v2908
    %v3257 = vunpack.c.h.b16 %v2908
    %v3258 = vunpack.c.l.b16 %v2909
    %v3259 = vunpack.c.h.b16 %v2909
    %v3260 = vunpack.c.l.b16 %v2910
    %v3261 = vunpack.c.h.b16 %v2910
    %v3262 = vunpack.c.l.b16 %v2911
    %v3263 = vunpack.c.h.b16 %v2911
    %v3264 = vunpack.c.l.b16 %v2912
    %v3265 = vunpack.c.h.b16 %v2912
    %v3266 = vunpack.c.l.b16 %v2913
    %v3267 = vunpack.c.h.b16 %v2913
    %v3268 = vunpack.c.l.b16 %v2914
    %v3269 = vunpack.c.h.b16 %v2914
    %v3270 = vunpack.c.l.b16 %v2915
    %v3271 = vunpack.c.h.b16 %v2915
    %v3272 = vunpack.c.l.b16 %v2916
    %v3273 = vunpack.c.h.b16 %v2916
    %v3274 = vunpack.c.l.b16 %v2917
    %v3275 = vunpack.c.h.b16 %v2917
    %v3276 = vunpack.c.l.b16 %v2918
    %v3277 = vunpack.c.h.b16 %v2918
    %v3278 = vunpack.c.l.b16 %v2919
    %v3279 = vunpack.c.h.b16 %v2919
    %v3280 = vunpack.c.l.b16 %v2920
    %v3281 = vunpack.c.h.b16 %v2920
    %v3282 = vunpack.c.l.b16 %v2921
    %v3283 = vunpack.c.h.b16 %v2921
    %v3284 = vunpack.c.l.b16 %v2922
    %v3285 = vunpack.c.h.b16 %v2922
    %v3286 = vunpack.c.l.b16 %v2923
    %v3287 = vunpack.c.h.b16 %v2923
    %v3288 = vunpack.c.l.b16 %v2924
    %v3289 = vunpack.c.h.b16 %v2924
    %v3290 = vunpack.c.l.b16 %v2925
    %v3291 = vunpack.c.h.b16 %v2925
    %v3292 = vunpack.c.l.b16 %v2926
    %v3293 = vunpack.c.h.b16 %v2926
    %v3294 = vunpack.c.l.b16 %v2927
    %v3295 = vunpack.c.h.b16 %v2927
    %v3296 = vunpack.c.l.b16 %v2928
    %v3297 = vunpack.c.h.b16 %v2928
    %v3298 = vunpack.c.l.b16 %v2929
    %v3299 = vunpack.c.h.b16 %v2929
    %v3300 = vunpack.c.l.b16 %v2930
    %v3301 = vunpack.c.h.b16 %v2930
    %v3302 = vunpack.c.l.b16 %v2931
    %v3303 = vunpack.c.h.b16 %v2931
    %v3304 = vunpack.c.l.b16 %v2932
    %v3305 = vunpack.c.h.b16 %v2932
    %v3306 = vunpack.c.l.b16 %v2933
    %v3307 = vunpack.c.h.b16 %v2933
    %v3308 = vunpack.c.l.b16 %v2934
    %v3309 = vunpack.c.h.b16 %v2934
    %v3310 = vunpack.c.l.b16 %v2935
    %v3311 = vunpack.c.h.b16 %v2935
    %v3312 = vunpack.c.l.b16 %v2936
    %v3313 = vunpack.c.h.b16 %v2936
    %v3314 = vunpack.c.l.b16 %v2937
    %v3315 = vunpack.c.h.b16 %v2937
    %v3316 = vunpack.c.l.b16 %v2938
    %v3317 = vunpack.c.h.b16 %v2938
    %v3318 = vunpack.c.l.b16 %v2939
    %v3319 = vunpack.c.h.b16 %v2939
    %v3320 = vunpack.c.l.b16 %v2940
    %v3321 = vunpack.c.h.b16 %v2940
    %v3322 = vunpack.c.l.b16 %v2941
    %v3323 = vunpack.c.h.b16 %v2941
    %v3324 = vunpack.c.l.b16 %v2942
    %v3325 = vunpack.c.h.b16 %v2942
    %v3326 = vunpack.c.l.b16 %v2943
    %v3327 = vunpack.c.h.b16 %v2943
    %v3328 = vunpack.c.l.b16 %v2944
    %v3329 = vunpack.c.h.b16 %v2944
    %v3330 = vunpack.c.l.b16 %v2945
    %v3331 = vunpack.c.h.b16 %v2945
    %v3332 = vunpack.c.l.b16 %v2946
    %v3333 = vunpack.c.h.b16 %v2946
    %v3334 = vunpack.c.l.b16 %v2947
    %v3335 = vunpack.c.h.b16 %v2947
    %v3336 = vunpack.c.l.b16 %v2948
    %v3337 = vunpack.c.h.b16 %v2948
    %v3338 = vunpack.c.l.b16 %v2949
    %v3339 = vunpack.c.h.b16 %v2949
    %v3340 = vunpack.c.l.b16 %v2950
    %v3341 = vunpack.c.h.b16 %v2950
    %v3342 = vunpack.c.l.b16 %v2951
    %v3343 = vunpack.c.h.b16 %v2951
    %v3344 = vunpack.c.l.b16 %v2952
    %v3345 = vunpack.c.h.b16 %v2952
    %v3346 = vunpack.c.l.b16 %v2953
    %v3347 = vunpack.c.h.b16 %v2953
    %v3348 = vunpack.c.l.b16 %v2954
    %v3349 = vunpack.c.h.b16 %v2954
    %v3350 = vunpack.c.l.b16 %v2955
    %v3351 = vunpack.c.h.b16 %v2955
    %v3352 = vunpack.c.l.b16 %v2956
    %v3353 = vunpack.c.h.b16 %v2956
    %v3354 = vunpack.c.l.b16 %v2957
    %v3355 = vunpack.c.h.b16 %v2957
    %v3356 = vunpack.c.l.b16 %v2958
    %v3357 = vunpack.c.h.b16 %v2958
    %v3358 = vunpack.c.l.b16 %v2959
    %v3359 = vunpack.c.h.b16 %v2959
    %v3360 = vunpack.c.l.b16 %v2960
    %v3361 = vunpack.c.h.b16 %v2960
    %v3362 = vunpack.c.l.b16 %v2961
    %v3363 = vunpack.c.h.b16 %v2961
    %v3364 = vunpack.c.l.b16 %v2962
    %v3365 = vunpack.c.h.b16 %v2962
    %v3366 = vunpack.c.l.b16 %v2963
    %v3367 = vunpack.c.h.b16 %v2963
    %v3368 = vunpack.c.l.b16 %v2964
    %v3369 = vunpack.c.h.b16 %v2964
    %v3370 = vunpack.c.l.b16 %v2965
    %v3371 = vunpack.c.h.b16 %v2965
    %v3372 = vpack.c.b16 %v3120, %v3116
    %v3373 = vpack.c.b16 %v3121, %v3117
    %v3374 = vpack.c.b16 %v3122, %v3118
    %v3375 = vpack.c.b16 %v3123, %v3119
    %v3376 = vpack.c.b16 %v3128, %v3124
    %v3377 = vpack.c.b16 %v3129, %v3125
    %v3378 = vpack.c.b16 %v3130, %v3126
    %v3379 = vpack.c.b16 %v3131, %v3127
    %v3380 = vpack.c.b16 %v3136, %v3132
    %v3381 = vpack.c.b16 %v3137, %v3133
    %v3382 = vpack.c.b16 %v3138, %v3134
    %v3383 = vpack.c.b16 %v3139, %v3135
    %v3384 = vpack.c.b16 %v3144, %v3140
    %v3385 = vpack.c.b16 %v3145, %v3141
    %v3386 = vpack.c.b16 %v3146, %v3142
    %v3387 = vpack.c.b16 %v3147, %v3143
    %v3388 = vpack.c.b16 %v3152, %v3148
    %v3389 = vpack.c.b16 %v3153, %v3149
    %v3390 = vpack.c.b16 %v3154, %v3150
    %v3391 = vpack.c.b16 %v3155, %v3151
    %v3392 = vpack.c.b16 %v3160, %v3156
    %v3393 = vpack.c.b16 %v3161, %v3157
    %v3394 = vpack.c.b16 %v3162, %v3158
    %v3395 = vpack.c.b16 %v3163, %v3159
    %v3396 = vpack.c.b16 %v3168, %v3164
    %v3397 = vpack.c.b16 %v3169, %v3165
    %v3398 = vpack.c.b16 %v3170, %v3166
    %v3399 = vpack.c.b16 %v3171, %v3167
    %v3400 = vpack.c.b16 %v3176, %v3172
    %v3401 = vpack.c.b16 %v3177, %v3173
    %v3402 = vpack.c.b16 %v3178, %v3174
    %v3403 = vpack.c.b16 %v3179, %v3175
    %v3404 = vpack.c.b16 %v3184, %v3180
    %v3405 = vpack.c.b16 %v3185, %v3181
    %v3406 = vpack.c.b16 %v3186, %v3182
    %v3407 = vpack.c.b16 %v3187, %v3183
    %v3408 = vpack.c.b16 %v3192, %v3188
    %v3409 = vpack.c.b16 %v3193, %v3189
    %v3410 = vpack.c.b16 %v3194, %v3190
    %v3411 = vpack.c.b16 %v3195, %v3191
    %v3412 = vpack.c.b16 %v3200, %v3196
    %v3413 = vpack.c.b16 %v3201, %v3197
    %v3414 = vpack.c.b16 %v3202, %v3198
    %v3415 = vpack.c.b16 %v3203, %v3199
    %v3416 = vpack.c.b16 %v3208, %v3204
    %v3417 = vpack.c.b16 %v3209, %v3205
    %v3418 = vpack.c.b16 %v3210, %v3206
    %v3419 = vpack.c.b16 %v3211, %v3207
    %v3420 = vpack.c.b16 %v3216, %v3212
    %v3421 = vpack.c.b16 %v3217, %v3213
    %v3422 = vpack.c.b16 %v3218, %v3214
    %v3423 = vpack.c.b16 %v3219, %v3215
    %v3424 = vpack.c.b16 %v3224, %v3220
    %v3425 = vpack.c.b16 %v3225, %v3221
    %v3426 = vpack.c.b16 %v3226, %v3222
    %v3427 = vpack.c.b16 %v3227, %v3223
    %v3428 = vpack.c.b16 %v3232, %v3228
    %v3429 = vpack.c.b16 %v3233, %v3229
    %v3430 = vpack.c.b16 %v3234, %v3230
    %v3431 = vpack.c.b16 %v3235, %v3231
    %v3432 = vpack.c.b16 %v3240, %v3236
    %v3433 = vpack.c.b16 %v3241, %v3237
    %v3434 = vpack.c.b16 %v3242, %v3238
    %v3435 = vpack.c.b16 %v3243, %v3239
    %v3436 = vpack.c.b16 %v3248, %v3244
    %v3437 = vpack.c.b16 %v3249, %v3245
    %v3438 = vpack.c.b16 %v3250, %v3246
    %v3439 = vpack.c.b16 %v3251, %v3247
    %v3440 = vpack.c.b16 %v3256, %v3252
    %v3441 = vpack.c.b16 %v3257, %v3253
    %v3442 = vpack.c.b16 %v3258, %v3254
    %v3443 = vpack.c.b16 %v3259, %v3255
    %v3444 = vpack.c.b16 %v3264, %v3260
    %v3445 = vpack.c.b16 %v3265, %v3261
    %v3446 = vpack.c.b16 %v3266, %v3262
    %v3447 = vpack.c.b16 %v3267, %v3263
    %v3448 = vpack.c.b16 %v3272, %v3268
    %v3449 = vpack.c.b16 %v3273, %v3269
    %v3450 = vpack.c.b16 %v3274, %v3270
    %v3451 = vpack.c.b16 %v3275, %v3271
    %v3452 = vpack.c.b16 %v3280, %v3276
    %v3453 = vpack.c.b16 %v3281, %v3277
    %v3454 = vpack.c.b16 %v3282, %v3278
    %v3455 = vpack.c.b16 %v3283, %v3279
    %v3456 = vpack.c.b16 %v3288, %v3284
    %v3457 = vpack.c.b16 %v3289, %v3285
    %v3458 = vpack.c.b16 %v3290, %v3286
    %v3459 = vpack.c.b16 %v3291, %v3287
    %v3460 = vpack.c.b16 %v3296, %v3292
    %v3461 = vpack.c.b16 %v3297, %v3293
    %v3462 = vpack.c.b16 %v3298, %v3294
    %v3463 = vpack.c.b16 %v3299, %v3295
    %v3464 = vpack.c.b16 %v3304, %v3300
    %v3465 = vpack.c.b16 %v3305, %v3301
    %v3466 = vpack.c.b16 %v3306, %v3302
    %v3467 = vpack.c.b16 %v3307, %v3303
    %v3468 = vpack.c.b16 %v3312, %v3308
    %v3469 = vpack.c.b16 %v3313, %v3309
    %v3470 = vpack.c.b16 %v3314, %v3310
    %v3471 = vpack.c.b16 %v3315, %v3311
    %v3472 = vpack.c.b16 %v3320, %v3316
    %v3473 = vpack.c.b16 %v3321, %v3317
    %v3474 = vpack.c.b16 %v3322, %v3318
    %v3475 = vpack.c.b16 %v3323, %v3319
    %v3476 = vpack.c.b16 %v3328, %v3324
    %v3477 = vpack.c.b16 %v3329, %v3325
    %v3478 = vpack.c.b16 %v3330, %v3326
    %v3479 = vpack.c.b16 %v3331, %v3327
    %v3480 = vpack.c.b16 %v3336, %v3332
    %v3481 = vpack.c.b16 %v3337, %v3333
    %v3482 = vpack.c.b16 %v3338, %v3334
    %v3483 = vpack.c.b16 %v3339, %v3335
    %v3484 = vpack.c.b16 %v3344, %v3340
    %v3485 = vpack.c.b16 %v3345, %v3341
    %v3486 = vpack.c.b16 %v3346, %v3342
    %v3487 = vpack.c.b16 %v3347, %v3343
    %v3488 = vpack.c.b16 %v3352, %v3348
    %v3489 = vpack.c.b16 %v3353, %v3349
    %v3490 = vpack.c.b16 %v3354, %v3350
    %v3491 = vpack.c.b16 %v3355, %v3351
    %v3492 = vpack.c.b16 %v3360, %v3356
    %v3493 = vpack.c.b16 %v3361, %v3357
    %v3494 = vpack.c.b16 %v3362, %v3358
    %v3495 = vpack.c.b16 %v3363, %v3359
    %v3496 = vpack.c.b16 %v3368, %v3364
    %v3497 = vpack.c.b16 %v3369, %v3365
    %v3498 = vpack.c.b16 %v3370, %v3366
    %v3499 = vpack.c.b16 %v3371, %v3367
    %3628 = vmatprep.subr.bf16.mxu0 %v3401
    %3629 = vmatpush1.bf16.msra.mxu0 %v3400
    %3630 = vmatprep.subr.bf16.mxu0 %v3397
    %3631 = vmatpush1.bf16.msra.mxu0 %v3396
    %3632 = vmatprep.subr.bf16.mxu0 %v3393
    %3633 = vmatpush1.bf16.msra.mxu0 %v3392
    %3634 = vmatprep.subr.bf16.mxu0 %v3389
    %3635 = vmatpush1.bf16.msra.mxu0 %v3388
    %3636 = vmatprep.subr.bf16.mxu0 %v3385
    %3637 = vmatpush1.bf16.msra.mxu0 %v3384
    %3638 = vmatprep.subr.bf16.mxu0 %v3381
    %3639 = vmatpush1.bf16.msra.mxu0 %v3380
    %3640 = vmatprep.subr.bf16.mxu0 %v3377
    %3641 = vmatpush1.bf16.msra.mxu0 %v3376
    %3642 = vmatprep.subr.bf16.mxu0 %v3373
    %3643 = vmatpush1.bf16.msra.mxu0 %v3372
    %3644 = vmatprep.subr.bf16.mxu0 %v3433
    %3645 = vmatpush2.bf16.msra.mxu0 %v3432
    %3646 = vmatprep.subr.bf16.mxu0 %v3429
    %3647 = vmatpush2.bf16.msra.mxu0 %v3428
    %3648 = vmatprep.subr.bf16.mxu0 %v3425
    %3649 = vmatpush2.bf16.msra.mxu0 %v3424
    %3650 = vmatprep.subr.bf16.mxu0 %v3421
    %3651 = vmatpush2.bf16.msra.mxu0 %v3420
    %3652 = vmatprep.subr.bf16.mxu0 %v3417
    %3653 = vmatpush2.bf16.msra.mxu0 %v3416
    %3654 = vmatprep.subr.bf16.mxu0 %v3413
    %3655 = vmatpush2.bf16.msra.mxu0 %v3412
    %3656 = vmatprep.subr.bf16.mxu0 %v3409
    %3657 = vmatpush2.bf16.msra.mxu0 %v3408
    %3658 = vmatprep.subr.bf16.mxu0 %v3405
    %3659 = vmatpush2.bf16.msra.mxu0 %v3404
    %3660 = vmatprep.mubr.bf16.mxu0 %v2835
    %3661 = vmatmul.mubr.bf16.gmra.mxu0 %v2834
    %v3662 = vpop.f32.mrf.mxu0
    %v3663 = vadd.f32 %v2971, %v3662
    %v3664 = vpop.f32.mrf.mxu0
    %v3665 = vadd.f32 %v2975, %v3664
    %v3666 = vpop.f32.mrf.mxu0
    %v3667 = vadd.f32 %v2971, %v3666
    %v3668 = vpop.f32.mrf.mxu0
    %v3669 = vadd.f32 %v2975, %v3668
    %3670 = vdwg.mxu0
    %3671 = vmatprep.subr.bf16.mxu0 %v3465
    %3672 = vmatpush1.bf16.msra.mxu0 %v3464
    %3673 = vmatprep.subr.bf16.mxu0 %v3461
    %3674 = vmatpush1.bf16.msra.mxu0 %v3460
    %3675 = vmatprep.subr.bf16.mxu0 %v3457
    %3676 = vmatpush1.bf16.msra.mxu0 %v3456
    %3677 = vmatprep.subr.bf16.mxu0 %v3453
    %3678 = vmatpush1.bf16.msra.mxu0 %v3452
    %3679 = vmatprep.subr.bf16.mxu0 %v3449
    %3680 = vmatpush1.bf16.msra.mxu0 %v3448
    %3681 = vmatprep.subr.bf16.mxu0 %v3445
    %3682 = vmatpush1.bf16.msra.mxu0 %v3444
    %3683 = vmatprep.subr.bf16.mxu0 %v3441
    %3684 = vmatpush1.bf16.msra.mxu0 %v3440
    %3685 = vmatprep.subr.bf16.mxu0 %v3437
    %3686 = vmatpush1.bf16.msra.mxu0 %v3436
    %3687 = vmatprep.subr.bf16.mxu0 %v3497
    %3688 = vmatpush2.bf16.msra.mxu0 %v3496
    %3689 = vmatprep.subr.bf16.mxu0 %v3493
    %3690 = vmatpush2.bf16.msra.mxu0 %v3492
    %3691 = vmatprep.subr.bf16.mxu0 %v3489
    %3692 = vmatpush2.bf16.msra.mxu0 %v3488
    %3693 = vmatprep.subr.bf16.mxu0 %v3485
    %3694 = vmatpush2.bf16.msra.mxu0 %v3484
    %3695 = vmatprep.subr.bf16.mxu0 %v3481
    %3696 = vmatpush2.bf16.msra.mxu0 %v3480
    %3697 = vmatprep.subr.bf16.mxu0 %v3477
    %3698 = vmatpush2.bf16.msra.mxu0 %v3476
    %3699 = vmatprep.subr.bf16.mxu0 %v3473
    %3700 = vmatpush2.bf16.msra.mxu0 %v3472
    %3701 = vmatprep.subr.bf16.mxu0 %v3469
    %3702 = vmatpush2.bf16.msra.mxu0 %v3468
    %3703 = vmatprep.mubr.bf16.mxu0 %v2837
    %3704 = vmatmul.mubr.bf16.gmra.mxu0 %v2836
    %v3705 = vpop.f32.mrf.mxu0
    %v3706 = vadd.f32 %v3663, %v3705
    %v3707 = vpop.f32.mrf.mxu0
    %v3708 = vadd.f32 %v3665, %v3707
    %v3709 = vpop.f32.mrf.mxu0
    %v3710 = vadd.f32 %v3667, %v3709
    %v3711 = vpop.f32.mrf.mxu0
    %v3712 = vadd.f32 %v3669, %v3711
    %3713 = vdwg.mxu0
    %3714 = vmatprep.subr.bf16.mxu0 %v3403
    %3715 = vmatpush1.bf16.msra.mxu0 %v3402
    %3716 = vmatprep.subr.bf16.mxu0 %v3399
    %3717 = vmatpush1.bf16.msra.mxu0 %v3398
    %3718 = vmatprep.subr.bf16.mxu0 %v3395
    %3719 = vmatpush1.bf16.msra.mxu0 %v3394
    %3720 = vmatprep.subr.bf16.mxu0 %v3391
    %3721 = vmatpush1.bf16.msra.mxu0 %v3390
    %3722 = vmatprep.subr.bf16.mxu0 %v3387
    %3723 = vmatpush1.bf16.msra.mxu0 %v3386
    %3724 = vmatprep.subr.bf16.mxu0 %v3383
    %3725 = vmatpush1.bf16.msra.mxu0 %v3382
    %3726 = vmatprep.subr.bf16.mxu0 %v3379
    %3727 = vmatpush1.bf16.msra.mxu0 %v3378
    %3728 = vmatprep.subr.bf16.mxu0 %v3375
    %3729 = vmatpush1.bf16.msra.mxu0 %v3374
    %3730 = vmatprep.subr.bf16.mxu0 %v3435
    %3731 = vmatpush2.bf16.msra.mxu0 %v3434
    %3732 = vmatprep.subr.bf16.mxu0 %v3431
    %3733 = vmatpush2.bf16.msra.mxu0 %v3430
    %3734 = vmatprep.subr.bf16.mxu0 %v3427
    %3735 = vmatpush2.bf16.msra.mxu0 %v3426
    %3736 = vmatprep.subr.bf16.mxu0 %v3423
    %3737 = vmatpush2.bf16.msra.mxu0 %v3422
    %3738 = vmatprep.subr.bf16.mxu0 %v3419
    %3739 = vmatpush2.bf16.msra.mxu0 %v3418
    %3740 = vmatprep.subr.bf16.mxu0 %v3415
    %3741 = vmatpush2.bf16.msra.mxu0 %v3414
    %3742 = vmatprep.subr.bf16.mxu0 %v3411
    %3743 = vmatpush2.bf16.msra.mxu0 %v3410
    %3744 = vmatprep.subr.bf16.mxu0 %v3407
    %3745 = vmatpush2.bf16.msra.mxu0 %v3406
    %3746 = vmatprep.mubr.bf16.mxu0 %v2835
    %3747 = vmatmul.mubr.bf16.gmra.mxu0 %v2834
    %v3748 = vpop.f32.mrf.mxu0
    %v3749 = vadd.f32 %v2979, %v3748
    %v3750 = vpop.f32.mrf.mxu0
    %v3751 = vadd.f32 %v2983, %v3750
    %v3752 = vpop.f32.mrf.mxu0
    %v3753 = vadd.f32 %v2979, %v3752
    %v3754 = vpop.f32.mrf.mxu0
    %v3755 = vadd.f32 %v2983, %v3754
    %3756 = vdwg.mxu0
    %3757 = vmatprep.subr.bf16.mxu0 %v3467
    %3758 = vmatpush1.bf16.msra.mxu0 %v3466
    %3759 = vmatprep.subr.bf16.mxu0 %v3463
    %3760 = vmatpush1.bf16.msra.mxu0 %v3462
    %3761 = vmatprep.subr.bf16.mxu0 %v3459
    %3762 = vmatpush1.bf16.msra.mxu0 %v3458
    %3763 = vmatprep.subr.bf16.mxu0 %v3455
    %3764 = vmatpush1.bf16.msra.mxu0 %v3454
    %3765 = vmatprep.subr.bf16.mxu0 %v3451
    %3766 = vmatpush1.bf16.msra.mxu0 %v3450
    %3767 = vmatprep.subr.bf16.mxu0 %v3447
    %3768 = vmatpush1.bf16.msra.mxu0 %v3446
    %3769 = vmatprep.subr.bf16.mxu0 %v3443
    %3770 = vmatpush1.bf16.msra.mxu0 %v3442
    %3771 = vmatprep.subr.bf16.mxu0 %v3439
    %3772 = vmatpush1.bf16.msra.mxu0 %v3438
    %3773 = vmatprep.subr.bf16.mxu0 %v3499
    %3774 = vmatpush2.bf16.msra.mxu0 %v3498
    %3775 = vmatprep.subr.bf16.mxu0 %v3495
    %3776 = vmatpush2.bf16.msra.mxu0 %v3494
    %3777 = vmatprep.subr.bf16.mxu0 %v3491
    %3778 = vmatpush2.bf16.msra.mxu0 %v3490
    %3779 = vmatprep.subr.bf16.mxu0 %v3487
    %3780 = vmatpush2.bf16.msra.mxu0 %v3486
    %3781 = vmatprep.subr.bf16.mxu0 %v3483
    %3782 = vmatpush2.bf16.msra.mxu0 %v3482
    %3783 = vmatprep.subr.bf16.mxu0 %v3479
    %3784 = vmatpush2.bf16.msra.mxu0 %v3478
    %3785 = vmatprep.subr.bf16.mxu0 %v3475
    %3786 = vmatpush2.bf16.msra.mxu0 %v3474
    %3787 = vmatprep.subr.bf16.mxu0 %v3471
    %3788 = vmatpush2.bf16.msra.mxu0 %v3470
    %3789 = vmatprep.mubr.bf16.mxu0 %v2837
    %3790 = vmatmul.mubr.bf16.gmra.mxu0 %v2836
    %v3791 = vpop.f32.mrf.mxu0
    %v3792 = vadd.f32 %v3749, %v3791
    %v3793 = vpop.f32.mrf.mxu0
    %v3794 = vadd.f32 %v3751, %v3793
    %v3795 = vpop.f32.mrf.mxu0
    %v3796 = vadd.f32 %v3753, %v3795
    %v3797 = vpop.f32.mrf.mxu0
    %v3798 = vadd.f32 %v3755, %v3797
    %3799 = vdwg.mxu0
    %v3800 = vpack.c.bf16 %v3710, %v3706
    %v3801 = vpack.c.bf16 %v3712, %v3708
    %v3802 = vpack.c.bf16 %v3796, %v3792
    %v3803 = vpack.c.bf16 %v3798, %v3794
    %v3804 = vld [vmem:[#allocation11] sm:$0xf]
    %v3805 = vld [vmem:[#allocation11 + $0x4] sm:$0xf]
    %v3806 = vld [vmem:[#allocation11 + $0x8] sm:$0xf]
    %v3807 = vld [vmem:[#allocation11 + $0xc] sm:$0xf]
    %v3808 = vld [vmem:[#allocation11 + $0x10] sm:$0xf]
    %v3809 = vld [vmem:[#allocation11 + $0x14] sm:$0xf]
    %v3810 = vld [vmem:[#allocation11 + $0x18] sm:$0xf]
    %v3811 = vld [vmem:[#allocation11 + $0x1c] sm:$0xf]
    %v3812 = vld [vmem:[#allocation11 + $0x20] sm:$0xf]
    %v3813 = vld [vmem:[#allocation11 + $0x24] sm:$0xf]
    %v3814 = vld [vmem:[#allocation11 + $0x28] sm:$0xf]
    %v3815 = vld [vmem:[#allocation11 + $0x2c] sm:$0xf]
    %v3816 = vld [vmem:[#allocation11 + $0x30] sm:$0xf]
    %v3817 = vld [vmem:[#allocation11 + $0x34] sm:$0xf]
    %v3818 = vld [vmem:[#allocation11 + $0x38] sm:$0xf]
    %v3819 = vld [vmem:[#allocation11 + $0x3c] sm:$0xf]
    %v3820 = vld [vmem:[#allocation11 + $0x40] sm:$0xf]
    %v3821 = vld [vmem:[#allocation11 + $0x44] sm:$0xf]
    %v3822 = vld [vmem:[#allocation11 + $0x48] sm:$0xf]
    %v3823 = vld [vmem:[#allocation11 + $0x4c] sm:$0xf]
    %v3824 = vld [vmem:[#allocation11 + $0x50] sm:$0xf]
    %v3825 = vld [vmem:[#allocation11 + $0x54] sm:$0xf]
    %v3826 = vld [vmem:[#allocation11 + $0x58] sm:$0xf]
    %v3827 = vld [vmem:[#allocation11 + $0x5c] sm:$0xf]
    %v3828 = vld [vmem:[#allocation11 + $0x60] sm:$0xf]
    %v3829 = vld [vmem:[#allocation11 + $0x64] sm:$0xf]
    %v3830 = vld [vmem:[#allocation11 + $0x68] sm:$0xf]
    %v3831 = vld [vmem:[#allocation11 + $0x6c] sm:$0xf]
    %v3832 = vld [vmem:[#allocation11 + $0x70] sm:$0xf]
    %v3833 = vld [vmem:[#allocation11 + $0x74] sm:$0xf]
    %v3834 = vld [vmem:[#allocation11 + $0x78] sm:$0xf]
    %v3835 = vld [vmem:[#allocation11 + $0x7c] sm:$0xf]
    %v3836 = vld [vmem:[#allocation11 + $0x80] sm:$0xf]
    %v3837 = vld [vmem:[#allocation11 + $0x84] sm:$0xf]
    %v3838 = vld [vmem:[#allocation11 + $0x88] sm:$0xf]
    %v3839 = vld [vmem:[#allocation11 + $0x8c] sm:$0xf]
    %v3840 = vld [vmem:[#allocation11 + $0x90] sm:$0xf]
    %v3841 = vld [vmem:[#allocation11 + $0x94] sm:$0xf]
    %v3842 = vld [vmem:[#allocation11 + $0x98] sm:$0xf]
    %v3843 = vld [vmem:[#allocation11 + $0x9c] sm:$0xf]
    %v3844 = vld [vmem:[#allocation11 + $0xa0] sm:$0xf]
    %v3845 = vld [vmem:[#allocation11 + $0xa4] sm:$0xf]
    %v3846 = vld [vmem:[#allocation11 + $0xa8] sm:$0xf]
    %v3847 = vld [vmem:[#allocation11 + $0xac] sm:$0xf]
    %v3848 = vld [vmem:[#allocation11 + $0xb0] sm:$0xf]
    %v3849 = vld [vmem:[#allocation11 + $0xb4] sm:$0xf]
    %v3850 = vld [vmem:[#allocation11 + $0xb8] sm:$0xf]
    %v3851 = vld [vmem:[#allocation11 + $0xbc] sm:$0xf]
    %v3852 = vld [vmem:[#allocation11 + $0xc0] sm:$0xf]
    %v3853 = vld [vmem:[#allocation11 + $0xc4] sm:$0xf]
    %v3854 = vld [vmem:[#allocation11 + $0xc8] sm:$0xf]
    %v3855 = vld [vmem:[#allocation11 + $0xcc] sm:$0xf]
    %v3856 = vld [vmem:[#allocation11 + $0xd0] sm:$0xf]
    %v3857 = vld [vmem:[#allocation11 + $0xd4] sm:$0xf]
    %v3858 = vld [vmem:[#allocation11 + $0xd8] sm:$0xf]
    %v3859 = vld [vmem:[#allocation11 + $0xdc] sm:$0xf]
    %v3860 = vld [vmem:[#allocation11 + $0xe0] sm:$0xf]
    %v3861 = vld [vmem:[#allocation11 + $0xe4] sm:$0xf]
    %v3862 = vld [vmem:[#allocation11 + $0xe8] sm:$0xf]
    %v3863 = vld [vmem:[#allocation11 + $0xec] sm:$0xf]
    %v3864 = vld [vmem:[#allocation11 + $0xf0] sm:$0xf]
    %v3865 = vld [vmem:[#allocation11 + $0xf4] sm:$0xf]
    %v3866 = vld [vmem:[#allocation11 + $0xf8] sm:$0xf]
    %v3867 = vld [vmem:[#allocation11 + $0xfc] sm:$0xf]
    %v3868 = vld [vmem:[%s8] sm:$0x1]
    %v3870 = vlaneseq
    %v3871 = vshrl.u32 %v3870, 7
    %v3872 = vsub.s32 0, %v3871
    %v3873 = vrot.slane %v3868, %v3872
    %v3939 = vunpack.c.l.b16 %v3804
    %v3940 = vunpack.c.l.b16 %v3805
    %v3941 = vunpack.c.l.b16 %v3806
    %v3942 = vunpack.c.l.b16 %v3807
    %v3943 = vunpack.c.l.b16 %v3808
    %v3944 = vunpack.c.l.b16 %v3809
    %v3945 = vunpack.c.l.b16 %v3810
    %v3946 = vunpack.c.l.b16 %v3811
    %v3947 = vunpack.c.l.b16 %v3812
    %v3948 = vunpack.c.l.b16 %v3813
    %v3949 = vunpack.c.l.b16 %v3814
    %v3950 = vunpack.c.l.b16 %v3815
    %v3951 = vunpack.c.l.b16 %v3816
    %v3952 = vunpack.c.l.b16 %v3817
    %v3953 = vunpack.c.l.b16 %v3818
    %v3954 = vunpack.c.l.b16 %v3819
    %v3955 = vunpack.c.l.b16 %v3820
    %v3956 = vunpack.c.l.b16 %v3821
    %v3957 = vunpack.c.l.b16 %v3822
    %v3958 = vunpack.c.l.b16 %v3823
    %v3959 = vunpack.c.l.b16 %v3824
    %v3960 = vunpack.c.l.b16 %v3825
    %v3961 = vunpack.c.l.b16 %v3826
    %v3962 = vunpack.c.l.b16 %v3827
    %v3963 = vunpack.c.l.b16 %v3828
    %v3964 = vunpack.c.l.b16 %v3829
    %v3965 = vunpack.c.l.b16 %v3830
    %v3966 = vunpack.c.l.b16 %v3831
    %v3967 = vunpack.c.l.b16 %v3832
    %v3968 = vunpack.c.l.b16 %v3833
    %v3969 = vunpack.c.l.b16 %v3834
    %v3970 = vunpack.c.l.b16 %v3835
    %v3971 = vunpack.c.l.b16 %v3836
    %v3972 = vunpack.c.l.b16 %v3837
    %v3973 = vunpack.c.l.b16 %v3838
    %v3974 = vunpack.c.l.b16 %v3839
    %v3975 = vunpack.c.l.b16 %v3840
    %v3976 = vunpack.c.l.b16 %v3841
    %v3977 = vunpack.c.l.b16 %v3842
    %v3978 = vunpack.c.l.b16 %v3843
    %v3979 = vunpack.c.l.b16 %v3844
    %v3980 = vunpack.c.l.b16 %v3845
    %v3981 = vunpack.c.l.b16 %v3846
    %v3982 = vunpack.c.l.b16 %v3847
    %v3983 = vunpack.c.l.b16 %v3848
    %v3984 = vunpack.c.l.b16 %v3849
    %v3985 = vunpack.c.l.b16 %v3850
    %v3986 = vunpack.c.l.b16 %v3851
    %v3987 = vunpack.c.l.b16 %v3852
    %v3988 = vunpack.c.l.b16 %v3853
    %v3989 = vunpack.c.l.b16 %v3854
    %v3990 = vunpack.c.l.b16 %v3855
    %v3991 = vunpack.c.l.b16 %v3856
    %v3992 = vunpack.c.l.b16 %v3857
    %v3993 = vunpack.c.l.b16 %v3858
    %v3994 = vunpack.c.l.b16 %v3859
    %v3995 = vunpack.c.l.b16 %v3860
    %v3996 = vunpack.c.l.b16 %v3861
    %v3997 = vunpack.c.l.b16 %v3862
    %v3998 = vunpack.c.l.b16 %v3863
    %v3999 = vunpack.c.l.b16 %v3864
    %v4000 = vunpack.c.l.b16 %v3865
    %v4001 = vunpack.c.l.b16 %v3866
    %v4002 = vunpack.c.l.b16 %v3867
    %v4003 = vpack.c.b16 %v3940, %v3939
    %v4004 = vpack.c.b16 %v3942, %v3941
    %v4005 = vpack.c.b16 %v3944, %v3943
    %v4006 = vpack.c.b16 %v3946, %v3945
    %v4007 = vpack.c.b16 %v3948, %v3947
    %v4008 = vpack.c.b16 %v3950, %v3949
    %v4009 = vpack.c.b16 %v3952, %v3951
    %v4010 = vpack.c.b16 %v3954, %v3953
    %v4011 = vpack.c.b16 %v3956, %v3955
    %v4012 = vpack.c.b16 %v3958, %v3957
    %v4013 = vpack.c.b16 %v3960, %v3959
    %v4014 = vpack.c.b16 %v3962, %v3961
    %v4015 = vpack.c.b16 %v3964, %v3963
    %v4016 = vpack.c.b16 %v3966, %v3965
    %v4017 = vpack.c.b16 %v3968, %v3967
    %v4018 = vpack.c.b16 %v3970, %v3969
    %v4019 = vpack.c.b16 %v3972, %v3971
    %v4020 = vpack.c.b16 %v3974, %v3973
    %v4021 = vpack.c.b16 %v3976, %v3975
    %v4022 = vpack.c.b16 %v3978, %v3977
    %v4023 = vpack.c.b16 %v3980, %v3979
    %v4024 = vpack.c.b16 %v3982, %v3981
    %v4025 = vpack.c.b16 %v3984, %v3983
    %v4026 = vpack.c.b16 %v3986, %v3985
    %v4027 = vpack.c.b16 %v3988, %v3987
    %v4028 = vpack.c.b16 %v3990, %v3989
    %v4029 = vpack.c.b16 %v3992, %v3991
    %v4030 = vpack.c.b16 %v3994, %v3993
    %v4031 = vpack.c.b16 %v3996, %v3995
    %v4032 = vpack.c.b16 %v3998, %v3997
    %v4033 = vpack.c.b16 %v4000, %v3999
    %v4034 = vpack.c.b16 %v4002, %v4001
    %4067 = vmatprep.subr.bf16.mxu0 0
    %4068 = vmatpush1.bf16.msra.mxu0 %v4010
    %4069 = vmatprep.subr.bf16.mxu0 0
    %4070 = vmatpush1.bf16.msra.mxu0 %v4009
    %4071 = vmatprep.subr.bf16.mxu0 0
    %4072 = vmatpush1.bf16.msra.mxu0 %v4008
    %4073 = vmatprep.subr.bf16.mxu0 0
    %4074 = vmatpush1.bf16.msra.mxu0 %v4007
    %4075 = vmatprep.subr.bf16.mxu0 0
    %4076 = vmatpush1.bf16.msra.mxu0 %v4006
    %4077 = vmatprep.subr.bf16.mxu0 0
    %4078 = vmatpush1.bf16.msra.mxu0 %v4005
    %4079 = vmatprep.subr.bf16.mxu0 0
    %4080 = vmatpush1.bf16.msra.mxu0 %v4004
    %4081 = vmatprep.subr.bf16.mxu0 0
    %4082 = vmatpush1.bf16.msra.mxu0 %v4003
    %4083 = vmatprep.subr.bf16.mxu0 0
    %4084 = vmatpush2.bf16.msra.mxu0 %v4018
    %4085 = vmatprep.subr.bf16.mxu0 0
    %4086 = vmatpush2.bf16.msra.mxu0 %v4017
    %4087 = vmatprep.subr.bf16.mxu0 0
    %4088 = vmatpush2.bf16.msra.mxu0 %v4016
    %4089 = vmatprep.subr.bf16.mxu0 0
    %4090 = vmatpush2.bf16.msra.mxu0 %v4015
    %4091 = vmatprep.subr.bf16.mxu0 0
    %4092 = vmatpush2.bf16.msra.mxu0 %v4014
    %4093 = vmatprep.subr.bf16.mxu0 0
    %4094 = vmatpush2.bf16.msra.mxu0 %v4013
    %4095 = vmatprep.subr.bf16.mxu0 0
    %4096 = vmatpush2.bf16.msra.mxu0 %v4012
    %4097 = vmatprep.subr.bf16.mxu0 0
    %4098 = vmatpush2.bf16.msra.mxu0 %v4011
    %4099 = vmatprep.mubr.bf16.mxu0 %v3801
    %4100 = vmatmul.mubr.bf16.gmra.mxu0 %v3800
    %v4101 = vpop.f32.mrf.mxu0
    %v4102 = vadd.f32 %v3873, %v4101
    %v4103 = vpop.f32.mrf.mxu0
    %v4104 = vpop.f32.mrf.mxu0
    %v4105 = vadd.f32 %v3873, %v4104
    %v4106 = vpop.f32.mrf.mxu0
    %4107 = vdwg.mxu0
    %4108 = vmatprep.subr.bf16.mxu0 0
    %4109 = vmatpush1.bf16.msra.mxu0 %v4026
    %4110 = vmatprep.subr.bf16.mxu0 0
    %4111 = vmatpush1.bf16.msra.mxu0 %v4025
    %4112 = vmatprep.subr.bf16.mxu0 0
    %4113 = vmatpush1.bf16.msra.mxu0 %v4024
    %4114 = vmatprep.subr.bf16.mxu0 0
    %4115 = vmatpush1.bf16.msra.mxu0 %v4023
    %4116 = vmatprep.subr.bf16.mxu0 0
    %4117 = vmatpush1.bf16.msra.mxu0 %v4022
    %4118 = vmatprep.subr.bf16.mxu0 0
    %4119 = vmatpush1.bf16.msra.mxu0 %v4021
    %4120 = vmatprep.subr.bf16.mxu0 0
    %4121 = vmatpush1.bf16.msra.mxu0 %v4020
    %4122 = vmatprep.subr.bf16.mxu0 0
    %4123 = vmatpush1.bf16.msra.mxu0 %v4019
    %4124 = vmatprep.subr.bf16.mxu0 0
    %4125 = vmatpush2.bf16.msra.mxu0 %v4034
    %4126 = vmatprep.subr.bf16.mxu0 0
    %4127 = vmatpush2.bf16.msra.mxu0 %v4033
    %4128 = vmatprep.subr.bf16.mxu0 0
    %4129 = vmatpush2.bf16.msra.mxu0 %v4032
    %4130 = vmatprep.subr.bf16.mxu0 0
    %4131 = vmatpush2.bf16.msra.mxu0 %v4031
    %4132 = vmatprep.subr.bf16.mxu0 0
    %4133 = vmatpush2.bf16.msra.mxu0 %v4030
    %4134 = vmatprep.subr.bf16.mxu0 0
    %4135 = vmatpush2.bf16.msra.mxu0 %v4029
    %4136 = vmatprep.subr.bf16.mxu0 0
    %4137 = vmatpush2.bf16.msra.mxu0 %v4028
    %4138 = vmatprep.subr.bf16.mxu0 0
    %4139 = vmatpush2.bf16.msra.mxu0 %v4027
    %4140 = vmatprep.mubr.bf16.mxu0 %v3803
    %4141 = vmatmul.mubr.bf16.gmra.mxu0 %v3802
    %v4142 = vpop.f32.mrf.mxu0
    %v4143 = vadd.f32 %v4102, %v4142
    %v4144 = vpop.f32.mrf.mxu0
    %v4145 = vpop.f32.mrf.mxu0
    %v4146 = vadd.f32 %v4105, %v4145
    %v4147 = vpop.f32.mrf.mxu0
    %4148 = vdwg.mxu0
    %4149 = vst [vmem:[#allocation13] sm:$0xff] %v4143
    %4150 = vst [vmem:[#allocation13 + $0x8] sm:$0xff] %v4146
    // Predicated region
    $region62: #{tpu_custom_call.1} parent=1 // pred_check
      _
    $region63: #{tpu_custom_call.1} parent=1 // pred_check_branch
      %4152 = sbr.rel (0) target = $region65
    $region64: #{tpu_custom_call.1} parent=1 // pred_region
      %s4154 = ssub.s32 256, 256
      %4155 = vsyncadd [#allocation4], %s4154
      %s4156 = sshll.u32 [#allocation13], 4
      %s4157 = int_to_ptr.vmem [resolvable:$true] %s4156
      %4162 = dma.vmem_to_hbm [thread:$0]  %s4157, 256, %s9, [#allocation4], 128, 128, 8
    $region65: #{tpu_custom_call.1} parent=1 // pred_fallthru
      _
    // Predicated region
    $region66: #{tpu_custom_call.1} parent=1 // pred_check
      _
    $region67: #{tpu_custom_call.1} parent=1 // pred_check_branch
      %4164 = sbr.rel (0) target = $region69
    $region68: #{tpu_custom_call.1} parent=1 // pred_region
      %4165 = dma.done [#allocation4], 256
    $region69: #{tpu_custom_call.1} parent=1 // pred_fallthru
      _
    %4166 = vsyncpa [#allocation3], 1
    %4167 = vsyncpa [#allocation6], 1
    %4168 = vsyncpa [#allocation9], 1
    %4169 = vsyncpa [#allocation12], 1
    %4170 = vsyncpa [#allocation4], 1

</llo_original>
